<compile_context>
chip_gen: v7x
topology: tpu7x:2x2x1
jax: 0.10.0
libtpu: 0.0.40
codegen_flags: <defaults>
</compile_context>

<pallas_src>
import functools

import jax
import jax.numpy as jnp
from jax.experimental import pallas as pl
from jax.experimental.pallas import tpu as pltpu


def _round_up(x, m):
    return ((x + m - 1) // m) * m


def _tile_padded_bytes(shape, dtype):
    """VMEM footprint of one block, accounting for (sublane, 128-lane) padding."""
    itemsize = jnp.dtype(dtype).itemsize
    sublane = {4: 8, 2: 16, 1: 32}.get(itemsize, 8)
    rows = shape[-2] if len(shape) >= 2 else 1
    cols = shape[-1]
    lead = 1
    for d in shape[:-2]:
        lead *= d
    return lead * _round_up(rows, sublane) * _round_up(cols, 128) * itemsize


def _grid_steps():
    """2 parallel steps on v7x (2 TensorCores/chip); 1 on v5e/v6e (1 TC)."""
    try:
        kind = jax.devices()[0].device_kind.lower()
    except Exception:
        kind = ""
    return 2 if ("v7" in kind or "7x" in kind) else 1


def _encoder_kernel(x_ref, w_ref, b_ref, pool_ref, o_ref, *, inv_hw):
    # x_ref:    (M, 9*C_in)     bf16  im2col patches for tile_n images
    # w_ref:    (9*C_in, C_out) bf16  conv weights as one GEMM slab
    # b_ref:    (1, C_out)      f32   conv bias
    # pool_ref: (tile_n, M)     bf16  0/1 image-membership mask
    # o_ref:    (tile_n, C_out) f32   pooled features
    # One fused K = 9*C_in matmul (conv-as-GEMM), f32 accumulation on the MXU.
    pre = jnp.dot(x_ref[...], w_ref[...], preferred_element_type=jnp.float32)
    act = jnp.maximum(pre + b_ref[...], 0.0)
    # Global average pool as a second MXU matmul with a bf16 0/1 selection
    # mask; the 1/(H*W) scale is applied in f32 so it is exact for any H*W.
    pooled = jnp.dot(pool_ref[...], act.astype(jnp.bfloat16),
                     preferred_element_type=jnp.float32)
    o_ref[...] = (pooled * inv_hw).astype(o_ref.dtype)


def make_encoder(w_oihw, bias, x_shape):
    """Build a jitted Encoder.forward for a fixed input shape.

    All input-independent work (weight reshape, pool mask, grid/block plan)
    is done once here, outside the per-call path.
    """
    n, c_in, h, w = x_shape
    c_out = w_oihw.shape[0]
    hw = h * w
    kdim = 9 * c_in

    steps = min(_grid_steps(), max(1, n))
    n_pad = _round_up(n, 8 * steps) if steps > 1 else n
    tile_n = n_pad // steps
    m_rows = tile_n * hw
    assert n_pad % steps == 0
    assert steps == 1 or tile_n % 8 == 0        # (8,128) out-block constraint
    assert m_rows % 8 == 0                      # (8,128) x-block constraint

    # ---- hoisted, x-independent constants ----
    # Conv weight (C_out, C_in, 3, 3) -> (ki, kj, C_in, C_out) -> (9*C_in, C_out),
    # matching the (ki, kj, channel) ordering of the host-side im2col below.
    w_gemm = jnp.transpose(jnp.asarray(w_oihw), (2, 3, 1, 0)).reshape(kdim, c_out)
    w_gemm = w_gemm.astype(jnp.bfloat16)
    b2 = jnp.asarray(bias).reshape(1, c_out).astype(jnp.float32)
    # Pool mask: pool[i, i*HW : (i+1)*HW] = 1 (bf16-exact); scale in-kernel.
    pool = (jnp.eye(tile_n, dtype=jnp.float32)[:, :, None]
            * jnp.ones((hw,), jnp.float32)).reshape(tile_n, m_rows)
    pool = pool.astype(jnp.bfloat16)

    flops = steps * (2 * m_rows * kdim * c_out + 2 * tile_n * m_rows * c_out)
    bytes_accessed = (n_pad * hw * kdim * 2 + kdim * c_out * 2 + c_out * 4
                      + tile_n * m_rows * 2 + n_pad * c_out * 4)
    cost = pl.CostEstimate(flops=flops, transcendentals=0,
                           bytes_accessed=bytes_accessed)

    # VMEM budget from the real lane-padded block footprint: double-buffered
    # pipeline blocks plus headroom for the f32 activation temporaries.
    vmem_est = (2 * _tile_padded_bytes((m_rows, kdim), jnp.bfloat16)
                + 2 * _tile_padded_bytes((kdim, c_out), jnp.bfloat16)
                + 2 * _tile_padded_bytes((1, c_out), jnp.float32)
                + 2 * _tile_padded_bytes((tile_n, m_rows), jnp.bfloat16)
                + 2 * _tile_padded_bytes((tile_n, c_out), jnp.float32)
                + 3 * _tile_padded_bytes((m_rows, c_out), jnp.float32))
    vmem_limit = int(min(max(2 * vmem_est, 16 * 1024 * 1024), 48 * 1024 * 1024))

    kernel = functools.partial(_encoder_kernel, inv_hw=1.0 / hw)

    call = pl.pallas_call(
        kernel,
        out_shape=jax.ShapeDtypeStruct((n_pad, c_out), jnp.float32),
        grid_spec=pltpu.PrefetchScalarGridSpec(
            num_scalar_prefetch=0,
            grid=(steps,),
            in_specs=[
                pl.BlockSpec((m_rows, kdim), lambda i: (i, 0)),
                pl.BlockSpec((kdim, c_out), lambda i: (0, 0)),
                pl.BlockSpec((1, c_out), lambda i: (0, 0)),
                pl.BlockSpec((tile_n, m_rows), lambda i: (0, 0)),
            ],
            out_specs=pl.BlockSpec((tile_n, c_out), lambda i: (i, 0)),
        ),
        compiler_params=pltpu.CompilerParams(
            dimension_semantics=("parallel",),
            vmem_limit_bytes=vmem_limit),
        cost_estimate=cost,
    )

    @jax.jit
    def forward(x_nchw):
        x = x_nchw
        if n_pad != n:
            x = jnp.pad(x, ((0, n_pad - n), (0, 0), (0, 0), (0, 0)))
        # Layout-only glue (fused by XLA): NCHW -> zero-padded NHWC -> im2col
        # with (ki, kj, channel) ordering matching w_gemm, as lane-dense bf16.
        x_nhwc = jnp.transpose(x, (0, 2, 3, 1))
        xp = jnp.pad(x_nhwc, ((0, 0), (1, 1), (1, 1), (0, 0)))
        patches = [xp[:, ki:ki + h, kj:kj + w, :]
                   for ki in range(3) for kj in range(3)]
        xcol = jnp.concatenate(patches, axis=-1)            # (n_pad, H, W, 9*C_in)
        xf = xcol.reshape(n_pad * hw, kdim).astype(jnp.bfloat16)
        out = call(xf, w_gemm, b2, pool)
        return out[:n] if n_pad != n else out

    return forward


if __name__ == "__main__":
    key = jax.random.PRNGKey(0)
    kx, kw, kb = jax.random.split(key, 3)

    N, C_IN, H, W, C_OUT = 16, 4, 16, 16, 32
    x = jax.random.normal(kx, (N, C_IN, H, W), dtype=jnp.float32)
    conv_w = jax.random.normal(kw, (C_OUT, C_IN, 3, 3), dtype=jnp.float32) * 0.1
    conv_b = jax.random.normal(kb, (C_OUT,), dtype=jnp.float32) * 0.1

    encoder = make_encoder(conv_w, conv_b, x.shape)
    feats = jax.block_until_ready(encoder(x))

    # f32 XLA reference (bf16 matmul inputs in the kernel -> relaxed tolerance).
    x_nhwc = jnp.transpose(x, (0, 2, 3, 1))
    w_hwio = jnp.transpose(conv_w, (2, 3, 1, 0))
    ref = jax.lax.conv_general_dilated(
        x_nhwc, w_hwio, window_strides=(1, 1), padding="SAME",
        dimension_numbers=("NHWC", "HWIO", "NHWC"))
    ref = jax.nn.relu(ref + conv_b).mean(axis=(1, 2))

    assert feats.shape == (N, C_OUT)
    assert jnp.allclose(feats, ref, atol=2e-2, rtol=2e-2), \
        float(jnp.max(jnp.abs(feats - ref)))
    print("KERNEL_OK")
</pallas_src>

<mosaic_0001>
module attributes {stable_mosaic.version = 11 : i64} {
  func.func @_encoder_kernel(%arg0: i32, %arg1: memref<4096x36xbf16, #tpu.memory_space<vmem>>, %arg2: memref<36x32xbf16, #tpu.memory_space<vmem>>, %arg3: memref<1x32xf32, #tpu.memory_space<vmem>>, %arg4: memref<16x4096xbf16, #tpu.memory_space<vmem>>, %arg5: memref<16x32xf32, #tpu.memory_space<vmem>>) attributes {dimension_semantics = [#tpu.dimension_semantics<parallel>], iteration_bounds = array<i64: 1>, scalar_prefetch = 0 : i64, scratch_operands = 0 : i64, tpu.core_type = #tpu.core_type<tc>, window_params = [{transform_indices = @transform_0, window_bounds = array<i64: 4096, 36>}, {pipeline_mode = #tpu.pipeline_mode<synchronous>, transform_indices = @transform_1, window_bounds = array<i64: 36, 32>}, {pipeline_mode = #tpu.pipeline_mode<synchronous>, transform_indices = @transform_2, window_bounds = array<i64: 1, 32>}, {pipeline_mode = #tpu.pipeline_mode<synchronous>, transform_indices = @transform_3, window_bounds = array<i64: 16, 4096>}, {transform_indices = @transform_4, window_bounds = array<i64: 16, 32>}]} {
    %c0 = arith.constant 0 : index
    %c0_0 = arith.constant 0 : index
    %0 = vector.load %arg1[%c0, %c0_0] : memref<4096x36xbf16, #tpu.memory_space<vmem>>, vector<4096x36xbf16>
    %c0_1 = arith.constant 0 : index
    %c0_2 = arith.constant 0 : index
    %1 = vector.load %arg2[%c0_1, %c0_2] : memref<36x32xbf16, #tpu.memory_space<vmem>>, vector<36x32xbf16>
    %cst = arith.constant dense<0.000000e+00> : vector<4096x32xf32>
    %2 = tpu.matmul %0, %1, %cst {dimension_numbers = #tpu.dot_dimension_numbers<[1], [0], [0], [1], [0, 0, 1, 1], [], []>} : vector<4096x36xbf16>, vector<36x32xbf16>, vector<4096x32xf32> -> vector<4096x32xf32>
    %c0_3 = arith.constant 0 : index
    %c0_4 = arith.constant 0 : index
    %3 = vector.load %arg3[%c0_3, %c0_4] : memref<1x32xf32, #tpu.memory_space<vmem>>, vector<1x32xf32>
    %4 = vector.broadcast %3 : vector<1x32xf32> to vector<4096x32xf32>
    %5 = arith.addf %2, %4 : vector<4096x32xf32>
    %cst_5 = arith.constant 0.000000e+00 : f32
    %6 = vector.broadcast %cst_5 : f32 to vector<4096x32xf32>
    %7 = arith.maximumf %5, %6 : vector<4096x32xf32>
    %c0_6 = arith.constant 0 : index
    %c0_7 = arith.constant 0 : index
    %8 = vector.load %arg4[%c0_6, %c0_7] : memref<16x4096xbf16, #tpu.memory_space<vmem>>, vector<16x4096xbf16>
    %9 = arith.truncf %7 : vector<4096x32xf32> to vector<4096x32xbf16>
    %cst_8 = arith.constant dense<0.000000e+00> : vector<16x32xf32>
    %10 = tpu.matmul %8, %9, %cst_8 {dimension_numbers = #tpu.dot_dimension_numbers<[1], [0], [0], [1], [0, 0, 1, 1], [], []>} : vector<16x4096xbf16>, vector<4096x32xbf16>, vector<16x32xf32> -> vector<16x32xf32>
    %cst_9 = arith.constant 3.906250e-03 : f32
    %11 = vector.broadcast %cst_9 : f32 to vector<16x32xf32>
    %12 = arith.mulf %10, %11 : vector<16x32xf32>
    %c0_10 = arith.constant 0 : index
    %c0_11 = arith.constant 0 : index
    %13 = vector.load %arg5[%c0_10, %c0_11] : memref<16x32xf32, #tpu.memory_space<vmem>>, vector<16x32xf32>
    tpu.vector_store %arg5[%c0_10, %c0_11], %12 {strides = array<i32>} : memref<16x32xf32, #tpu.memory_space<vmem>>, vector<16x32xf32>,
    return
  }
  func.func @transform_0(%arg0: i32) -> (i32, i32) {
    %c0_i32 = arith.constant 0 : i32
    %c0_i32_0 = arith.constant 0 : i32
    return %arg0, %c0_i32 : i32, i32
  }
  func.func @transform_1(%arg0: i32) -> (i32, i32) {
    %c0_i32 = arith.constant 0 : i32
    %c0_i32_0 = arith.constant 0 : i32
    %c0_i32_1 = arith.constant 0 : i32
    return %c0_i32, %c0_i32_0 : i32, i32
  }
  func.func @transform_2(%arg0: i32) -> (i32, i32) {
    %c0_i32 = arith.constant 0 : i32
    %c0_i32_0 = arith.constant 0 : i32
    %c0_i32_1 = arith.constant 0 : i32
    return %c0_i32, %c0_i32_0 : i32, i32
  }
  func.func @transform_3(%arg0: i32) -> (i32, i32) {
    %c0_i32 = arith.constant 0 : i32
    %c0_i32_0 = arith.constant 0 : i32
    %c0_i32_1 = arith.constant 0 : i32
    return %c0_i32, %c0_i32_0 : i32, i32
  }
  func.func @transform_4(%arg0: i32) -> (i32, i32) {
    %c0_i32 = arith.constant 0 : i32
    %c0_i32_0 = arith.constant 0 : i32
    return %arg0, %c0_i32 : i32, i32
  }
}

</mosaic_0001>

<llo_original>
// kernel: forward.1
$region0: #{forward.1}
  #allocation0 [shape = 'u32[]', space=smem, size = 0x4, offset = 0x4, fixed_abs, tag = 'smem constant byte address 0x4 - core index']
  #allocation1 [shape = 'u32[144,128]{1,0:T(1,128)}', space=vmem, size = 0x12000, scoped, tag = 'internal scratch']
  %s0 = inlined_call_operand.vmem [shape: bf16[4096,36], index: 0, kind: input, shape index: {}]
  %s1 = inlined_call_operand.vmem [shape: bf16[36,32], index: 1, kind: input, shape index: {}]
  %s2 = inlined_call_operand.vmem [shape: f32[1,32], index: 2, kind: input, shape index: {}]
  %s3 = inlined_call_operand.vmem [shape: bf16[16,4096], index: 3, kind: input, shape index: {}]
  %s4 = inlined_call_operand.hbm [shape: f32[16,32], index: 4, kind: output, shape index: {}]
  %s5 = sld [smem:[#allocation0]]
  $region26: #{forward.1} parent=0
    _
  %s7 = ssub.s32 1, %s5
  %s8 = scalar_select 0, %s7, %s5
  $region1: #{forward.1} parent=0
    #allocation2 [shape = 'u8[8192]{0}', space=vmem, size = 0x2000, scoped, tag = 'output window, operand 0, single buffered']
    #allocation3 [shape = 's32[1]{0}', space=sflag, size = 0x4, scoped, tag = 'scoped memory for forward.1']
    %9 = vsyncpa [#allocation3], 0
    // Predicated region
    $region2: #{forward.1} parent=1 // pred_check
      _
    $region3: #{forward.1} parent=1 // pred_check_branch
      %11 = sbr.rel (0) target = $region5
    $region4: #{forward.1} parent=1 // pred_region
      _
    $region5: #{forward.1} parent=1 // pred_fallthru
      _
    // Predicated region
    $region6: #{forward.1} parent=1 // pred_check
      _
    $region7: #{forward.1} parent=1 // pred_check_branch
      %13 = sbr.rel (0) target = $region9
    $region8: #{forward.1} parent=1 // pred_region
      _
    $region9: #{forward.1} parent=1 // pred_fallthru
      _
    // Predicated region
    $region10: #{forward.1} parent=1 // pred_check
      _
    $region11: #{forward.1} parent=1 // pred_check_branch
      %15 = sbr.rel (0) target = $region13
    $region12: #{forward.1} parent=1 // pred_region
      _
    $region13: #{forward.1} parent=1 // pred_fallthru
      _
    // Predicated region
    $region14: #{forward.1} parent=1 // pred_check
      _
    $region15: #{forward.1} parent=1 // pred_check_branch
      %17 = sbr.rel (0) target = $region17
    $region16: #{forward.1} parent=1 // pred_region
      _
    $region17: #{forward.1} parent=1 // pred_fallthru
      _
    %v19 = vld [vmem:[%s0] sm:$0xf]
    %v20 = vld [vmem:[%s0 + $0x4] sm:$0xf]
    %v21 = vld [vmem:[%s0 + $0x8] sm:$0xf]
    %v22 = vld [vmem:[%s0 + $0xc] sm:$0xf]
    %v23 = vld [vmem:[%s0 + $0x10] sm:$0xf]
    %v24 = vld [vmem:[%s0 + $0x14] sm:$0xf]
    %v25 = vld [vmem:[%s0 + $0x18] sm:$0xf]
    %v26 = vld [vmem:[%s0 + $0x1c] sm:$0xf]
    %v27 = vld [vmem:[%s0 + $0x20] sm:$0xf]
    %v28 = vld [vmem:[%s0 + $0x24] sm:$0xf]
    %v29 = vld [vmem:[%s0 + $0x28] sm:$0xf]
    %v30 = vld [vmem:[%s0 + $0x2c] sm:$0xf]
    %v31 = vld [vmem:[%s0 + $0x30] sm:$0xf]
    %v32 = vld [vmem:[%s0 + $0x34] sm:$0xf]
    %v33 = vld [vmem:[%s0 + $0x38] sm:$0xf]
    %v34 = vld [vmem:[%s0 + $0x3c] sm:$0xf]
    %v35 = vld [vmem:[%s0 + $0x40] sm:$0xf]
    %v36 = vld [vmem:[%s0 + $0x44] sm:$0xf]
    %v37 = vld [vmem:[%s0 + $0x48] sm:$0xf]
    %v38 = vld [vmem:[%s0 + $0x4c] sm:$0xf]
    %v39 = vld [vmem:[%s0 + $0x50] sm:$0xf]
    %v40 = vld [vmem:[%s0 + $0x54] sm:$0xf]
    %v41 = vld [vmem:[%s0 + $0x58] sm:$0xf]
    %v42 = vld [vmem:[%s0 + $0x5c] sm:$0xf]
    %v43 = vld [vmem:[%s0 + $0x60] sm:$0xf]
    %v44 = vld [vmem:[%s0 + $0x64] sm:$0xf]
    %v45 = vld [vmem:[%s0 + $0x68] sm:$0xf]
    %v46 = vld [vmem:[%s0 + $0x6c] sm:$0xf]
    %v47 = vld [vmem:[%s0 + $0x70] sm:$0xf]
    %v48 = vld [vmem:[%s0 + $0x74] sm:$0xf]
    %v49 = vld [vmem:[%s0 + $0x78] sm:$0xf]
    %v50 = vld [vmem:[%s0 + $0x7c] sm:$0xf]
    %v51 = vld [vmem:[%s0 + $0x80] sm:$0xf]
    %v52 = vld [vmem:[%s0 + $0x84] sm:$0xf]
    %v53 = vld [vmem:[%s0 + $0x88] sm:$0xf]
    %v54 = vld [vmem:[%s0 + $0x8c] sm:$0xf]
    %v55 = vld [vmem:[%s0 + $0x90] sm:$0xf]
    %v56 = vld [vmem:[%s0 + $0x94] sm:$0xf]
    %v57 = vld [vmem:[%s0 + $0x98] sm:$0xf]
    %v58 = vld [vmem:[%s0 + $0x9c] sm:$0xf]
    %v59 = vld [vmem:[%s0 + $0xa0] sm:$0xf]
    %v60 = vld [vmem:[%s0 + $0xa4] sm:$0xf]
    %v61 = vld [vmem:[%s0 + $0xa8] sm:$0xf]
    %v62 = vld [vmem:[%s0 + $0xac] sm:$0xf]
    %v63 = vld [vmem:[%s0 + $0xb0] sm:$0xf]
    %v64 = vld [vmem:[%s0 + $0xb4] sm:$0xf]
    %v65 = vld [vmem:[%s0 + $0xb8] sm:$0xf]
    %v66 = vld [vmem:[%s0 + $0xbc] sm:$0xf]
    %v67 = vld [vmem:[%s0 + $0xc0] sm:$0xf]
    %v68 = vld [vmem:[%s0 + $0xc4] sm:$0xf]
    %v69 = vld [vmem:[%s0 + $0xc8] sm:$0xf]
    %v70 = vld [vmem:[%s0 + $0xcc] sm:$0xf]
    %v71 = vld [vmem:[%s0 + $0xd0] sm:$0xf]
    %v72 = vld [vmem:[%s0 + $0xd4] sm:$0xf]
    %v73 = vld [vmem:[%s0 + $0xd8] sm:$0xf]
    %v74 = vld [vmem:[%s0 + $0xdc] sm:$0xf]
    %v75 = vld [vmem:[%s0 + $0xe0] sm:$0xf]
    %v76 = vld [vmem:[%s0 + $0xe4] sm:$0xf]
    %v77 = vld [vmem:[%s0 + $0xe8] sm:$0xf]
    %v78 = vld [vmem:[%s0 + $0xec] sm:$0xf]
    %v79 = vld [vmem:[%s0 + $0xf0] sm:$0xf]
    %v80 = vld [vmem:[%s0 + $0xf4] sm:$0xf]
    %v81 = vld [vmem:[%s0 + $0xf8] sm:$0xf]
    %v82 = vld [vmem:[%s0 + $0xfc] sm:$0xf]
    %v83 = vld [vmem:[%s0 + $0x100] sm:$0xf]
    %v84 = vld [vmem:[%s0 + $0x104] sm:$0xf]
    %v85 = vld [vmem:[%s0 + $0x108] sm:$0xf]
    %v86 = vld [vmem:[%s0 + $0x10c] sm:$0xf]
    %v87 = vld [vmem:[%s0 + $0x110] sm:$0xf]
    %v88 = vld [vmem:[%s0 + $0x114] sm:$0xf]
    %v89 = vld [vmem:[%s0 + $0x118] sm:$0xf]
    %v90 = vld [vmem:[%s0 + $0x11c] sm:$0xf]
    %v91 = vld [vmem:[%s0 + $0x120] sm:$0xf]
    %v92 = vld [vmem:[%s0 + $0x124] sm:$0xf]
    %v93 = vld [vmem:[%s0 + $0x128] sm:$0xf]
    %v94 = vld [vmem:[%s0 + $0x12c] sm:$0xf]
    %v95 = vld [vmem:[%s0 + $0x130] sm:$0xf]
    %v96 = vld [vmem:[%s0 + $0x134] sm:$0xf]
    %v97 = vld [vmem:[%s0 + $0x138] sm:$0xf]
    %v98 = vld [vmem:[%s0 + $0x13c] sm:$0xf]
    %v99 = vld [vmem:[%s0 + $0x140] sm:$0xf]
    %v100 = vld [vmem:[%s0 + $0x144] sm:$0xf]
    %v101 = vld [vmem:[%s0 + $0x148] sm:$0xf]
    %v102 = vld [vmem:[%s0 + $0x14c] sm:$0xf]
    %v103 = vld [vmem:[%s0 + $0x150] sm:$0xf]
    %v104 = vld [vmem:[%s0 + $0x154] sm:$0xf]
    %v105 = vld [vmem:[%s0 + $0x158] sm:$0xf]
    %v106 = vld [vmem:[%s0 + $0x15c] sm:$0xf]
    %v107 = vld [vmem:[%s0 + $0x160] sm:$0xf]
    %v108 = vld [vmem:[%s0 + $0x164] sm:$0xf]
    %v109 = vld [vmem:[%s0 + $0x168] sm:$0xf]
    %v110 = vld [vmem:[%s0 + $0x16c] sm:$0xf]
    %v111 = vld [vmem:[%s0 + $0x170] sm:$0xf]
    %v112 = vld [vmem:[%s0 + $0x174] sm:$0xf]
    %v113 = vld [vmem:[%s0 + $0x178] sm:$0xf]
    %v114 = vld [vmem:[%s0 + $0x17c] sm:$0xf]
    %v115 = vld [vmem:[%s0 + $0x180] sm:$0xf]
    %v116 = vld [vmem:[%s0 + $0x184] sm:$0xf]
    %v117 = vld [vmem:[%s0 + $0x188] sm:$0xf]
    %v118 = vld [vmem:[%s0 + $0x18c] sm:$0xf]
    %v119 = vld [vmem:[%s0 + $0x190] sm:$0xf]
    %v120 = vld [vmem:[%s0 + $0x194] sm:$0xf]
    %v121 = vld [vmem:[%s0 + $0x198] sm:$0xf]
    %v122 = vld [vmem:[%s0 + $0x19c] sm:$0xf]
    %v123 = vld [vmem:[%s0 + $0x1a0] sm:$0xf]
    %v124 = vld [vmem:[%s0 + $0x1a4] sm:$0xf]
    %v125 = vld [vmem:[%s0 + $0x1a8] sm:$0xf]
    %v126 = vld [vmem:[%s0 + $0x1ac] sm:$0xf]
    %v127 = vld [vmem:[%s0 + $0x1b0] sm:$0xf]
    %v128 = vld [vmem:[%s0 + $0x1b4] sm:$0xf]
    %v129 = vld [vmem:[%s0 + $0x1b8] sm:$0xf]
    %v130 = vld [vmem:[%s0 + $0x1bc] sm:$0xf]
    %v131 = vld [vmem:[%s0 + $0x1c0] sm:$0xf]
    %v132 = vld [vmem:[%s0 + $0x1c4] sm:$0xf]
    %v133 = vld [vmem:[%s0 + $0x1c8] sm:$0xf]
    %v134 = vld [vmem:[%s0 + $0x1cc] sm:$0xf]
    %v135 = vld [vmem:[%s0 + $0x1d0] sm:$0xf]
    %v136 = vld [vmem:[%s0 + $0x1d4] sm:$0xf]
    %v137 = vld [vmem:[%s0 + $0x1d8] sm:$0xf]
    %v138 = vld [vmem:[%s0 + $0x1dc] sm:$0xf]
    %v139 = vld [vmem:[%s0 + $0x1e0] sm:$0xf]
    %v140 = vld [vmem:[%s0 + $0x1e4] sm:$0xf]
    %v141 = vld [vmem:[%s0 + $0x1e8] sm:$0xf]
    %v142 = vld [vmem:[%s0 + $0x1ec] sm:$0xf]
    %v143 = vld [vmem:[%s0 + $0x1f0] sm:$0xf]
    %v144 = vld [vmem:[%s0 + $0x1f4] sm:$0xf]
    %v145 = vld [vmem:[%s0 + $0x1f8] sm:$0xf]
    %v146 = vld [vmem:[%s0 + $0x1fc] sm:$0xf]
    %v147 = vld [vmem:[%s0 + $0x200] sm:$0xf]
    %v148 = vld [vmem:[%s0 + $0x204] sm:$0xf]
    %v149 = vld [vmem:[%s0 + $0x208] sm:$0xf]
    %v150 = vld [vmem:[%s0 + $0x20c] sm:$0xf]
    %v151 = vld [vmem:[%s0 + $0x210] sm:$0xf]
    %v152 = vld [vmem:[%s0 + $0x214] sm:$0xf]
    %v153 = vld [vmem:[%s0 + $0x218] sm:$0xf]
    %v154 = vld [vmem:[%s0 + $0x21c] sm:$0xf]
    %v155 = vld [vmem:[%s0 + $0x220] sm:$0xf]
    %v156 = vld [vmem:[%s0 + $0x224] sm:$0xf]
    %v157 = vld [vmem:[%s0 + $0x228] sm:$0xf]
    %v158 = vld [vmem:[%s0 + $0x22c] sm:$0xf]
    %v159 = vld [vmem:[%s0 + $0x230] sm:$0xf]
    %v160 = vld [vmem:[%s0 + $0x234] sm:$0xf]
    %v161 = vld [vmem:[%s0 + $0x238] sm:$0xf]
    %v162 = vld [vmem:[%s0 + $0x23c] sm:$0xf]
    %v163 = vld [vmem:[%s0 + $0x240] sm:$0xf]
    %v164 = vld [vmem:[%s0 + $0x244] sm:$0xf]
    %v165 = vld [vmem:[%s0 + $0x248] sm:$0xf]
    %v166 = vld [vmem:[%s0 + $0x24c] sm:$0xf]
    %v167 = vld [vmem:[%s0 + $0x250] sm:$0xf]
    %v168 = vld [vmem:[%s0 + $0x254] sm:$0xf]
    %v169 = vld [vmem:[%s0 + $0x258] sm:$0xf]
    %v170 = vld [vmem:[%s0 + $0x25c] sm:$0xf]
    %v171 = vld [vmem:[%s0 + $0x260] sm:$0xf]
    %v172 = vld [vmem:[%s0 + $0x264] sm:$0xf]
    %v173 = vld [vmem:[%s0 + $0x268] sm:$0xf]
    %v174 = vld [vmem:[%s0 + $0x26c] sm:$0xf]
    %v175 = vld [vmem:[%s0 + $0x270] sm:$0xf]
    %v176 = vld [vmem:[%s0 + $0x274] sm:$0xf]
    %v177 = vld [vmem:[%s0 + $0x278] sm:$0xf]
    %v178 = vld [vmem:[%s0 + $0x27c] sm:$0xf]
    %v179 = vld [vmem:[%s0 + $0x280] sm:$0xf]
    %v180 = vld [vmem:[%s0 + $0x284] sm:$0xf]
    %v181 = vld [vmem:[%s0 + $0x288] sm:$0xf]
    %v182 = vld [vmem:[%s0 + $0x28c] sm:$0xf]
    %v183 = vld [vmem:[%s0 + $0x290] sm:$0xf]
    %v184 = vld [vmem:[%s0 + $0x294] sm:$0xf]
    %v185 = vld [vmem:[%s0 + $0x298] sm:$0xf]
    %v186 = vld [vmem:[%s0 + $0x29c] sm:$0xf]
    %v187 = vld [vmem:[%s0 + $0x2a0] sm:$0xf]
    %v188 = vld [vmem:[%s0 + $0x2a4] sm:$0xf]
    %v189 = vld [vmem:[%s0 + $0x2a8] sm:$0xf]
    %v190 = vld [vmem:[%s0 + $0x2ac] sm:$0xf]
    %v191 = vld [vmem:[%s0 + $0x2b0] sm:$0xf]
    %v192 = vld [vmem:[%s0 + $0x2b4] sm:$0xf]
    %v193 = vld [vmem:[%s0 + $0x2b8] sm:$0xf]
    %v194 = vld [vmem:[%s0 + $0x2bc] sm:$0xf]
    %v195 = vld [vmem:[%s0 + $0x2c0] sm:$0xf]
    %v196 = vld [vmem:[%s0 + $0x2c4] sm:$0xf]
    %v197 = vld [vmem:[%s0 + $0x2c8] sm:$0xf]
    %v198 = vld [vmem:[%s0 + $0x2cc] sm:$0xf]
    %v199 = vld [vmem:[%s0 + $0x2d0] sm:$0xf]
    %v200 = vld [vmem:[%s0 + $0x2d4] sm:$0xf]
    %v201 = vld [vmem:[%s0 + $0x2d8] sm:$0xf]
    %v202 = vld [vmem:[%s0 + $0x2dc] sm:$0xf]
    %v203 = vld [vmem:[%s0 + $0x2e0] sm:$0xf]
    %v204 = vld [vmem:[%s0 + $0x2e4] sm:$0xf]
    %v205 = vld [vmem:[%s0 + $0x2e8] sm:$0xf]
    %v206 = vld [vmem:[%s0 + $0x2ec] sm:$0xf]
    %v207 = vld [vmem:[%s0 + $0x2f0] sm:$0xf]
    %v208 = vld [vmem:[%s0 + $0x2f4] sm:$0xf]
    %v209 = vld [vmem:[%s0 + $0x2f8] sm:$0xf]
    %v210 = vld [vmem:[%s0 + $0x2fc] sm:$0xf]
    %v211 = vld [vmem:[%s0 + $0x300] sm:$0xf]
    %v212 = vld [vmem:[%s0 + $0x304] sm:$0xf]
    %v213 = vld [vmem:[%s0 + $0x308] sm:$0xf]
    %v214 = vld [vmem:[%s0 + $0x30c] sm:$0xf]
    %v215 = vld [vmem:[%s0 + $0x310] sm:$0xf]
    %v216 = vld [vmem:[%s0 + $0x314] sm:$0xf]
    %v217 = vld [vmem:[%s0 + $0x318] sm:$0xf]
    %v218 = vld [vmem:[%s0 + $0x31c] sm:$0xf]
    %v219 = vld [vmem:[%s0 + $0x320] sm:$0xf]
    %v220 = vld [vmem:[%s0 + $0x324] sm:$0xf]
    %v221 = vld [vmem:[%s0 + $0x328] sm:$0xf]
    %v222 = vld [vmem:[%s0 + $0x32c] sm:$0xf]
    %v223 = vld [vmem:[%s0 + $0x330] sm:$0xf]
    %v224 = vld [vmem:[%s0 + $0x334] sm:$0xf]
    %v225 = vld [vmem:[%s0 + $0x338] sm:$0xf]
    %v226 = vld [vmem:[%s0 + $0x33c] sm:$0xf]
    %v227 = vld [vmem:[%s0 + $0x340] sm:$0xf]
    %v228 = vld [vmem:[%s0 + $0x344] sm:$0xf]
    %v229 = vld [vmem:[%s0 + $0x348] sm:$0xf]
    %v230 = vld [vmem:[%s0 + $0x34c] sm:$0xf]
    %v231 = vld [vmem:[%s0 + $0x350] sm:$0xf]
    %v232 = vld [vmem:[%s0 + $0x354] sm:$0xf]
    %v233 = vld [vmem:[%s0 + $0x358] sm:$0xf]
    %v234 = vld [vmem:[%s0 + $0x35c] sm:$0xf]
    %v235 = vld [vmem:[%s0 + $0x360] sm:$0xf]
    %v236 = vld [vmem:[%s0 + $0x364] sm:$0xf]
    %v237 = vld [vmem:[%s0 + $0x368] sm:$0xf]
    %v238 = vld [vmem:[%s0 + $0x36c] sm:$0xf]
    %v239 = vld [vmem:[%s0 + $0x370] sm:$0xf]
    %v240 = vld [vmem:[%s0 + $0x374] sm:$0xf]
    %v241 = vld [vmem:[%s0 + $0x378] sm:$0xf]
    %v242 = vld [vmem:[%s0 + $0x37c] sm:$0xf]
    %v243 = vld [vmem:[%s0 + $0x380] sm:$0xf]
    %v244 = vld [vmem:[%s0 + $0x384] sm:$0xf]
    %v245 = vld [vmem:[%s0 + $0x388] sm:$0xf]
    %v246 = vld [vmem:[%s0 + $0x38c] sm:$0xf]
    %v247 = vld [vmem:[%s0 + $0x390] sm:$0xf]
    %v248 = vld [vmem:[%s0 + $0x394] sm:$0xf]
    %v249 = vld [vmem:[%s0 + $0x398] sm:$0xf]
    %v250 = vld [vmem:[%s0 + $0x39c] sm:$0xf]
    %v251 = vld [vmem:[%s0 + $0x3a0] sm:$0xf]
    %v252 = vld [vmem:[%s0 + $0x3a4] sm:$0xf]
    %v253 = vld [vmem:[%s0 + $0x3a8] sm:$0xf]
    %v254 = vld [vmem:[%s0 + $0x3ac] sm:$0xf]
    %v255 = vld [vmem:[%s0 + $0x3b0] sm:$0xf]
    %v256 = vld [vmem:[%s0 + $0x3b4] sm:$0xf]
    %v257 = vld [vmem:[%s0 + $0x3b8] sm:$0xf]
    %v258 = vld [vmem:[%s0 + $0x3bc] sm:$0xf]
    %v259 = vld [vmem:[%s0 + $0x3c0] sm:$0xf]
    %v260 = vld [vmem:[%s0 + $0x3c4] sm:$0xf]
    %v261 = vld [vmem:[%s0 + $0x3c8] sm:$0xf]
    %v262 = vld [vmem:[%s0 + $0x3cc] sm:$0xf]
    %v263 = vld [vmem:[%s0 + $0x3d0] sm:$0xf]
    %v264 = vld [vmem:[%s0 + $0x3d4] sm:$0xf]
    %v265 = vld [vmem:[%s0 + $0x3d8] sm:$0xf]
    %v266 = vld [vmem:[%s0 + $0x3dc] sm:$0xf]
    %v267 = vld [vmem:[%s0 + $0x3e0] sm:$0xf]
    %v268 = vld [vmem:[%s0 + $0x3e4] sm:$0xf]
    %v269 = vld [vmem:[%s0 + $0x3e8] sm:$0xf]
    %v270 = vld [vmem:[%s0 + $0x3ec] sm:$0xf]
    %v271 = vld [vmem:[%s0 + $0x3f0] sm:$0xf]
    %v272 = vld [vmem:[%s0 + $0x3f4] sm:$0xf]
    %v273 = vld [vmem:[%s0 + $0x3f8] sm:$0xf]
    %v274 = vld [vmem:[%s0 + $0x3fc] sm:$0xf]
    %v275 = vld [vmem:[%s0 + $0x400] sm:$0xf]
    %v276 = vld [vmem:[%s0 + $0x404] sm:$0xf]
    %v277 = vld [vmem:[%s0 + $0x408] sm:$0xf]
    %v278 = vld [vmem:[%s0 + $0x40c] sm:$0xf]
    %v279 = vld [vmem:[%s0 + $0x410] sm:$0xf]
    %v280 = vld [vmem:[%s0 + $0x414] sm:$0xf]
    %v281 = vld [vmem:[%s0 + $0x418] sm:$0xf]
    %v282 = vld [vmem:[%s0 + $0x41c] sm:$0xf]
    %v283 = vld [vmem:[%s0 + $0x420] sm:$0xf]
    %v284 = vld [vmem:[%s0 + $0x424] sm:$0xf]
    %v285 = vld [vmem:[%s0 + $0x428] sm:$0xf]
    %v286 = vld [vmem:[%s0 + $0x42c] sm:$0xf]
    %v287 = vld [vmem:[%s0 + $0x430] sm:$0xf]
    %v288 = vld [vmem:[%s0 + $0x434] sm:$0xf]
    %v289 = vld [vmem:[%s0 + $0x438] sm:$0xf]
    %v290 = vld [vmem:[%s0 + $0x43c] sm:$0xf]
    %v291 = vld [vmem:[%s0 + $0x440] sm:$0xf]
    %v292 = vld [vmem:[%s0 + $0x444] sm:$0xf]
    %v293 = vld [vmem:[%s0 + $0x448] sm:$0xf]
    %v294 = vld [vmem:[%s0 + $0x44c] sm:$0xf]
    %v295 = vld [vmem:[%s0 + $0x450] sm:$0xf]
    %v296 = vld [vmem:[%s0 + $0x454] sm:$0xf]
    %v297 = vld [vmem:[%s0 + $0x458] sm:$0xf]
    %v298 = vld [vmem:[%s0 + $0x45c] sm:$0xf]
    %v299 = vld [vmem:[%s0 + $0x460] sm:$0xf]
    %v300 = vld [vmem:[%s0 + $0x464] sm:$0xf]
    %v301 = vld [vmem:[%s0 + $0x468] sm:$0xf]
    %v302 = vld [vmem:[%s0 + $0x46c] sm:$0xf]
    %v303 = vld [vmem:[%s0 + $0x470] sm:$0xf]
    %v304 = vld [vmem:[%s0 + $0x474] sm:$0xf]
    %v305 = vld [vmem:[%s0 + $0x478] sm:$0xf]
    %v306 = vld [vmem:[%s0 + $0x47c] sm:$0xf]
    %v307 = vld [vmem:[%s0 + $0x480] sm:$0xf]
    %v308 = vld [vmem:[%s0 + $0x484] sm:$0xf]
    %v309 = vld [vmem:[%s0 + $0x488] sm:$0xf]
    %v310 = vld [vmem:[%s0 + $0x48c] sm:$0xf]
    %v311 = vld [vmem:[%s0 + $0x490] sm:$0xf]
    %v312 = vld [vmem:[%s0 + $0x494] sm:$0xf]
    %v313 = vld [vmem:[%s0 + $0x498] sm:$0xf]
    %v314 = vld [vmem:[%s0 + $0x49c] sm:$0xf]
    %v315 = vld [vmem:[%s0 + $0x4a0] sm:$0xf]
    %v316 = vld [vmem:[%s0 + $0x4a4] sm:$0xf]
    %v317 = vld [vmem:[%s0 + $0x4a8] sm:$0xf]
    %v318 = vld [vmem:[%s0 + $0x4ac] sm:$0xf]
    %v319 = vld [vmem:[%s0 + $0x4b0] sm:$0xf]
    %v320 = vld [vmem:[%s0 + $0x4b4] sm:$0xf]
    %v321 = vld [vmem:[%s0 + $0x4b8] sm:$0xf]
    %v322 = vld [vmem:[%s0 + $0x4bc] sm:$0xf]
    %v323 = vld [vmem:[%s0 + $0x4c0] sm:$0xf]
    %v324 = vld [vmem:[%s0 + $0x4c4] sm:$0xf]
    %v325 = vld [vmem:[%s0 + $0x4c8] sm:$0xf]
    %v326 = vld [vmem:[%s0 + $0x4cc] sm:$0xf]
    %v327 = vld [vmem:[%s0 + $0x4d0] sm:$0xf]
    %v328 = vld [vmem:[%s0 + $0x4d4] sm:$0xf]
    %v329 = vld [vmem:[%s0 + $0x4d8] sm:$0xf]
    %v330 = vld [vmem:[%s0 + $0x4dc] sm:$0xf]
    %v331 = vld [vmem:[%s0 + $0x4e0] sm:$0xf]
    %v332 = vld [vmem:[%s0 + $0x4e4] sm:$0xf]
    %v333 = vld [vmem:[%s0 + $0x4e8] sm:$0xf]
    %v334 = vld [vmem:[%s0 + $0x4ec] sm:$0xf]
    %v335 = vld [vmem:[%s0 + $0x4f0] sm:$0xf]
    %v336 = vld [vmem:[%s0 + $0x4f4] sm:$0xf]
    %v337 = vld [vmem:[%s0 + $0x4f8] sm:$0xf]
    %v338 = vld [vmem:[%s0 + $0x4fc] sm:$0xf]
    %v339 = vld [vmem:[%s0 + $0x500] sm:$0xf]
    %v340 = vld [vmem:[%s0 + $0x504] sm:$0xf]
    %v341 = vld [vmem:[%s0 + $0x508] sm:$0xf]
    %v342 = vld [vmem:[%s0 + $0x50c] sm:$0xf]
    %v343 = vld [vmem:[%s0 + $0x510] sm:$0xf]
    %v344 = vld [vmem:[%s0 + $0x514] sm:$0xf]
    %v345 = vld [vmem:[%s0 + $0x518] sm:$0xf]
    %v346 = vld [vmem:[%s0 + $0x51c] sm:$0xf]
    %v347 = vld [vmem:[%s0 + $0x520] sm:$0xf]
    %v348 = vld [vmem:[%s0 + $0x524] sm:$0xf]
    %v349 = vld [vmem:[%s0 + $0x528] sm:$0xf]
    %v350 = vld [vmem:[%s0 + $0x52c] sm:$0xf]
    %v351 = vld [vmem:[%s0 + $0x530] sm:$0xf]
    %v352 = vld [vmem:[%s0 + $0x534] sm:$0xf]
    %v353 = vld [vmem:[%s0 + $0x538] sm:$0xf]
    %v354 = vld [vmem:[%s0 + $0x53c] sm:$0xf]
    %v355 = vld [vmem:[%s0 + $0x540] sm:$0xf]
    %v356 = vld [vmem:[%s0 + $0x544] sm:$0xf]
    %v357 = vld [vmem:[%s0 + $0x548] sm:$0xf]
    %v358 = vld [vmem:[%s0 + $0x54c] sm:$0xf]
    %v359 = vld [vmem:[%s0 + $0x550] sm:$0xf]
    %v360 = vld [vmem:[%s0 + $0x554] sm:$0xf]
    %v361 = vld [vmem:[%s0 + $0x558] sm:$0xf]
    %v362 = vld [vmem:[%s0 + $0x55c] sm:$0xf]
    %v363 = vld [vmem:[%s0 + $0x560] sm:$0xf]
    %v364 = vld [vmem:[%s0 + $0x564] sm:$0xf]
    %v365 = vld [vmem:[%s0 + $0x568] sm:$0xf]
    %v366 = vld [vmem:[%s0 + $0x56c] sm:$0xf]
    %v367 = vld [vmem:[%s0 + $0x570] sm:$0xf]
    %v368 = vld [vmem:[%s0 + $0x574] sm:$0xf]
    %v369 = vld [vmem:[%s0 + $0x578] sm:$0xf]
    %v370 = vld [vmem:[%s0 + $0x57c] sm:$0xf]
    %v371 = vld [vmem:[%s0 + $0x580] sm:$0xf]
    %v372 = vld [vmem:[%s0 + $0x584] sm:$0xf]
    %v373 = vld [vmem:[%s0 + $0x588] sm:$0xf]
    %v374 = vld [vmem:[%s0 + $0x58c] sm:$0xf]
    %v375 = vld [vmem:[%s0 + $0x590] sm:$0xf]
    %v376 = vld [vmem:[%s0 + $0x594] sm:$0xf]
    %v377 = vld [vmem:[%s0 + $0x598] sm:$0xf]
    %v378 = vld [vmem:[%s0 + $0x59c] sm:$0xf]
    %v379 = vld [vmem:[%s0 + $0x5a0] sm:$0xf]
    %v380 = vld [vmem:[%s0 + $0x5a4] sm:$0xf]
    %v381 = vld [vmem:[%s0 + $0x5a8] sm:$0xf]
    %v382 = vld [vmem:[%s0 + $0x5ac] sm:$0xf]
    %v383 = vld [vmem:[%s0 + $0x5b0] sm:$0xf]
    %v384 = vld [vmem:[%s0 + $0x5b4] sm:$0xf]
    %v385 = vld [vmem:[%s0 + $0x5b8] sm:$0xf]
    %v386 = vld [vmem:[%s0 + $0x5bc] sm:$0xf]
    %v387 = vld [vmem:[%s0 + $0x5c0] sm:$0xf]
    %v388 = vld [vmem:[%s0 + $0x5c4] sm:$0xf]
    %v389 = vld [vmem:[%s0 + $0x5c8] sm:$0xf]
    %v390 = vld [vmem:[%s0 + $0x5cc] sm:$0xf]
    %v391 = vld [vmem:[%s0 + $0x5d0] sm:$0xf]
    %v392 = vld [vmem:[%s0 + $0x5d4] sm:$0xf]
    %v393 = vld [vmem:[%s0 + $0x5d8] sm:$0xf]
    %v394 = vld [vmem:[%s0 + $0x5dc] sm:$0xf]
    %v395 = vld [vmem:[%s0 + $0x5e0] sm:$0xf]
    %v396 = vld [vmem:[%s0 + $0x5e4] sm:$0xf]
    %v397 = vld [vmem:[%s0 + $0x5e8] sm:$0xf]
    %v398 = vld [vmem:[%s0 + $0x5ec] sm:$0xf]
    %v399 = vld [vmem:[%s0 + $0x5f0] sm:$0xf]
    %v400 = vld [vmem:[%s0 + $0x5f4] sm:$0xf]
    %v401 = vld [vmem:[%s0 + $0x5f8] sm:$0xf]
    %v402 = vld [vmem:[%s0 + $0x5fc] sm:$0xf]
    %v403 = vld [vmem:[%s0 + $0x600] sm:$0xf]
    %v404 = vld [vmem:[%s0 + $0x604] sm:$0xf]
    %v405 = vld [vmem:[%s0 + $0x608] sm:$0xf]
    %v406 = vld [vmem:[%s0 + $0x60c] sm:$0xf]
    %v407 = vld [vmem:[%s0 + $0x610] sm:$0xf]
    %v408 = vld [vmem:[%s0 + $0x614] sm:$0xf]
    %v409 = vld [vmem:[%s0 + $0x618] sm:$0xf]
    %v410 = vld [vmem:[%s0 + $0x61c] sm:$0xf]
    %v411 = vld [vmem:[%s0 + $0x620] sm:$0xf]
    %v412 = vld [vmem:[%s0 + $0x624] sm:$0xf]
    %v413 = vld [vmem:[%s0 + $0x628] sm:$0xf]
    %v414 = vld [vmem:[%s0 + $0x62c] sm:$0xf]
    %v415 = vld [vmem:[%s0 + $0x630] sm:$0xf]
    %v416 = vld [vmem:[%s0 + $0x634] sm:$0xf]
    %v417 = vld [vmem:[%s0 + $0x638] sm:$0xf]
    %v418 = vld [vmem:[%s0 + $0x63c] sm:$0xf]
    %v419 = vld [vmem:[%s0 + $0x640] sm:$0xf]
    %v420 = vld [vmem:[%s0 + $0x644] sm:$0xf]
    %v421 = vld [vmem:[%s0 + $0x648] sm:$0xf]
    %v422 = vld [vmem:[%s0 + $0x64c] sm:$0xf]
    %v423 = vld [vmem:[%s0 + $0x650] sm:$0xf]
    %v424 = vld [vmem:[%s0 + $0x654] sm:$0xf]
    %v425 = vld [vmem:[%s0 + $0x658] sm:$0xf]
    %v426 = vld [vmem:[%s0 + $0x65c] sm:$0xf]
    %v427 = vld [vmem:[%s0 + $0x660] sm:$0xf]
    %v428 = vld [vmem:[%s0 + $0x664] sm:$0xf]
    %v429 = vld [vmem:[%s0 + $0x668] sm:$0xf]
    %v430 = vld [vmem:[%s0 + $0x66c] sm:$0xf]
    %v431 = vld [vmem:[%s0 + $0x670] sm:$0xf]
    %v432 = vld [vmem:[%s0 + $0x674] sm:$0xf]
    %v433 = vld [vmem:[%s0 + $0x678] sm:$0xf]
    %v434 = vld [vmem:[%s0 + $0x67c] sm:$0xf]
    %v435 = vld [vmem:[%s0 + $0x680] sm:$0xf]
    %v436 = vld [vmem:[%s0 + $0x684] sm:$0xf]
    %v437 = vld [vmem:[%s0 + $0x688] sm:$0xf]
    %v438 = vld [vmem:[%s0 + $0x68c] sm:$0xf]
    %v439 = vld [vmem:[%s0 + $0x690] sm:$0xf]
    %v440 = vld [vmem:[%s0 + $0x694] sm:$0xf]
    %v441 = vld [vmem:[%s0 + $0x698] sm:$0xf]
    %v442 = vld [vmem:[%s0 + $0x69c] sm:$0xf]
    %v443 = vld [vmem:[%s0 + $0x6a0] sm:$0xf]
    %v444 = vld [vmem:[%s0 + $0x6a4] sm:$0xf]
    %v445 = vld [vmem:[%s0 + $0x6a8] sm:$0xf]
    %v446 = vld [vmem:[%s0 + $0x6ac] sm:$0xf]
    %v447 = vld [vmem:[%s0 + $0x6b0] sm:$0xf]
    %v448 = vld [vmem:[%s0 + $0x6b4] sm:$0xf]
    %v449 = vld [vmem:[%s0 + $0x6b8] sm:$0xf]
    %v450 = vld [vmem:[%s0 + $0x6bc] sm:$0xf]
    %v451 = vld [vmem:[%s0 + $0x6c0] sm:$0xf]
    %v452 = vld [vmem:[%s0 + $0x6c4] sm:$0xf]
    %v453 = vld [vmem:[%s0 + $0x6c8] sm:$0xf]
    %v454 = vld [vmem:[%s0 + $0x6cc] sm:$0xf]
    %v455 = vld [vmem:[%s0 + $0x6d0] sm:$0xf]
    %v456 = vld [vmem:[%s0 + $0x6d4] sm:$0xf]
    %v457 = vld [vmem:[%s0 + $0x6d8] sm:$0xf]
    %v458 = vld [vmem:[%s0 + $0x6dc] sm:$0xf]
    %v459 = vld [vmem:[%s0 + $0x6e0] sm:$0xf]
    %v460 = vld [vmem:[%s0 + $0x6e4] sm:$0xf]
    %v461 = vld [vmem:[%s0 + $0x6e8] sm:$0xf]
    %v462 = vld [vmem:[%s0 + $0x6ec] sm:$0xf]
    %v463 = vld [vmem:[%s0 + $0x6f0] sm:$0xf]
    %v464 = vld [vmem:[%s0 + $0x6f4] sm:$0xf]
    %v465 = vld [vmem:[%s0 + $0x6f8] sm:$0xf]
    %v466 = vld [vmem:[%s0 + $0x6fc] sm:$0xf]
    %v467 = vld [vmem:[%s0 + $0x700] sm:$0xf]
    %v468 = vld [vmem:[%s0 + $0x704] sm:$0xf]
    %v469 = vld [vmem:[%s0 + $0x708] sm:$0xf]
    %v470 = vld [vmem:[%s0 + $0x70c] sm:$0xf]
    %v471 = vld [vmem:[%s0 + $0x710] sm:$0xf]
    %v472 = vld [vmem:[%s0 + $0x714] sm:$0xf]
    %v473 = vld [vmem:[%s0 + $0x718] sm:$0xf]
    %v474 = vld [vmem:[%s0 + $0x71c] sm:$0xf]
    %v475 = vld [vmem:[%s0 + $0x720] sm:$0xf]
    %v476 = vld [vmem:[%s0 + $0x724] sm:$0xf]
    %v477 = vld [vmem:[%s0 + $0x728] sm:$0xf]
    %v478 = vld [vmem:[%s0 + $0x72c] sm:$0xf]
    %v479 = vld [vmem:[%s0 + $0x730] sm:$0xf]
    %v480 = vld [vmem:[%s0 + $0x734] sm:$0xf]
    %v481 = vld [vmem:[%s0 + $0x738] sm:$0xf]
    %v482 = vld [vmem:[%s0 + $0x73c] sm:$0xf]
    %v483 = vld [vmem:[%s0 + $0x740] sm:$0xf]
    %v484 = vld [vmem:[%s0 + $0x744] sm:$0xf]
    %v485 = vld [vmem:[%s0 + $0x748] sm:$0xf]
    %v486 = vld [vmem:[%s0 + $0x74c] sm:$0xf]
    %v487 = vld [vmem:[%s0 + $0x750] sm:$0xf]
    %v488 = vld [vmem:[%s0 + $0x754] sm:$0xf]
    %v489 = vld [vmem:[%s0 + $0x758] sm:$0xf]
    %v490 = vld [vmem:[%s0 + $0x75c] sm:$0xf]
    %v491 = vld [vmem:[%s0 + $0x760] sm:$0xf]
    %v492 = vld [vmem:[%s0 + $0x764] sm:$0xf]
    %v493 = vld [vmem:[%s0 + $0x768] sm:$0xf]
    %v494 = vld [vmem:[%s0 + $0x76c] sm:$0xf]
    %v495 = vld [vmem:[%s0 + $0x770] sm:$0xf]
    %v496 = vld [vmem:[%s0 + $0x774] sm:$0xf]
    %v497 = vld [vmem:[%s0 + $0x778] sm:$0xf]
    %v498 = vld [vmem:[%s0 + $0x77c] sm:$0xf]
    %v499 = vld [vmem:[%s0 + $0x780] sm:$0xf]
    %v500 = vld [vmem:[%s0 + $0x784] sm:$0xf]
    %v501 = vld [vmem:[%s0 + $0x788] sm:$0xf]
    %v502 = vld [vmem:[%s0 + $0x78c] sm:$0xf]
    %v503 = vld [vmem:[%s0 + $0x790] sm:$0xf]
    %v504 = vld [vmem:[%s0 + $0x794] sm:$0xf]
    %v505 = vld [vmem:[%s0 + $0x798] sm:$0xf]
    %v506 = vld [vmem:[%s0 + $0x79c] sm:$0xf]
    %v507 = vld [vmem:[%s0 + $0x7a0] sm:$0xf]
    %v508 = vld [vmem:[%s0 + $0x7a4] sm:$0xf]
    %v509 = vld [vmem:[%s0 + $0x7a8] sm:$0xf]
    %v510 = vld [vmem:[%s0 + $0x7ac] sm:$0xf]
    %v511 = vld [vmem:[%s0 + $0x7b0] sm:$0xf]
    %v512 = vld [vmem:[%s0 + $0x7b4] sm:$0xf]
    %v513 = vld [vmem:[%s0 + $0x7b8] sm:$0xf]
    %v514 = vld [vmem:[%s0 + $0x7bc] sm:$0xf]
    %v515 = vld [vmem:[%s0 + $0x7c0] sm:$0xf]
    %v516 = vld [vmem:[%s0 + $0x7c4] sm:$0xf]
    %v517 = vld [vmem:[%s0 + $0x7c8] sm:$0xf]
    %v518 = vld [vmem:[%s0 + $0x7cc] sm:$0xf]
    %v519 = vld [vmem:[%s0 + $0x7d0] sm:$0xf]
    %v520 = vld [vmem:[%s0 + $0x7d4] sm:$0xf]
    %v521 = vld [vmem:[%s0 + $0x7d8] sm:$0xf]
    %v522 = vld [vmem:[%s0 + $0x7dc] sm:$0xf]
    %v523 = vld [vmem:[%s0 + $0x7e0] sm:$0xf]
    %v524 = vld [vmem:[%s0 + $0x7e4] sm:$0xf]
    %v525 = vld [vmem:[%s0 + $0x7e8] sm:$0xf]
    %v526 = vld [vmem:[%s0 + $0x7ec] sm:$0xf]
    %v527 = vld [vmem:[%s0 + $0x7f0] sm:$0xf]
    %v528 = vld [vmem:[%s0 + $0x7f4] sm:$0xf]
    %v529 = vld [vmem:[%s0 + $0x7f8] sm:$0xf]
    %v530 = vld [vmem:[%s0 + $0x7fc] sm:$0xf]
    %v531 = vld [vmem:[%s1] sm:$0xf]
    %v532 = vld [vmem:[%s1 + $0x4] sm:$0xf]
    %v533 = vld [vmem:[%s1 + $0x8] sm:$0xf]
    %v534 = vld [vmem:[%s1 + $0xc] sm:$0xf]
    %v535 = vld [vmem:[%s1 + $0x10] sm:$0x3]
    %v536 = vld [vmem:[%s2] sm:$0x1]
    %v538 = vlaneseq
    %v539 = vshrl.u32 %v538, 7
    %v540 = vsub.s32 0, %v539
    %v541 = vrot.slane %v536, %v540
    %v1055 = vunpack.c.l.b16 %v19
    %v1056 = vunpack.c.l.b16 %v20
    %v1057 = vunpack.c.l.b16 %v21
    %v1058 = vunpack.c.l.b16 %v22
    %v1059 = vunpack.c.l.b16 %v23
    %v1060 = vunpack.c.l.b16 %v24
    %v1061 = vunpack.c.l.b16 %v25
    %v1062 = vunpack.c.l.b16 %v26
    %v1063 = vunpack.c.l.b16 %v27
    %v1064 = vunpack.c.l.b16 %v28
    %v1065 = vunpack.c.l.b16 %v29
    %v1066 = vunpack.c.l.b16 %v30
    %v1067 = vunpack.c.l.b16 %v31
    %v1068 = vunpack.c.l.b16 %v32
    %v1069 = vunpack.c.l.b16 %v33
    %v1070 = vunpack.c.l.b16 %v34
    %v1071 = vunpack.c.l.b16 %v35
    %v1072 = vunpack.c.l.b16 %v36
    %v1073 = vunpack.c.l.b16 %v37
    %v1074 = vunpack.c.l.b16 %v38
    %v1075 = vunpack.c.l.b16 %v39
    %v1076 = vunpack.c.l.b16 %v40
    %v1077 = vunpack.c.l.b16 %v41
    %v1078 = vunpack.c.l.b16 %v42
    %v1079 = vunpack.c.l.b16 %v43
    %v1080 = vunpack.c.l.b16 %v44
    %v1081 = vunpack.c.l.b16 %v45
    %v1082 = vunpack.c.l.b16 %v46
    %v1083 = vunpack.c.l.b16 %v47
    %v1084 = vunpack.c.l.b16 %v48
    %v1085 = vunpack.c.l.b16 %v49
    %v1086 = vunpack.c.l.b16 %v50
    %v1087 = vunpack.c.l.b16 %v51
    %v1088 = vunpack.c.l.b16 %v52
    %v1089 = vunpack.c.l.b16 %v53
    %v1090 = vunpack.c.l.b16 %v54
    %v1091 = vunpack.c.l.b16 %v55
    %v1092 = vunpack.c.l.b16 %v56
    %v1093 = vunpack.c.l.b16 %v57
    %v1094 = vunpack.c.l.b16 %v58
    %v1095 = vunpack.c.l.b16 %v59
    %v1096 = vunpack.c.l.b16 %v60
    %v1097 = vunpack.c.l.b16 %v61
    %v1098 = vunpack.c.l.b16 %v62
    %v1099 = vunpack.c.l.b16 %v63
    %v1100 = vunpack.c.l.b16 %v64
    %v1101 = vunpack.c.l.b16 %v65
    %v1102 = vunpack.c.l.b16 %v66
    %v1103 = vunpack.c.l.b16 %v67
    %v1104 = vunpack.c.l.b16 %v68
    %v1105 = vunpack.c.l.b16 %v69
    %v1106 = vunpack.c.l.b16 %v70
    %v1107 = vunpack.c.l.b16 %v71
    %v1108 = vunpack.c.l.b16 %v72
    %v1109 = vunpack.c.l.b16 %v73
    %v1110 = vunpack.c.l.b16 %v74
    %v1111 = vunpack.c.l.b16 %v75
    %v1112 = vunpack.c.l.b16 %v76
    %v1113 = vunpack.c.l.b16 %v77
    %v1114 = vunpack.c.l.b16 %v78
    %v1115 = vunpack.c.l.b16 %v79
    %v1116 = vunpack.c.l.b16 %v80
    %v1117 = vunpack.c.l.b16 %v81
    %v1118 = vunpack.c.l.b16 %v82
    %v1119 = vunpack.c.l.b16 %v83
    %v1120 = vunpack.c.l.b16 %v84
    %v1121 = vunpack.c.l.b16 %v85
    %v1122 = vunpack.c.l.b16 %v86
    %v1123 = vunpack.c.l.b16 %v87
    %v1124 = vunpack.c.l.b16 %v88
    %v1125 = vunpack.c.l.b16 %v89
    %v1126 = vunpack.c.l.b16 %v90
    %v1127 = vunpack.c.l.b16 %v91
    %v1128 = vunpack.c.l.b16 %v92
    %v1129 = vunpack.c.l.b16 %v93
    %v1130 = vunpack.c.l.b16 %v94
    %v1131 = vunpack.c.l.b16 %v95
    %v1132 = vunpack.c.l.b16 %v96
    %v1133 = vunpack.c.l.b16 %v97
    %v1134 = vunpack.c.l.b16 %v98
    %v1135 = vunpack.c.l.b16 %v99
    %v1136 = vunpack.c.l.b16 %v100
    %v1137 = vunpack.c.l.b16 %v101
    %v1138 = vunpack.c.l.b16 %v102
    %v1139 = vunpack.c.l.b16 %v103
    %v1140 = vunpack.c.l.b16 %v104
    %v1141 = vunpack.c.l.b16 %v105
    %v1142 = vunpack.c.l.b16 %v106
    %v1143 = vunpack.c.l.b16 %v107
    %v1144 = vunpack.c.l.b16 %v108
    %v1145 = vunpack.c.l.b16 %v109
    %v1146 = vunpack.c.l.b16 %v110
    %v1147 = vunpack.c.l.b16 %v111
    %v1148 = vunpack.c.l.b16 %v112
    %v1149 = vunpack.c.l.b16 %v113
    %v1150 = vunpack.c.l.b16 %v114
    %v1151 = vunpack.c.l.b16 %v115
    %v1152 = vunpack.c.l.b16 %v116
    %v1153 = vunpack.c.l.b16 %v117
    %v1154 = vunpack.c.l.b16 %v118
    %v1155 = vunpack.c.l.b16 %v119
    %v1156 = vunpack.c.l.b16 %v120
    %v1157 = vunpack.c.l.b16 %v121
    %v1158 = vunpack.c.l.b16 %v122
    %v1159 = vunpack.c.l.b16 %v123
    %v1160 = vunpack.c.l.b16 %v124
    %v1161 = vunpack.c.l.b16 %v125
    %v1162 = vunpack.c.l.b16 %v126
    %v1163 = vunpack.c.l.b16 %v127
    %v1164 = vunpack.c.l.b16 %v128
    %v1165 = vunpack.c.l.b16 %v129
    %v1166 = vunpack.c.l.b16 %v130
    %v1167 = vunpack.c.l.b16 %v131
    %v1168 = vunpack.c.l.b16 %v132
    %v1169 = vunpack.c.l.b16 %v133
    %v1170 = vunpack.c.l.b16 %v134
    %v1171 = vunpack.c.l.b16 %v135
    %v1172 = vunpack.c.l.b16 %v136
    %v1173 = vunpack.c.l.b16 %v137
    %v1174 = vunpack.c.l.b16 %v138
    %v1175 = vunpack.c.l.b16 %v139
    %v1176 = vunpack.c.l.b16 %v140
    %v1177 = vunpack.c.l.b16 %v141
    %v1178 = vunpack.c.l.b16 %v142
    %v1179 = vunpack.c.l.b16 %v143
    %v1180 = vunpack.c.l.b16 %v144
    %v1181 = vunpack.c.l.b16 %v145
    %v1182 = vunpack.c.l.b16 %v146
    %v1183 = vunpack.c.l.b16 %v147
    %v1184 = vunpack.c.l.b16 %v148
    %v1185 = vunpack.c.l.b16 %v149
    %v1186 = vunpack.c.l.b16 %v150
    %v1187 = vunpack.c.l.b16 %v151
    %v1188 = vunpack.c.l.b16 %v152
    %v1189 = vunpack.c.l.b16 %v153
    %v1190 = vunpack.c.l.b16 %v154
    %v1191 = vunpack.c.l.b16 %v155
    %v1192 = vunpack.c.l.b16 %v156
    %v1193 = vunpack.c.l.b16 %v157
    %v1194 = vunpack.c.l.b16 %v158
    %v1195 = vunpack.c.l.b16 %v159
    %v1196 = vunpack.c.l.b16 %v160
    %v1197 = vunpack.c.l.b16 %v161
    %v1198 = vunpack.c.l.b16 %v162
    %v1199 = vunpack.c.l.b16 %v163
    %v1200 = vunpack.c.l.b16 %v164
    %v1201 = vunpack.c.l.b16 %v165
    %v1202 = vunpack.c.l.b16 %v166
    %v1203 = vunpack.c.l.b16 %v167
    %v1204 = vunpack.c.l.b16 %v168
    %v1205 = vunpack.c.l.b16 %v169
    %v1206 = vunpack.c.l.b16 %v170
    %v1207 = vunpack.c.l.b16 %v171
    %v1208 = vunpack.c.l.b16 %v172
    %v1209 = vunpack.c.l.b16 %v173
    %v1210 = vunpack.c.l.b16 %v174
    %v1211 = vunpack.c.l.b16 %v175
    %v1212 = vunpack.c.l.b16 %v176
    %v1213 = vunpack.c.l.b16 %v177
    %v1214 = vunpack.c.l.b16 %v178
    %v1215 = vunpack.c.l.b16 %v179
    %v1216 = vunpack.c.l.b16 %v180
    %v1217 = vunpack.c.l.b16 %v181
    %v1218 = vunpack.c.l.b16 %v182
    %v1219 = vunpack.c.l.b16 %v183
    %v1220 = vunpack.c.l.b16 %v184
    %v1221 = vunpack.c.l.b16 %v185
    %v1222 = vunpack.c.l.b16 %v186
    %v1223 = vunpack.c.l.b16 %v187
    %v1224 = vunpack.c.l.b16 %v188
    %v1225 = vunpack.c.l.b16 %v189
    %v1226 = vunpack.c.l.b16 %v190
    %v1227 = vunpack.c.l.b16 %v191
    %v1228 = vunpack.c.l.b16 %v192
    %v1229 = vunpack.c.l.b16 %v193
    %v1230 = vunpack.c.l.b16 %v194
    %v1231 = vunpack.c.l.b16 %v195
    %v1232 = vunpack.c.l.b16 %v196
    %v1233 = vunpack.c.l.b16 %v197
    %v1234 = vunpack.c.l.b16 %v198
    %v1235 = vunpack.c.l.b16 %v199
    %v1236 = vunpack.c.l.b16 %v200
    %v1237 = vunpack.c.l.b16 %v201
    %v1238 = vunpack.c.l.b16 %v202
    %v1239 = vunpack.c.l.b16 %v203
    %v1240 = vunpack.c.l.b16 %v204
    %v1241 = vunpack.c.l.b16 %v205
    %v1242 = vunpack.c.l.b16 %v206
    %v1243 = vunpack.c.l.b16 %v207
    %v1244 = vunpack.c.l.b16 %v208
    %v1245 = vunpack.c.l.b16 %v209
    %v1246 = vunpack.c.l.b16 %v210
    %v1247 = vunpack.c.l.b16 %v211
    %v1248 = vunpack.c.l.b16 %v212
    %v1249 = vunpack.c.l.b16 %v213
    %v1250 = vunpack.c.l.b16 %v214
    %v1251 = vunpack.c.l.b16 %v215
    %v1252 = vunpack.c.l.b16 %v216
    %v1253 = vunpack.c.l.b16 %v217
    %v1254 = vunpack.c.l.b16 %v218
    %v1255 = vunpack.c.l.b16 %v219
    %v1256 = vunpack.c.l.b16 %v220
    %v1257 = vunpack.c.l.b16 %v221
    %v1258 = vunpack.c.l.b16 %v222
    %v1259 = vunpack.c.l.b16 %v223
    %v1260 = vunpack.c.l.b16 %v224
    %v1261 = vunpack.c.l.b16 %v225
    %v1262 = vunpack.c.l.b16 %v226
    %v1263 = vunpack.c.l.b16 %v227
    %v1264 = vunpack.c.l.b16 %v228
    %v1265 = vunpack.c.l.b16 %v229
    %v1266 = vunpack.c.l.b16 %v230
    %v1267 = vunpack.c.l.b16 %v231
    %v1268 = vunpack.c.l.b16 %v232
    %v1269 = vunpack.c.l.b16 %v233
    %v1270 = vunpack.c.l.b16 %v234
    %v1271 = vunpack.c.l.b16 %v235
    %v1272 = vunpack.c.l.b16 %v236
    %v1273 = vunpack.c.l.b16 %v237
    %v1274 = vunpack.c.l.b16 %v238
    %v1275 = vunpack.c.l.b16 %v239
    %v1276 = vunpack.c.l.b16 %v240
    %v1277 = vunpack.c.l.b16 %v241
    %v1278 = vunpack.c.l.b16 %v242
    %v1279 = vunpack.c.l.b16 %v243
    %v1280 = vunpack.c.l.b16 %v244
    %v1281 = vunpack.c.l.b16 %v245
    %v1282 = vunpack.c.l.b16 %v246
    %v1283 = vunpack.c.l.b16 %v247
    %v1284 = vunpack.c.l.b16 %v248
    %v1285 = vunpack.c.l.b16 %v249
    %v1286 = vunpack.c.l.b16 %v250
    %v1287 = vunpack.c.l.b16 %v251
    %v1288 = vunpack.c.l.b16 %v252
    %v1289 = vunpack.c.l.b16 %v253
    %v1290 = vunpack.c.l.b16 %v254
    %v1291 = vunpack.c.l.b16 %v255
    %v1292 = vunpack.c.l.b16 %v256
    %v1293 = vunpack.c.l.b16 %v257
    %v1294 = vunpack.c.l.b16 %v258
    %v1295 = vunpack.c.l.b16 %v259
    %v1296 = vunpack.c.l.b16 %v260
    %v1297 = vunpack.c.l.b16 %v261
    %v1298 = vunpack.c.l.b16 %v262
    %v1299 = vunpack.c.l.b16 %v263
    %v1300 = vunpack.c.l.b16 %v264
    %v1301 = vunpack.c.l.b16 %v265
    %v1302 = vunpack.c.l.b16 %v266
    %v1303 = vunpack.c.l.b16 %v267
    %v1304 = vunpack.c.l.b16 %v268
    %v1305 = vunpack.c.l.b16 %v269
    %v1306 = vunpack.c.l.b16 %v270
    %v1307 = vunpack.c.l.b16 %v271
    %v1308 = vunpack.c.l.b16 %v272
    %v1309 = vunpack.c.l.b16 %v273
    %v1310 = vunpack.c.l.b16 %v274
    %v1311 = vunpack.c.l.b16 %v275
    %v1312 = vunpack.c.l.b16 %v276
    %v1313 = vunpack.c.l.b16 %v277
    %v1314 = vunpack.c.l.b16 %v278
    %v1315 = vunpack.c.l.b16 %v279
    %v1316 = vunpack.c.l.b16 %v280
    %v1317 = vunpack.c.l.b16 %v281
    %v1318 = vunpack.c.l.b16 %v282
    %v1319 = vunpack.c.l.b16 %v283
    %v1320 = vunpack.c.l.b16 %v284
    %v1321 = vunpack.c.l.b16 %v285
    %v1322 = vunpack.c.l.b16 %v286
    %v1323 = vunpack.c.l.b16 %v287
    %v1324 = vunpack.c.l.b16 %v288
    %v1325 = vunpack.c.l.b16 %v289
    %v1326 = vunpack.c.l.b16 %v290
    %v1327 = vunpack.c.l.b16 %v291
    %v1328 = vunpack.c.l.b16 %v292
    %v1329 = vunpack.c.l.b16 %v293
    %v1330 = vunpack.c.l.b16 %v294
    %v1331 = vunpack.c.l.b16 %v295
    %v1332 = vunpack.c.l.b16 %v296
    %v1333 = vunpack.c.l.b16 %v297
    %v1334 = vunpack.c.l.b16 %v298
    %v1335 = vunpack.c.l.b16 %v299
    %v1336 = vunpack.c.l.b16 %v300
    %v1337 = vunpack.c.l.b16 %v301
    %v1338 = vunpack.c.l.b16 %v302
    %v1339 = vunpack.c.l.b16 %v303
    %v1340 = vunpack.c.l.b16 %v304
    %v1341 = vunpack.c.l.b16 %v305
    %v1342 = vunpack.c.l.b16 %v306
    %v1343 = vunpack.c.l.b16 %v307
    %v1344 = vunpack.c.l.b16 %v308
    %v1345 = vunpack.c.l.b16 %v309
    %v1346 = vunpack.c.l.b16 %v310
    %v1347 = vunpack.c.l.b16 %v311
    %v1348 = vunpack.c.l.b16 %v312
    %v1349 = vunpack.c.l.b16 %v313
    %v1350 = vunpack.c.l.b16 %v314
    %v1351 = vunpack.c.l.b16 %v315
    %v1352 = vunpack.c.l.b16 %v316
    %v1353 = vunpack.c.l.b16 %v317
    %v1354 = vunpack.c.l.b16 %v318
    %v1355 = vunpack.c.l.b16 %v319
    %v1356 = vunpack.c.l.b16 %v320
    %v1357 = vunpack.c.l.b16 %v321
    %v1358 = vunpack.c.l.b16 %v322
    %v1359 = vunpack.c.l.b16 %v323
    %v1360 = vunpack.c.l.b16 %v324
    %v1361 = vunpack.c.l.b16 %v325
    %v1362 = vunpack.c.l.b16 %v326
    %v1363 = vunpack.c.l.b16 %v327
    %v1364 = vunpack.c.l.b16 %v328
    %v1365 = vunpack.c.l.b16 %v329
    %v1366 = vunpack.c.l.b16 %v330
    %v1367 = vunpack.c.l.b16 %v331
    %v1368 = vunpack.c.l.b16 %v332
    %v1369 = vunpack.c.l.b16 %v333
    %v1370 = vunpack.c.l.b16 %v334
    %v1371 = vunpack.c.l.b16 %v335
    %v1372 = vunpack.c.l.b16 %v336
    %v1373 = vunpack.c.l.b16 %v337
    %v1374 = vunpack.c.l.b16 %v338
    %v1375 = vunpack.c.l.b16 %v339
    %v1376 = vunpack.c.l.b16 %v340
    %v1377 = vunpack.c.l.b16 %v341
    %v1378 = vunpack.c.l.b16 %v342
    %v1379 = vunpack.c.l.b16 %v343
    %v1380 = vunpack.c.l.b16 %v344
    %v1381 = vunpack.c.l.b16 %v345
    %v1382 = vunpack.c.l.b16 %v346
    %v1383 = vunpack.c.l.b16 %v347
    %v1384 = vunpack.c.l.b16 %v348
    %v1385 = vunpack.c.l.b16 %v349
    %v1386 = vunpack.c.l.b16 %v350
    %v1387 = vunpack.c.l.b16 %v351
    %v1388 = vunpack.c.l.b16 %v352
    %v1389 = vunpack.c.l.b16 %v353
    %v1390 = vunpack.c.l.b16 %v354
    %v1391 = vunpack.c.l.b16 %v355
    %v1392 = vunpack.c.l.b16 %v356
    %v1393 = vunpack.c.l.b16 %v357
    %v1394 = vunpack.c.l.b16 %v358
    %v1395 = vunpack.c.l.b16 %v359
    %v1396 = vunpack.c.l.b16 %v360
    %v1397 = vunpack.c.l.b16 %v361
    %v1398 = vunpack.c.l.b16 %v362
    %v1399 = vunpack.c.l.b16 %v363
    %v1400 = vunpack.c.l.b16 %v364
    %v1401 = vunpack.c.l.b16 %v365
    %v1402 = vunpack.c.l.b16 %v366
    %v1403 = vunpack.c.l.b16 %v367
    %v1404 = vunpack.c.l.b16 %v368
    %v1405 = vunpack.c.l.b16 %v369
    %v1406 = vunpack.c.l.b16 %v370
    %v1407 = vunpack.c.l.b16 %v371
    %v1408 = vunpack.c.l.b16 %v372
    %v1409 = vunpack.c.l.b16 %v373
    %v1410 = vunpack.c.l.b16 %v374
    %v1411 = vunpack.c.l.b16 %v375
    %v1412 = vunpack.c.l.b16 %v376
    %v1413 = vunpack.c.l.b16 %v377
    %v1414 = vunpack.c.l.b16 %v378
    %v1415 = vunpack.c.l.b16 %v379
    %v1416 = vunpack.c.l.b16 %v380
    %v1417 = vunpack.c.l.b16 %v381
    %v1418 = vunpack.c.l.b16 %v382
    %v1419 = vunpack.c.l.b16 %v383
    %v1420 = vunpack.c.l.b16 %v384
    %v1421 = vunpack.c.l.b16 %v385
    %v1422 = vunpack.c.l.b16 %v386
    %v1423 = vunpack.c.l.b16 %v387
    %v1424 = vunpack.c.l.b16 %v388
    %v1425 = vunpack.c.l.b16 %v389
    %v1426 = vunpack.c.l.b16 %v390
    %v1427 = vunpack.c.l.b16 %v391
    %v1428 = vunpack.c.l.b16 %v392
    %v1429 = vunpack.c.l.b16 %v393
    %v1430 = vunpack.c.l.b16 %v394
    %v1431 = vunpack.c.l.b16 %v395
    %v1432 = vunpack.c.l.b16 %v396
    %v1433 = vunpack.c.l.b16 %v397
    %v1434 = vunpack.c.l.b16 %v398
    %v1435 = vunpack.c.l.b16 %v399
    %v1436 = vunpack.c.l.b16 %v400
    %v1437 = vunpack.c.l.b16 %v401
    %v1438 = vunpack.c.l.b16 %v402
    %v1439 = vunpack.c.l.b16 %v403
    %v1440 = vunpack.c.l.b16 %v404
    %v1441 = vunpack.c.l.b16 %v405
    %v1442 = vunpack.c.l.b16 %v406
    %v1443 = vunpack.c.l.b16 %v407
    %v1444 = vunpack.c.l.b16 %v408
    %v1445 = vunpack.c.l.b16 %v409
    %v1446 = vunpack.c.l.b16 %v410
    %v1447 = vunpack.c.l.b16 %v411
    %v1448 = vunpack.c.l.b16 %v412
    %v1449 = vunpack.c.l.b16 %v413
    %v1450 = vunpack.c.l.b16 %v414
    %v1451 = vunpack.c.l.b16 %v415
    %v1452 = vunpack.c.l.b16 %v416
    %v1453 = vunpack.c.l.b16 %v417
    %v1454 = vunpack.c.l.b16 %v418
    %v1455 = vunpack.c.l.b16 %v419
    %v1456 = vunpack.c.l.b16 %v420
    %v1457 = vunpack.c.l.b16 %v421
    %v1458 = vunpack.c.l.b16 %v422
    %v1459 = vunpack.c.l.b16 %v423
    %v1460 = vunpack.c.l.b16 %v424
    %v1461 = vunpack.c.l.b16 %v425
    %v1462 = vunpack.c.l.b16 %v426
    %v1463 = vunpack.c.l.b16 %v427
    %v1464 = vunpack.c.l.b16 %v428
    %v1465 = vunpack.c.l.b16 %v429
    %v1466 = vunpack.c.l.b16 %v430
    %v1467 = vunpack.c.l.b16 %v431
    %v1468 = vunpack.c.l.b16 %v432
    %v1469 = vunpack.c.l.b16 %v433
    %v1470 = vunpack.c.l.b16 %v434
    %v1471 = vunpack.c.l.b16 %v435
    %v1472 = vunpack.c.l.b16 %v436
    %v1473 = vunpack.c.l.b16 %v437
    %v1474 = vunpack.c.l.b16 %v438
    %v1475 = vunpack.c.l.b16 %v439
    %v1476 = vunpack.c.l.b16 %v440
    %v1477 = vunpack.c.l.b16 %v441
    %v1478 = vunpack.c.l.b16 %v442
    %v1479 = vunpack.c.l.b16 %v443
    %v1480 = vunpack.c.l.b16 %v444
    %v1481 = vunpack.c.l.b16 %v445
    %v1482 = vunpack.c.l.b16 %v446
    %v1483 = vunpack.c.l.b16 %v447
    %v1484 = vunpack.c.l.b16 %v448
    %v1485 = vunpack.c.l.b16 %v449
    %v1486 = vunpack.c.l.b16 %v450
    %v1487 = vunpack.c.l.b16 %v451
    %v1488 = vunpack.c.l.b16 %v452
    %v1489 = vunpack.c.l.b16 %v453
    %v1490 = vunpack.c.l.b16 %v454
    %v1491 = vunpack.c.l.b16 %v455
    %v1492 = vunpack.c.l.b16 %v456
    %v1493 = vunpack.c.l.b16 %v457
    %v1494 = vunpack.c.l.b16 %v458
    %v1495 = vunpack.c.l.b16 %v459
    %v1496 = vunpack.c.l.b16 %v460
    %v1497 = vunpack.c.l.b16 %v461
    %v1498 = vunpack.c.l.b16 %v462
    %v1499 = vunpack.c.l.b16 %v463
    %v1500 = vunpack.c.l.b16 %v464
    %v1501 = vunpack.c.l.b16 %v465
    %v1502 = vunpack.c.l.b16 %v466
    %v1503 = vunpack.c.l.b16 %v467
    %v1504 = vunpack.c.l.b16 %v468
    %v1505 = vunpack.c.l.b16 %v469
    %v1506 = vunpack.c.l.b16 %v470
    %v1507 = vunpack.c.l.b16 %v471
    %v1508 = vunpack.c.l.b16 %v472
    %v1509 = vunpack.c.l.b16 %v473
    %v1510 = vunpack.c.l.b16 %v474
    %v1511 = vunpack.c.l.b16 %v475
    %v1512 = vunpack.c.l.b16 %v476
    %v1513 = vunpack.c.l.b16 %v477
    %v1514 = vunpack.c.l.b16 %v478
    %v1515 = vunpack.c.l.b16 %v479
    %v1516 = vunpack.c.l.b16 %v480
    %v1517 = vunpack.c.l.b16 %v481
    %v1518 = vunpack.c.l.b16 %v482
    %v1519 = vunpack.c.l.b16 %v483
    %v1520 = vunpack.c.l.b16 %v484
    %v1521 = vunpack.c.l.b16 %v485
    %v1522 = vunpack.c.l.b16 %v486
    %v1523 = vunpack.c.l.b16 %v487
    %v1524 = vunpack.c.l.b16 %v488
    %v1525 = vunpack.c.l.b16 %v489
    %v1526 = vunpack.c.l.b16 %v490
    %v1527 = vunpack.c.l.b16 %v491
    %v1528 = vunpack.c.l.b16 %v492
    %v1529 = vunpack.c.l.b16 %v493
    %v1530 = vunpack.c.l.b16 %v494
    %v1531 = vunpack.c.l.b16 %v495
    %v1532 = vunpack.c.l.b16 %v496
    %v1533 = vunpack.c.l.b16 %v497
    %v1534 = vunpack.c.l.b16 %v498
    %v1535 = vunpack.c.l.b16 %v499
    %v1536 = vunpack.c.l.b16 %v500
    %v1537 = vunpack.c.l.b16 %v501
    %v1538 = vunpack.c.l.b16 %v502
    %v1539 = vunpack.c.l.b16 %v503
    %v1540 = vunpack.c.l.b16 %v504
    %v1541 = vunpack.c.l.b16 %v505
    %v1542 = vunpack.c.l.b16 %v506
    %v1543 = vunpack.c.l.b16 %v507
    %v1544 = vunpack.c.l.b16 %v508
    %v1545 = vunpack.c.l.b16 %v509
    %v1546 = vunpack.c.l.b16 %v510
    %v1547 = vunpack.c.l.b16 %v511
    %v1548 = vunpack.c.l.b16 %v512
    %v1549 = vunpack.c.l.b16 %v513
    %v1550 = vunpack.c.l.b16 %v514
    %v1551 = vunpack.c.l.b16 %v515
    %v1552 = vunpack.c.l.b16 %v516
    %v1553 = vunpack.c.l.b16 %v517
    %v1554 = vunpack.c.l.b16 %v518
    %v1555 = vunpack.c.l.b16 %v519
    %v1556 = vunpack.c.l.b16 %v520
    %v1557 = vunpack.c.l.b16 %v521
    %v1558 = vunpack.c.l.b16 %v522
    %v1559 = vunpack.c.l.b16 %v523
    %v1560 = vunpack.c.l.b16 %v524
    %v1561 = vunpack.c.l.b16 %v525
    %v1562 = vunpack.c.l.b16 %v526
    %v1563 = vunpack.c.l.b16 %v527
    %v1564 = vunpack.c.l.b16 %v528
    %v1565 = vunpack.c.l.b16 %v529
    %v1566 = vunpack.c.l.b16 %v530
    %v1567 = vpack.c.b16 %v1056, %v1055
    %v1568 = vpack.c.b16 %v1058, %v1057
    %v1569 = vpack.c.b16 %v1060, %v1059
    %v1570 = vpack.c.b16 %v1062, %v1061
    %v1571 = vpack.c.b16 %v1064, %v1063
    %v1572 = vpack.c.b16 %v1066, %v1065
    %v1573 = vpack.c.b16 %v1068, %v1067
    %v1574 = vpack.c.b16 %v1070, %v1069
    %v1575 = vpack.c.b16 %v1072, %v1071
    %v1576 = vpack.c.b16 %v1074, %v1073
    %v1577 = vpack.c.b16 %v1076, %v1075
    %v1578 = vpack.c.b16 %v1078, %v1077
    %v1579 = vpack.c.b16 %v1080, %v1079
    %v1580 = vpack.c.b16 %v1082, %v1081
    %v1581 = vpack.c.b16 %v1084, %v1083
    %v1582 = vpack.c.b16 %v1086, %v1085
    %v1583 = vpack.c.b16 %v1088, %v1087
    %v1584 = vpack.c.b16 %v1090, %v1089
    %v1585 = vpack.c.b16 %v1092, %v1091
    %v1586 = vpack.c.b16 %v1094, %v1093
    %v1587 = vpack.c.b16 %v1096, %v1095
    %v1588 = vpack.c.b16 %v1098, %v1097
    %v1589 = vpack.c.b16 %v1100, %v1099
    %v1590 = vpack.c.b16 %v1102, %v1101
    %v1591 = vpack.c.b16 %v1104, %v1103
    %v1592 = vpack.c.b16 %v1106, %v1105
    %v1593 = vpack.c.b16 %v1108, %v1107
    %v1594 = vpack.c.b16 %v1110, %v1109
    %v1595 = vpack.c.b16 %v1112, %v1111
    %v1596 = vpack.c.b16 %v1114, %v1113
    %v1597 = vpack.c.b16 %v1116, %v1115
    %v1598 = vpack.c.b16 %v1118, %v1117
    %v1599 = vpack.c.b16 %v1120, %v1119
    %v1600 = vpack.c.b16 %v1122, %v1121
    %v1601 = vpack.c.b16 %v1124, %v1123
    %v1602 = vpack.c.b16 %v1126, %v1125
    %v1603 = vpack.c.b16 %v1128, %v1127
    %v1604 = vpack.c.b16 %v1130, %v1129
    %v1605 = vpack.c.b16 %v1132, %v1131
    %v1606 = vpack.c.b16 %v1134, %v1133
    %v1607 = vpack.c.b16 %v1136, %v1135
    %v1608 = vpack.c.b16 %v1138, %v1137
    %v1609 = vpack.c.b16 %v1140, %v1139
    %v1610 = vpack.c.b16 %v1142, %v1141
    %v1611 = vpack.c.b16 %v1144, %v1143
    %v1612 = vpack.c.b16 %v1146, %v1145
    %v1613 = vpack.c.b16 %v1148, %v1147
    %v1614 = vpack.c.b16 %v1150, %v1149
    %v1615 = vpack.c.b16 %v1152, %v1151
    %v1616 = vpack.c.b16 %v1154, %v1153
    %v1617 = vpack.c.b16 %v1156, %v1155
    %v1618 = vpack.c.b16 %v1158, %v1157
    %v1619 = vpack.c.b16 %v1160, %v1159
    %v1620 = vpack.c.b16 %v1162, %v1161
    %v1621 = vpack.c.b16 %v1164, %v1163
    %v1622 = vpack.c.b16 %v1166, %v1165
    %v1623 = vpack.c.b16 %v1168, %v1167
    %v1624 = vpack.c.b16 %v1170, %v1169
    %v1625 = vpack.c.b16 %v1172, %v1171
    %v1626 = vpack.c.b16 %v1174, %v1173
    %v1627 = vpack.c.b16 %v1176, %v1175
    %v1628 = vpack.c.b16 %v1178, %v1177
    %v1629 = vpack.c.b16 %v1180, %v1179
    %v1630 = vpack.c.b16 %v1182, %v1181
    %v1631 = vpack.c.b16 %v1184, %v1183
    %v1632 = vpack.c.b16 %v1186, %v1185
    %v1633 = vpack.c.b16 %v1188, %v1187
    %v1634 = vpack.c.b16 %v1190, %v1189
    %v1635 = vpack.c.b16 %v1192, %v1191
    %v1636 = vpack.c.b16 %v1194, %v1193
    %v1637 = vpack.c.b16 %v1196, %v1195
    %v1638 = vpack.c.b16 %v1198, %v1197
    %v1639 = vpack.c.b16 %v1200, %v1199
    %v1640 = vpack.c.b16 %v1202, %v1201
    %v1641 = vpack.c.b16 %v1204, %v1203
    %v1642 = vpack.c.b16 %v1206, %v1205
    %v1643 = vpack.c.b16 %v1208, %v1207
    %v1644 = vpack.c.b16 %v1210, %v1209
    %v1645 = vpack.c.b16 %v1212, %v1211
    %v1646 = vpack.c.b16 %v1214, %v1213
    %v1647 = vpack.c.b16 %v1216, %v1215
    %v1648 = vpack.c.b16 %v1218, %v1217
    %v1649 = vpack.c.b16 %v1220, %v1219
    %v1650 = vpack.c.b16 %v1222, %v1221
    %v1651 = vpack.c.b16 %v1224, %v1223
    %v1652 = vpack.c.b16 %v1226, %v1225
    %v1653 = vpack.c.b16 %v1228, %v1227
    %v1654 = vpack.c.b16 %v1230, %v1229
    %v1655 = vpack.c.b16 %v1232, %v1231
    %v1656 = vpack.c.b16 %v1234, %v1233
    %v1657 = vpack.c.b16 %v1236, %v1235
    %v1658 = vpack.c.b16 %v1238, %v1237
    %v1659 = vpack.c.b16 %v1240, %v1239
    %v1660 = vpack.c.b16 %v1242, %v1241
    %v1661 = vpack.c.b16 %v1244, %v1243
    %v1662 = vpack.c.b16 %v1246, %v1245
    %v1663 = vpack.c.b16 %v1248, %v1247
    %v1664 = vpack.c.b16 %v1250, %v1249
    %v1665 = vpack.c.b16 %v1252, %v1251
    %v1666 = vpack.c.b16 %v1254, %v1253
    %v1667 = vpack.c.b16 %v1256, %v1255
    %v1668 = vpack.c.b16 %v1258, %v1257
    %v1669 = vpack.c.b16 %v1260, %v1259
    %v1670 = vpack.c.b16 %v1262, %v1261
    %v1671 = vpack.c.b16 %v1264, %v1263
    %v1672 = vpack.c.b16 %v1266, %v1265
    %v1673 = vpack.c.b16 %v1268, %v1267
    %v1674 = vpack.c.b16 %v1270, %v1269
    %v1675 = vpack.c.b16 %v1272, %v1271
    %v1676 = vpack.c.b16 %v1274, %v1273
    %v1677 = vpack.c.b16 %v1276, %v1275
    %v1678 = vpack.c.b16 %v1278, %v1277
    %v1679 = vpack.c.b16 %v1280, %v1279
    %v1680 = vpack.c.b16 %v1282, %v1281
    %v1681 = vpack.c.b16 %v1284, %v1283
    %v1682 = vpack.c.b16 %v1286, %v1285
    %v1683 = vpack.c.b16 %v1288, %v1287
    %v1684 = vpack.c.b16 %v1290, %v1289
    %v1685 = vpack.c.b16 %v1292, %v1291
    %v1686 = vpack.c.b16 %v1294, %v1293
    %v1687 = vpack.c.b16 %v1296, %v1295
    %v1688 = vpack.c.b16 %v1298, %v1297
    %v1689 = vpack.c.b16 %v1300, %v1299
    %v1690 = vpack.c.b16 %v1302, %v1301
    %v1691 = vpack.c.b16 %v1304, %v1303
    %v1692 = vpack.c.b16 %v1306, %v1305
    %v1693 = vpack.c.b16 %v1308, %v1307
    %v1694 = vpack.c.b16 %v1310, %v1309
    %v1695 = vpack.c.b16 %v1312, %v1311
    %v1696 = vpack.c.b16 %v1314, %v1313
    %v1697 = vpack.c.b16 %v1316, %v1315
    %v1698 = vpack.c.b16 %v1318, %v1317
    %v1699 = vpack.c.b16 %v1320, %v1319
    %v1700 = vpack.c.b16 %v1322, %v1321
    %v1701 = vpack.c.b16 %v1324, %v1323
    %v1702 = vpack.c.b16 %v1326, %v1325
    %v1703 = vpack.c.b16 %v1328, %v1327
    %v1704 = vpack.c.b16 %v1330, %v1329
    %v1705 = vpack.c.b16 %v1332, %v1331
    %v1706 = vpack.c.b16 %v1334, %v1333
    %v1707 = vpack.c.b16 %v1336, %v1335
    %v1708 = vpack.c.b16 %v1338, %v1337
    %v1709 = vpack.c.b16 %v1340, %v1339
    %v1710 = vpack.c.b16 %v1342, %v1341
    %v1711 = vpack.c.b16 %v1344, %v1343
    %v1712 = vpack.c.b16 %v1346, %v1345
    %v1713 = vpack.c.b16 %v1348, %v1347
    %v1714 = vpack.c.b16 %v1350, %v1349
    %v1715 = vpack.c.b16 %v1352, %v1351
    %v1716 = vpack.c.b16 %v1354, %v1353
    %v1717 = vpack.c.b16 %v1356, %v1355
    %v1718 = vpack.c.b16 %v1358, %v1357
    %v1719 = vpack.c.b16 %v1360, %v1359
    %v1720 = vpack.c.b16 %v1362, %v1361
    %v1721 = vpack.c.b16 %v1364, %v1363
    %v1722 = vpack.c.b16 %v1366, %v1365
    %v1723 = vpack.c.b16 %v1368, %v1367
    %v1724 = vpack.c.b16 %v1370, %v1369
    %v1725 = vpack.c.b16 %v1372, %v1371
    %v1726 = vpack.c.b16 %v1374, %v1373
    %v1727 = vpack.c.b16 %v1376, %v1375
    %v1728 = vpack.c.b16 %v1378, %v1377
    %v1729 = vpack.c.b16 %v1380, %v1379
    %v1730 = vpack.c.b16 %v1382, %v1381
    %v1731 = vpack.c.b16 %v1384, %v1383
    %v1732 = vpack.c.b16 %v1386, %v1385
    %v1733 = vpack.c.b16 %v1388, %v1387
    %v1734 = vpack.c.b16 %v1390, %v1389
    %v1735 = vpack.c.b16 %v1392, %v1391
    %v1736 = vpack.c.b16 %v1394, %v1393
    %v1737 = vpack.c.b16 %v1396, %v1395
    %v1738 = vpack.c.b16 %v1398, %v1397
    %v1739 = vpack.c.b16 %v1400, %v1399
    %v1740 = vpack.c.b16 %v1402, %v1401
    %v1741 = vpack.c.b16 %v1404, %v1403
    %v1742 = vpack.c.b16 %v1406, %v1405
    %v1743 = vpack.c.b16 %v1408, %v1407
    %v1744 = vpack.c.b16 %v1410, %v1409
    %v1745 = vpack.c.b16 %v1412, %v1411
    %v1746 = vpack.c.b16 %v1414, %v1413
    %v1747 = vpack.c.b16 %v1416, %v1415
    %v1748 = vpack.c.b16 %v1418, %v1417
    %v1749 = vpack.c.b16 %v1420, %v1419
    %v1750 = vpack.c.b16 %v1422, %v1421
    %v1751 = vpack.c.b16 %v1424, %v1423
    %v1752 = vpack.c.b16 %v1426, %v1425
    %v1753 = vpack.c.b16 %v1428, %v1427
    %v1754 = vpack.c.b16 %v1430, %v1429
    %v1755 = vpack.c.b16 %v1432, %v1431
    %v1756 = vpack.c.b16 %v1434, %v1433
    %v1757 = vpack.c.b16 %v1436, %v1435
    %v1758 = vpack.c.b16 %v1438, %v1437
    %v1759 = vpack.c.b16 %v1440, %v1439
    %v1760 = vpack.c.b16 %v1442, %v1441
    %v1761 = vpack.c.b16 %v1444, %v1443
    %v1762 = vpack.c.b16 %v1446, %v1445
    %v1763 = vpack.c.b16 %v1448, %v1447
    %v1764 = vpack.c.b16 %v1450, %v1449
    %v1765 = vpack.c.b16 %v1452, %v1451
    %v1766 = vpack.c.b16 %v1454, %v1453
    %v1767 = vpack.c.b16 %v1456, %v1455
    %v1768 = vpack.c.b16 %v1458, %v1457
    %v1769 = vpack.c.b16 %v1460, %v1459
    %v1770 = vpack.c.b16 %v1462, %v1461
    %v1771 = vpack.c.b16 %v1464, %v1463
    %v1772 = vpack.c.b16 %v1466, %v1465
    %v1773 = vpack.c.b16 %v1468, %v1467
    %v1774 = vpack.c.b16 %v1470, %v1469
    %v1775 = vpack.c.b16 %v1472, %v1471
    %v1776 = vpack.c.b16 %v1474, %v1473
    %v1777 = vpack.c.b16 %v1476, %v1475
    %v1778 = vpack.c.b16 %v1478, %v1477
    %v1779 = vpack.c.b16 %v1480, %v1479
    %v1780 = vpack.c.b16 %v1482, %v1481
    %v1781 = vpack.c.b16 %v1484, %v1483
    %v1782 = vpack.c.b16 %v1486, %v1485
    %v1783 = vpack.c.b16 %v1488, %v1487
    %v1784 = vpack.c.b16 %v1490, %v1489
    %v1785 = vpack.c.b16 %v1492, %v1491
    %v1786 = vpack.c.b16 %v1494, %v1493
    %v1787 = vpack.c.b16 %v1496, %v1495
    %v1788 = vpack.c.b16 %v1498, %v1497
    %v1789 = vpack.c.b16 %v1500, %v1499
    %v1790 = vpack.c.b16 %v1502, %v1501
    %v1791 = vpack.c.b16 %v1504, %v1503
    %v1792 = vpack.c.b16 %v1506, %v1505
    %v1793 = vpack.c.b16 %v1508, %v1507
    %v1794 = vpack.c.b16 %v1510, %v1509
    %v1795 = vpack.c.b16 %v1512, %v1511
    %v1796 = vpack.c.b16 %v1514, %v1513
    %v1797 = vpack.c.b16 %v1516, %v1515
    %v1798 = vpack.c.b16 %v1518, %v1517
    %v1799 = vpack.c.b16 %v1520, %v1519
    %v1800 = vpack.c.b16 %v1522, %v1521
    %v1801 = vpack.c.b16 %v1524, %v1523
    %v1802 = vpack.c.b16 %v1526, %v1525
    %v1803 = vpack.c.b16 %v1528, %v1527
    %v1804 = vpack.c.b16 %v1530, %v1529
    %v1805 = vpack.c.b16 %v1532, %v1531
    %v1806 = vpack.c.b16 %v1534, %v1533
    %v1807 = vpack.c.b16 %v1536, %v1535
    %v1808 = vpack.c.b16 %v1538, %v1537
    %v1809 = vpack.c.b16 %v1540, %v1539
    %v1810 = vpack.c.b16 %v1542, %v1541
    %v1811 = vpack.c.b16 %v1544, %v1543
    %v1812 = vpack.c.b16 %v1546, %v1545
    %v1813 = vpack.c.b16 %v1548, %v1547
    %v1814 = vpack.c.b16 %v1550, %v1549
    %v1815 = vpack.c.b16 %v1552, %v1551
    %v1816 = vpack.c.b16 %v1554, %v1553
    %v1817 = vpack.c.b16 %v1556, %v1555
    %v1818 = vpack.c.b16 %v1558, %v1557
    %v1819 = vpack.c.b16 %v1560, %v1559
    %v1820 = vpack.c.b16 %v1562, %v1561
    %v1821 = vpack.c.b16 %v1564, %v1563
    %v1822 = vpack.c.b16 %v1566, %v1565
    %v1828 = vunpack.c.l.b16 %v531
    %v1829 = vunpack.c.l.b16 %v532
    %v1830 = vunpack.c.l.b16 %v533
    %v1831 = vunpack.c.l.b16 %v534
    %v1832 = vunpack.c.l.b16 %v535
    %v1833 = vpack.c.b16 %v1829, %v1828
    %v1834 = vpack.c.b16 %v1831, %v1830
    %v1835 = vpack.c.b16 %v1832, %v1832
    %vm1838 = vcmask 293888
    %v1840 = vsel %vm1838, %v1567, 0
    %v1843 = vsel %vm1838, %v1568, 0
    %v1846 = vsel %vm1838, %v1569, 0
    %v1849 = vsel %vm1838, %v1570, 0
    %v1852 = vsel %vm1838, %v1571, 0
    %v1855 = vsel %vm1838, %v1572, 0
    %v1858 = vsel %vm1838, %v1573, 0
    %v1861 = vsel %vm1838, %v1574, 0
    %v1864 = vsel %vm1838, %v1575, 0
    %v1867 = vsel %vm1838, %v1576, 0
    %v1870 = vsel %vm1838, %v1577, 0
    %v1873 = vsel %vm1838, %v1578, 0
    %v1876 = vsel %vm1838, %v1579, 0
    %v1879 = vsel %vm1838, %v1580, 0
    %v1882 = vsel %vm1838, %v1581, 0
    %v1885 = vsel %vm1838, %v1582, 0
    %v1888 = vsel %vm1838, %v1583, 0
    %v1891 = vsel %vm1838, %v1584, 0
    %v1894 = vsel %vm1838, %v1585, 0
    %v1897 = vsel %vm1838, %v1586, 0
    %v1900 = vsel %vm1838, %v1587, 0
    %v1903 = vsel %vm1838, %v1588, 0
    %v1906 = vsel %vm1838, %v1589, 0
    %v1909 = vsel %vm1838, %v1590, 0
    %v1912 = vsel %vm1838, %v1591, 0
    %v1915 = vsel %vm1838, %v1592, 0
    %v1918 = vsel %vm1838, %v1593, 0
    %v1921 = vsel %vm1838, %v1594, 0
    %v1924 = vsel %vm1838, %v1595, 0
    %v1927 = vsel %vm1838, %v1596, 0
    %v1930 = vsel %vm1838, %v1597, 0
    %v1933 = vsel %vm1838, %v1598, 0
    %v1936 = vsel %vm1838, %v1599, 0
    %v1939 = vsel %vm1838, %v1600, 0
    %v1942 = vsel %vm1838, %v1601, 0
    %v1945 = vsel %vm1838, %v1602, 0
    %v1948 = vsel %vm1838, %v1603, 0
    %v1951 = vsel %vm1838, %v1604, 0
    %v1954 = vsel %vm1838, %v1605, 0
    %v1957 = vsel %vm1838, %v1606, 0
    %v1960 = vsel %vm1838, %v1607, 0
    %v1963 = vsel %vm1838, %v1608, 0
    %v1966 = vsel %vm1838, %v1609, 0
    %v1969 = vsel %vm1838, %v1610, 0
    %v1972 = vsel %vm1838, %v1611, 0
    %v1975 = vsel %vm1838, %v1612, 0
    %v1978 = vsel %vm1838, %v1613, 0
    %v1981 = vsel %vm1838, %v1614, 0
    %v1984 = vsel %vm1838, %v1615, 0
    %v1987 = vsel %vm1838, %v1616, 0
    %v1990 = vsel %vm1838, %v1617, 0
    %v1993 = vsel %vm1838, %v1618, 0
    %v1996 = vsel %vm1838, %v1619, 0
    %v1999 = vsel %vm1838, %v1620, 0
    %v2002 = vsel %vm1838, %v1621, 0
    %v2005 = vsel %vm1838, %v1622, 0
    %v2008 = vsel %vm1838, %v1623, 0
    %v2011 = vsel %vm1838, %v1624, 0
    %v2014 = vsel %vm1838, %v1625, 0
    %v2017 = vsel %vm1838, %v1626, 0
    %v2020 = vsel %vm1838, %v1627, 0
    %v2023 = vsel %vm1838, %v1628, 0
    %v2026 = vsel %vm1838, %v1629, 0
    %v2029 = vsel %vm1838, %v1630, 0
    %v2032 = vsel %vm1838, %v1631, 0
    %v2035 = vsel %vm1838, %v1632, 0
    %v2038 = vsel %vm1838, %v1633, 0
    %v2041 = vsel %vm1838, %v1634, 0
    %v2044 = vsel %vm1838, %v1635, 0
    %v2047 = vsel %vm1838, %v1636, 0
    %v2050 = vsel %vm1838, %v1637, 0
    %v2053 = vsel %vm1838, %v1638, 0
    %v2056 = vsel %vm1838, %v1639, 0
    %v2059 = vsel %vm1838, %v1640, 0
    %v2062 = vsel %vm1838, %v1641, 0
    %v2065 = vsel %vm1838, %v1642, 0
    %v2068 = vsel %vm1838, %v1643, 0
    %v2071 = vsel %vm1838, %v1644, 0
    %v2074 = vsel %vm1838, %v1645, 0
    %v2077 = vsel %vm1838, %v1646, 0
    %v2080 = vsel %vm1838, %v1647, 0
    %v2083 = vsel %vm1838, %v1648, 0
    %v2086 = vsel %vm1838, %v1649, 0
    %v2089 = vsel %vm1838, %v1650, 0
    %v2092 = vsel %vm1838, %v1651, 0
    %v2095 = vsel %vm1838, %v1652, 0
    %v2098 = vsel %vm1838, %v1653, 0
    %v2101 = vsel %vm1838, %v1654, 0
    %v2104 = vsel %vm1838, %v1655, 0
    %v2107 = vsel %vm1838, %v1656, 0
    %v2110 = vsel %vm1838, %v1657, 0
    %v2113 = vsel %vm1838, %v1658, 0
    %v2116 = vsel %vm1838, %v1659, 0
    %v2119 = vsel %vm1838, %v1660, 0
    %v2122 = vsel %vm1838, %v1661, 0
    %v2125 = vsel %vm1838, %v1662, 0
    %v2128 = vsel %vm1838, %v1663, 0
    %v2131 = vsel %vm1838, %v1664, 0
    %v2134 = vsel %vm1838, %v1665, 0
    %v2137 = vsel %vm1838, %v1666, 0
    %v2140 = vsel %vm1838, %v1667, 0
    %v2143 = vsel %vm1838, %v1668, 0
    %v2146 = vsel %vm1838, %v1669, 0
    %v2149 = vsel %vm1838, %v1670, 0
    %v2152 = vsel %vm1838, %v1671, 0
    %v2155 = vsel %vm1838, %v1672, 0
    %v2158 = vsel %vm1838, %v1673, 0
    %v2161 = vsel %vm1838, %v1674, 0
    %v2164 = vsel %vm1838, %v1675, 0
    %v2167 = vsel %vm1838, %v1676, 0
    %v2170 = vsel %vm1838, %v1677, 0
    %v2173 = vsel %vm1838, %v1678, 0
    %v2176 = vsel %vm1838, %v1679, 0
    %v2179 = vsel %vm1838, %v1680, 0
    %v2182 = vsel %vm1838, %v1681, 0
    %v2185 = vsel %vm1838, %v1682, 0
    %v2188 = vsel %vm1838, %v1683, 0
    %v2191 = vsel %vm1838, %v1684, 0
    %v2194 = vsel %vm1838, %v1685, 0
    %v2197 = vsel %vm1838, %v1686, 0
    %v2200 = vsel %vm1838, %v1687, 0
    %v2203 = vsel %vm1838, %v1688, 0
    %v2206 = vsel %vm1838, %v1689, 0
    %v2209 = vsel %vm1838, %v1690, 0
    %v2212 = vsel %vm1838, %v1691, 0
    %v2215 = vsel %vm1838, %v1692, 0
    %v2218 = vsel %vm1838, %v1693, 0
    %v2221 = vsel %vm1838, %v1694, 0
    %v2224 = vsel %vm1838, %v1695, 0
    %v2227 = vsel %vm1838, %v1696, 0
    %v2230 = vsel %vm1838, %v1697, 0
    %v2233 = vsel %vm1838, %v1698, 0
    %v2236 = vsel %vm1838, %v1699, 0
    %v2239 = vsel %vm1838, %v1700, 0
    %v2242 = vsel %vm1838, %v1701, 0
    %v2245 = vsel %vm1838, %v1702, 0
    %v2248 = vsel %vm1838, %v1703, 0
    %v2251 = vsel %vm1838, %v1704, 0
    %v2254 = vsel %vm1838, %v1705, 0
    %v2257 = vsel %vm1838, %v1706, 0
    %v2260 = vsel %vm1838, %v1707, 0
    %v2263 = vsel %vm1838, %v1708, 0
    %v2266 = vsel %vm1838, %v1709, 0
    %v2269 = vsel %vm1838, %v1710, 0
    %v2272 = vsel %vm1838, %v1711, 0
    %v2275 = vsel %vm1838, %v1712, 0
    %v2278 = vsel %vm1838, %v1713, 0
    %v2281 = vsel %vm1838, %v1714, 0
    %v2284 = vsel %vm1838, %v1715, 0
    %v2287 = vsel %vm1838, %v1716, 0
    %v2290 = vsel %vm1838, %v1717, 0
    %v2293 = vsel %vm1838, %v1718, 0
    %v2296 = vsel %vm1838, %v1719, 0
    %v2299 = vsel %vm1838, %v1720, 0
    %v2302 = vsel %vm1838, %v1721, 0
    %v2305 = vsel %vm1838, %v1722, 0
    %v2308 = vsel %vm1838, %v1723, 0
    %v2311 = vsel %vm1838, %v1724, 0
    %v2314 = vsel %vm1838, %v1725, 0
    %v2317 = vsel %vm1838, %v1726, 0
    %v2320 = vsel %vm1838, %v1727, 0
    %v2323 = vsel %vm1838, %v1728, 0
    %v2326 = vsel %vm1838, %v1729, 0
    %v2329 = vsel %vm1838, %v1730, 0
    %v2332 = vsel %vm1838, %v1731, 0
    %v2335 = vsel %vm1838, %v1732, 0
    %v2338 = vsel %vm1838, %v1733, 0
    %v2341 = vsel %vm1838, %v1734, 0
    %v2344 = vsel %vm1838, %v1735, 0
    %v2347 = vsel %vm1838, %v1736, 0
    %v2350 = vsel %vm1838, %v1737, 0
    %v2353 = vsel %vm1838, %v1738, 0
    %v2356 = vsel %vm1838, %v1739, 0
    %v2359 = vsel %vm1838, %v1740, 0
    %v2362 = vsel %vm1838, %v1741, 0
    %v2365 = vsel %vm1838, %v1742, 0
    %v2368 = vsel %vm1838, %v1743, 0
    %v2371 = vsel %vm1838, %v1744, 0
    %v2374 = vsel %vm1838, %v1745, 0
    %v2377 = vsel %vm1838, %v1746, 0
    %v2380 = vsel %vm1838, %v1747, 0
    %v2383 = vsel %vm1838, %v1748, 0
    %v2386 = vsel %vm1838, %v1749, 0
    %v2389 = vsel %vm1838, %v1750, 0
    %v2392 = vsel %vm1838, %v1751, 0
    %v2395 = vsel %vm1838, %v1752, 0
    %v2398 = vsel %vm1838, %v1753, 0
    %v2401 = vsel %vm1838, %v1754, 0
    %v2404 = vsel %vm1838, %v1755, 0
    %v2407 = vsel %vm1838, %v1756, 0
    %v2410 = vsel %vm1838, %v1757, 0
    %v2413 = vsel %vm1838, %v1758, 0
    %v2416 = vsel %vm1838, %v1759, 0
    %v2419 = vsel %vm1838, %v1760, 0
    %v2422 = vsel %vm1838, %v1761, 0
    %v2425 = vsel %vm1838, %v1762, 0
    %v2428 = vsel %vm1838, %v1763, 0
    %v2431 = vsel %vm1838, %v1764, 0
    %v2434 = vsel %vm1838, %v1765, 0
    %v2437 = vsel %vm1838, %v1766, 0
    %v2440 = vsel %vm1838, %v1767, 0
    %v2443 = vsel %vm1838, %v1768, 0
    %v2446 = vsel %vm1838, %v1769, 0
    %v2449 = vsel %vm1838, %v1770, 0
    %v2452 = vsel %vm1838, %v1771, 0
    %v2455 = vsel %vm1838, %v1772, 0
    %v2458 = vsel %vm1838, %v1773, 0
    %v2461 = vsel %vm1838, %v1774, 0
    %v2464 = vsel %vm1838, %v1775, 0
    %v2467 = vsel %vm1838, %v1776, 0
    %v2470 = vsel %vm1838, %v1777, 0
    %v2473 = vsel %vm1838, %v1778, 0
    %v2476 = vsel %vm1838, %v1779, 0
    %v2479 = vsel %vm1838, %v1780, 0
    %v2482 = vsel %vm1838, %v1781, 0
    %v2485 = vsel %vm1838, %v1782, 0
    %v2488 = vsel %vm1838, %v1783, 0
    %v2491 = vsel %vm1838, %v1784, 0
    %v2494 = vsel %vm1838, %v1785, 0
    %v2497 = vsel %vm1838, %v1786, 0
    %v2500 = vsel %vm1838, %v1787, 0
    %v2503 = vsel %vm1838, %v1788, 0
    %v2506 = vsel %vm1838, %v1789, 0
    %v2509 = vsel %vm1838, %v1790, 0
    %v2512 = vsel %vm1838, %v1791, 0
    %v2515 = vsel %vm1838, %v1792, 0
    %v2518 = vsel %vm1838, %v1793, 0
    %v2521 = vsel %vm1838, %v1794, 0
    %v2524 = vsel %vm1838, %v1795, 0
    %v2527 = vsel %vm1838, %v1796, 0
    %v2530 = vsel %vm1838, %v1797, 0
    %v2533 = vsel %vm1838, %v1798, 0
    %v2536 = vsel %vm1838, %v1799, 0
    %v2539 = vsel %vm1838, %v1800, 0
    %v2542 = vsel %vm1838, %v1801, 0
    %v2545 = vsel %vm1838, %v1802, 0
    %v2548 = vsel %vm1838, %v1803, 0
    %v2551 = vsel %vm1838, %v1804, 0
    %v2554 = vsel %vm1838, %v1805, 0
    %v2557 = vsel %vm1838, %v1806, 0
    %v2560 = vsel %vm1838, %v1807, 0
    %v2563 = vsel %vm1838, %v1808, 0
    %v2566 = vsel %vm1838, %v1809, 0
    %v2569 = vsel %vm1838, %v1810, 0
    %v2572 = vsel %vm1838, %v1811, 0
    %v2575 = vsel %vm1838, %v1812, 0
    %v2578 = vsel %vm1838, %v1813, 0
    %v2581 = vsel %vm1838, %v1814, 0
    %v2584 = vsel %vm1838, %v1815, 0
    %v2587 = vsel %vm1838, %v1816, 0
    %v2590 = vsel %vm1838, %v1817, 0
    %v2593 = vsel %vm1838, %v1818, 0
    %v2596 = vsel %vm1838, %v1819, 0
    %v2599 = vsel %vm1838, %v1820, 0
    %v2602 = vsel %vm1838, %v1821, 0
    %v2605 = vsel %vm1838, %v1822, 0
    %vm2607 = vcmask 1041408
    %v2609 = vsel %vm2607, %v1835, 0
    %2611 = vmatprep.subr.bf16.mxu0 0
    %2612 = vmatpush1.bf16.msra.mxu0 %v1833
    %2613 = vmatprep.subr.bf16.mxu0 0
    %2614 = vmatpush1.bf16.msra.mxu0 %v1834
    %2615 = vmatprep.subr.bf16.mxu0 0
    %2616 = vmatpush1.bf16.msra.mxu0 %v2609
    %2617 = vmatprep.subr.bf16.mxu0 0
    %2618 = vmatpush1.bf16.msra.mxu0 0
    %2619 = vmatprep.subr.bf16.mxu0 0
    %2620 = vmatpush1.bf16.msra.mxu0 0
    %2621 = vmatprep.subr.bf16.mxu0 0
    %2622 = vmatpush1.bf16.msra.mxu0 0
    %2623 = vmatprep.subr.bf16.mxu0 0
    %2624 = vmatpush1.bf16.msra.mxu0 0
    %2625 = vmatprep.subr.bf16.mxu0 0
    %2626 = vmatpush1.bf16.msra.mxu0 0
    %2627 = vmatprep.subr.bf16.mxu0 0
    %2628 = vmatpush1.bf16.msra.mxu0 0
    %2629 = vmatprep.subr.bf16.mxu0 0
    %2630 = vmatpush1.bf16.msra.mxu0 0
    %2631 = vmatprep.subr.bf16.mxu0 0
    %2632 = vmatpush1.bf16.msra.mxu0 0
    %2633 = vmatprep.subr.bf16.mxu0 0
    %2634 = vmatpush1.bf16.msra.mxu0 0
    %2635 = vmatprep.subr.bf16.mxu0 0
    %2636 = vmatpush1.bf16.msra.mxu0 0
    %2637 = vmatprep.subr.bf16.mxu0 0
    %2638 = vmatpush1.bf16.msra.mxu0 0
    %2639 = vmatprep.subr.bf16.mxu0 0
    %2640 = vmatpush1.bf16.msra.mxu0 0
    %2641 = vmatprep.subr.bf16.mxu0 0
    %2642 = vmatpush1.bf16.msra.mxu0 0
    %2643 = vmatprep.mubr.bf16.mxu0 0
    %2644 = vmatmul.mubr.bf16.gmra.mrb[0].mxu0 %v1840
    %v2645 = vpop.f32.mrb[0].mxu0
    %v2646 = vadd.f32 %v541, %v2645
    %v2647 = vpop.f32.mrb[0].mxu0
    %v2648 = vpop.f32.mrb[0].mxu0
    %v2649 = vadd.f32 %v541, %v2648
    %v2650 = vpop.f32.mrb[0].mxu0
    %2651 = vmatprep.mubr.bf16.mxu0 0
    %2652 = vmatmul.mubr.bf16.gmra.mrb[0].mxu0 %v1843
    %v2653 = vpop.f32.mrb[0].mxu0
    %v2654 = vadd.f32 %v541, %v2653
    %v2655 = vpop.f32.mrb[0].mxu0
    %v2656 = vpop.f32.mrb[0].mxu0
    %v2657 = vadd.f32 %v541, %v2656
    %v2658 = vpop.f32.mrb[0].mxu0
    %2659 = vmatprep.mubr.bf16.mxu0 0
    %2660 = vmatmul.mubr.bf16.gmra.mrb[0].mxu0 %v1846
    %v2661 = vpop.f32.mrb[0].mxu0
    %v2662 = vadd.f32 %v541, %v2661
    %v2663 = vpop.f32.mrb[0].mxu0
    %v2664 = vpop.f32.mrb[0].mxu0
    %v2665 = vadd.f32 %v541, %v2664
    %v2666 = vpop.f32.mrb[0].mxu0
    %2667 = vmatprep.mubr.bf16.mxu0 0
    %2668 = vmatmul.mubr.bf16.gmra.mrb[0].mxu0 %v1849
    %v2669 = vpop.f32.mrb[0].mxu0
    %v2670 = vadd.f32 %v541, %v2669
    %v2671 = vpop.f32.mrb[0].mxu0
    %v2672 = vpop.f32.mrb[0].mxu0
    %v2673 = vadd.f32 %v541, %v2672
    %v2674 = vpop.f32.mrb[0].mxu0
    %2675 = vmatprep.mubr.bf16.mxu0 0
    %2676 = vmatmul.mubr.bf16.gmra.mrb[0].mxu0 %v1852
    %v2677 = vpop.f32.mrb[0].mxu0
    %v2678 = vadd.f32 %v541, %v2677
    %v2679 = vpop.f32.mrb[0].mxu0
    %v2680 = vpop.f32.mrb[0].mxu0
    %v2681 = vadd.f32 %v541, %v2680
    %v2682 = vpop.f32.mrb[0].mxu0
    %2683 = vmatprep.mubr.bf16.mxu0 0
    %2684 = vmatmul.mubr.bf16.gmra.mrb[0].mxu0 %v1855
    %v2685 = vpop.f32.mrb[0].mxu0
    %v2686 = vadd.f32 %v541, %v2685
    %v2687 = vpop.f32.mrb[0].mxu0
    %v2688 = vpop.f32.mrb[0].mxu0
    %v2689 = vadd.f32 %v541, %v2688
    %v2690 = vpop.f32.mrb[0].mxu0
    %2691 = vmatprep.mubr.bf16.mxu0 0
    %2692 = vmatmul.mubr.bf16.gmra.mrb[0].mxu0 %v1858
    %v2693 = vpop.f32.mrb[0].mxu0
    %v2694 = vadd.f32 %v541, %v2693
    %v2695 = vpop.f32.mrb[0].mxu0
    %v2696 = vpop.f32.mrb[0].mxu0
    %v2697 = vadd.f32 %v541, %v2696
    %v2698 = vpop.f32.mrb[0].mxu0
    %2699 = vmatprep.mubr.bf16.mxu0 0
    %2700 = vmatmul.mubr.bf16.gmra.mrb[0].mxu0 %v1861
    %v2701 = vpop.f32.mrb[0].mxu0
    %v2702 = vadd.f32 %v541, %v2701
    %v2703 = vpop.f32.mrb[0].mxu0
    %v2704 = vpop.f32.mrb[0].mxu0
    %v2705 = vadd.f32 %v541, %v2704
    %v2706 = vpop.f32.mrb[0].mxu0
    %2707 = vmatprep.mubr.bf16.mxu0 0
    %2708 = vmatmul.mubr.bf16.gmra.mrb[0].mxu0 %v1864
    %v2709 = vpop.f32.mrb[0].mxu0
    %v2710 = vadd.f32 %v541, %v2709
    %v2711 = vpop.f32.mrb[0].mxu0
    %v2712 = vpop.f32.mrb[0].mxu0
    %v2713 = vadd.f32 %v541, %v2712
    %v2714 = vpop.f32.mrb[0].mxu0
    %2715 = vmatprep.mubr.bf16.mxu0 0
    %2716 = vmatmul.mubr.bf16.gmra.mrb[0].mxu0 %v1867
    %v2717 = vpop.f32.mrb[0].mxu0
    %v2718 = vadd.f32 %v541, %v2717
    %v2719 = vpop.f32.mrb[0].mxu0
    %v2720 = vpop.f32.mrb[0].mxu0
    %v2721 = vadd.f32 %v541, %v2720
    %v2722 = vpop.f32.mrb[0].mxu0
    %2723 = vmatprep.mubr.bf16.mxu0 0
    %2724 = vmatmul.mubr.bf16.gmra.mrb[0].mxu0 %v1870
    %v2725 = vpop.f32.mrb[0].mxu0
    %v2726 = vadd.f32 %v541, %v2725
    %v2727 = vpop.f32.mrb[0].mxu0
    %v2728 = vpop.f32.mrb[0].mxu0
    %v2729 = vadd.f32 %v541, %v2728
    %v2730 = vpop.f32.mrb[0].mxu0
    %2731 = vmatprep.mubr.bf16.mxu0 0
    %2732 = vmatmul.mubr.bf16.gmra.mrb[0].mxu0 %v1873
    %v2733 = vpop.f32.mrb[0].mxu0
    %v2734 = vadd.f32 %v541, %v2733
    %v2735 = vpop.f32.mrb[0].mxu0
    %v2736 = vpop.f32.mrb[0].mxu0
    %v2737 = vadd.f32 %v541, %v2736
    %v2738 = vpop.f32.mrb[0].mxu0
    %2739 = vmatprep.mubr.bf16.mxu0 0
    %2740 = vmatmul.mubr.bf16.gmra.mrb[0].mxu0 %v1876
    %v2741 = vpop.f32.mrb[0].mxu0
    %v2742 = vadd.f32 %v541, %v2741
    %v2743 = vpop.f32.mrb[0].mxu0
    %v2744 = vpop.f32.mrb[0].mxu0
    %v2745 = vadd.f32 %v541, %v2744
    %v2746 = vpop.f32.mrb[0].mxu0
    %2747 = vmatprep.mubr.bf16.mxu0 0
    %2748 = vmatmul.mubr.bf16.gmra.mrb[0].mxu0 %v1879
    %v2749 = vpop.f32.mrb[0].mxu0
    %v2750 = vadd.f32 %v541, %v2749
    %v2751 = vpop.f32.mrb[0].mxu0
    %v2752 = vpop.f32.mrb[0].mxu0
    %v2753 = vadd.f32 %v541, %v2752
    %v2754 = vpop.f32.mrb[0].mxu0
    %2755 = vmatprep.mubr.bf16.mxu0 0
    %2756 = vmatmul.mubr.bf16.gmra.mrb[0].mxu0 %v1882
    %v2757 = vpop.f32.mrb[0].mxu0
    %v2758 = vadd.f32 %v541, %v2757
    %v2759 = vpop.f32.mrb[0].mxu0
    %v2760 = vpop.f32.mrb[0].mxu0
    %v2761 = vadd.f32 %v541, %v2760
    %v2762 = vpop.f32.mrb[0].mxu0
    %2763 = vmatprep.mubr.bf16.mxu0 0
    %2764 = vmatmul.mubr.bf16.gmra.mrb[0].mxu0 %v1885
    %v2765 = vpop.f32.mrb[0].mxu0
    %v2766 = vadd.f32 %v541, %v2765
    %v2767 = vpop.f32.mrb[0].mxu0
    %v2768 = vpop.f32.mrb[0].mxu0
    %v2769 = vadd.f32 %v541, %v2768
    %v2770 = vpop.f32.mrb[0].mxu0
    %2771 = vmatprep.mubr.bf16.mxu0 0
    %2772 = vmatmul.mubr.bf16.gmra.mrb[0].mxu0 %v1888
    %v2773 = vpop.f32.mrb[0].mxu0
    %v2774 = vadd.f32 %v541, %v2773
    %v2775 = vpop.f32.mrb[0].mxu0
    %v2776 = vpop.f32.mrb[0].mxu0
    %v2777 = vadd.f32 %v541, %v2776
    %v2778 = vpop.f32.mrb[0].mxu0
    %2779 = vmatprep.mubr.bf16.mxu0 0
    %2780 = vmatmul.mubr.bf16.gmra.mrb[0].mxu0 %v1891
    %v2781 = vpop.f32.mrb[0].mxu0
    %v2782 = vadd.f32 %v541, %v2781
    %v2783 = vpop.f32.mrb[0].mxu0
    %v2784 = vpop.f32.mrb[0].mxu0
    %v2785 = vadd.f32 %v541, %v2784
    %v2786 = vpop.f32.mrb[0].mxu0
    %2787 = vmatprep.mubr.bf16.mxu0 0
    %2788 = vmatmul.mubr.bf16.gmra.mrb[0].mxu0 %v1894
    %v2789 = vpop.f32.mrb[0].mxu0
    %v2790 = vadd.f32 %v541, %v2789
    %v2791 = vpop.f32.mrb[0].mxu0
    %v2792 = vpop.f32.mrb[0].mxu0
    %v2793 = vadd.f32 %v541, %v2792
    %v2794 = vpop.f32.mrb[0].mxu0
    %2795 = vmatprep.mubr.bf16.mxu0 0
    %2796 = vmatmul.mubr.bf16.gmra.mrb[0].mxu0 %v1897
    %v2797 = vpop.f32.mrb[0].mxu0
    %v2798 = vadd.f32 %v541, %v2797
    %v2799 = vpop.f32.mrb[0].mxu0
    %v2800 = vpop.f32.mrb[0].mxu0
    %v2801 = vadd.f32 %v541, %v2800
    %v2802 = vpop.f32.mrb[0].mxu0
    %2803 = vmatprep.mubr.bf16.mxu0 0
    %2804 = vmatmul.mubr.bf16.gmra.mrb[0].mxu0 %v1900
    %v2805 = vpop.f32.mrb[0].mxu0
    %v2806 = vadd.f32 %v541, %v2805
    %v2807 = vpop.f32.mrb[0].mxu0
    %v2808 = vpop.f32.mrb[0].mxu0
    %v2809 = vadd.f32 %v541, %v2808
    %v2810 = vpop.f32.mrb[0].mxu0
    %2811 = vmatprep.mubr.bf16.mxu0 0
    %2812 = vmatmul.mubr.bf16.gmra.mrb[0].mxu0 %v1903
    %v2813 = vpop.f32.mrb[0].mxu0
    %v2814 = vadd.f32 %v541, %v2813
    %v2815 = vpop.f32.mrb[0].mxu0
    %v2816 = vpop.f32.mrb[0].mxu0
    %v2817 = vadd.f32 %v541, %v2816
    %v2818 = vpop.f32.mrb[0].mxu0
    %2819 = vmatprep.mubr.bf16.mxu0 0
    %2820 = vmatmul.mubr.bf16.gmra.mrb[0].mxu0 %v1906
    %v2821 = vpop.f32.mrb[0].mxu0
    %v2822 = vadd.f32 %v541, %v2821
    %v2823 = vpop.f32.mrb[0].mxu0
    %v2824 = vpop.f32.mrb[0].mxu0
    %v2825 = vadd.f32 %v541, %v2824
    %v2826 = vpop.f32.mrb[0].mxu0
    %2827 = vmatprep.mubr.bf16.mxu0 0
    %2828 = vmatmul.mubr.bf16.gmra.mrb[0].mxu0 %v1909
    %v2829 = vpop.f32.mrb[0].mxu0
    %v2830 = vadd.f32 %v541, %v2829
    %v2831 = vpop.f32.mrb[0].mxu0
    %v2832 = vpop.f32.mrb[0].mxu0
    %v2833 = vadd.f32 %v541, %v2832
    %v2834 = vpop.f32.mrb[0].mxu0
    %2835 = vmatprep.mubr.bf16.mxu0 0
    %2836 = vmatmul.mubr.bf16.gmra.mrb[0].mxu0 %v1912
    %v2837 = vpop.f32.mrb[0].mxu0
    %v2838 = vadd.f32 %v541, %v2837
    %v2839 = vpop.f32.mrb[0].mxu0
    %v2840 = vpop.f32.mrb[0].mxu0
    %v2841 = vadd.f32 %v541, %v2840
    %v2842 = vpop.f32.mrb[0].mxu0
    %2843 = vmatprep.mubr.bf16.mxu0 0
    %2844 = vmatmul.mubr.bf16.gmra.mrb[0].mxu0 %v1915
    %v2845 = vpop.f32.mrb[0].mxu0
    %v2846 = vadd.f32 %v541, %v2845
    %v2847 = vpop.f32.mrb[0].mxu0
    %v2848 = vpop.f32.mrb[0].mxu0
    %v2849 = vadd.f32 %v541, %v2848
    %v2850 = vpop.f32.mrb[0].mxu0
    %2851 = vmatprep.mubr.bf16.mxu0 0
    %2852 = vmatmul.mubr.bf16.gmra.mrb[0].mxu0 %v1918
    %v2853 = vpop.f32.mrb[0].mxu0
    %v2854 = vadd.f32 %v541, %v2853
    %v2855 = vpop.f32.mrb[0].mxu0
    %v2856 = vpop.f32.mrb[0].mxu0
    %v2857 = vadd.f32 %v541, %v2856
    %v2858 = vpop.f32.mrb[0].mxu0
    %2859 = vmatprep.mubr.bf16.mxu0 0
    %2860 = vmatmul.mubr.bf16.gmra.mrb[0].mxu0 %v1921
    %v2861 = vpop.f32.mrb[0].mxu0
    %v2862 = vadd.f32 %v541, %v2861
    %v2863 = vpop.f32.mrb[0].mxu0
    %v2864 = vpop.f32.mrb[0].mxu0
    %v2865 = vadd.f32 %v541, %v2864
    %v2866 = vpop.f32.mrb[0].mxu0
    %2867 = vmatprep.mubr.bf16.mxu0 0
    %2868 = vmatmul.mubr.bf16.gmra.mrb[0].mxu0 %v1924
    %v2869 = vpop.f32.mrb[0].mxu0
    %v2870 = vadd.f32 %v541, %v2869
    %v2871 = vpop.f32.mrb[0].mxu0
    %v2872 = vpop.f32.mrb[0].mxu0
    %v2873 = vadd.f32 %v541, %v2872
    %v2874 = vpop.f32.mrb[0].mxu0
    %2875 = vmatprep.mubr.bf16.mxu0 0
    %2876 = vmatmul.mubr.bf16.gmra.mrb[0].mxu0 %v1927
    %v2877 = vpop.f32.mrb[0].mxu0
    %v2878 = vadd.f32 %v541, %v2877
    %v2879 = vpop.f32.mrb[0].mxu0
    %v2880 = vpop.f32.mrb[0].mxu0
    %v2881 = vadd.f32 %v541, %v2880
    %v2882 = vpop.f32.mrb[0].mxu0
    %2883 = vmatprep.mubr.bf16.mxu0 0
    %2884 = vmatmul.mubr.bf16.gmra.mrb[0].mxu0 %v1930
    %v2885 = vpop.f32.mrb[0].mxu0
    %v2886 = vadd.f32 %v541, %v2885
    %v2887 = vpop.f32.mrb[0].mxu0
    %v2888 = vpop.f32.mrb[0].mxu0
    %v2889 = vadd.f32 %v541, %v2888
    %v2890 = vpop.f32.mrb[0].mxu0
    %2891 = vmatprep.mubr.bf16.mxu0 0
    %2892 = vmatmul.mubr.bf16.gmra.mrb[0].mxu0 %v1933
    %v2893 = vpop.f32.mrb[0].mxu0
    %v2894 = vadd.f32 %v541, %v2893
    %v2895 = vpop.f32.mrb[0].mxu0
    %v2896 = vpop.f32.mrb[0].mxu0
    %v2897 = vadd.f32 %v541, %v2896
    %v2898 = vpop.f32.mrb[0].mxu0
    %2899 = vmatprep.mubr.bf16.mxu0 0
    %2900 = vmatmul.mubr.bf16.gmra.mrb[0].mxu0 %v1936
    %v2901 = vpop.f32.mrb[0].mxu0
    %v2902 = vadd.f32 %v541, %v2901
    %v2903 = vpop.f32.mrb[0].mxu0
    %v2904 = vpop.f32.mrb[0].mxu0
    %v2905 = vadd.f32 %v541, %v2904
    %v2906 = vpop.f32.mrb[0].mxu0
    %2907 = vmatprep.mubr.bf16.mxu0 0
    %2908 = vmatmul.mubr.bf16.gmra.mrb[0].mxu0 %v1939
    %v2909 = vpop.f32.mrb[0].mxu0
    %v2910 = vadd.f32 %v541, %v2909
    %v2911 = vpop.f32.mrb[0].mxu0
    %v2912 = vpop.f32.mrb[0].mxu0
    %v2913 = vadd.f32 %v541, %v2912
    %v2914 = vpop.f32.mrb[0].mxu0
    %2915 = vmatprep.mubr.bf16.mxu0 0
    %2916 = vmatmul.mubr.bf16.gmra.mrb[0].mxu0 %v1942
    %v2917 = vpop.f32.mrb[0].mxu0
    %v2918 = vadd.f32 %v541, %v2917
    %v2919 = vpop.f32.mrb[0].mxu0
    %v2920 = vpop.f32.mrb[0].mxu0
    %v2921 = vadd.f32 %v541, %v2920
    %v2922 = vpop.f32.mrb[0].mxu0
    %2923 = vmatprep.mubr.bf16.mxu0 0
    %2924 = vmatmul.mubr.bf16.gmra.mrb[0].mxu0 %v1945
    %v2925 = vpop.f32.mrb[0].mxu0
    %v2926 = vadd.f32 %v541, %v2925
    %v2927 = vpop.f32.mrb[0].mxu0
    %v2928 = vpop.f32.mrb[0].mxu0
    %v2929 = vadd.f32 %v541, %v2928
    %v2930 = vpop.f32.mrb[0].mxu0
    %2931 = vmatprep.mubr.bf16.mxu0 0
    %2932 = vmatmul.mubr.bf16.gmra.mrb[0].mxu0 %v1948
    %v2933 = vpop.f32.mrb[0].mxu0
    %v2934 = vadd.f32 %v541, %v2933
    %v2935 = vpop.f32.mrb[0].mxu0
    %v2936 = vpop.f32.mrb[0].mxu0
    %v2937 = vadd.f32 %v541, %v2936
    %v2938 = vpop.f32.mrb[0].mxu0
    %2939 = vmatprep.mubr.bf16.mxu0 0
    %2940 = vmatmul.mubr.bf16.gmra.mrb[0].mxu0 %v1951
    %v2941 = vpop.f32.mrb[0].mxu0
    %v2942 = vadd.f32 %v541, %v2941
    %v2943 = vpop.f32.mrb[0].mxu0
    %v2944 = vpop.f32.mrb[0].mxu0
    %v2945 = vadd.f32 %v541, %v2944
    %v2946 = vpop.f32.mrb[0].mxu0
    %2947 = vmatprep.mubr.bf16.mxu0 0
    %2948 = vmatmul.mubr.bf16.gmra.mrb[0].mxu0 %v1954
    %v2949 = vpop.f32.mrb[0].mxu0
    %v2950 = vadd.f32 %v541, %v2949
    %v2951 = vpop.f32.mrb[0].mxu0
    %v2952 = vpop.f32.mrb[0].mxu0
    %v2953 = vadd.f32 %v541, %v2952
    %v2954 = vpop.f32.mrb[0].mxu0
    %2955 = vmatprep.mubr.bf16.mxu0 0
    %2956 = vmatmul.mubr.bf16.gmra.mrb[0].mxu0 %v1957
    %v2957 = vpop.f32.mrb[0].mxu0
    %v2958 = vadd.f32 %v541, %v2957
    %v2959 = vpop.f32.mrb[0].mxu0
    %v2960 = vpop.f32.mrb[0].mxu0
    %v2961 = vadd.f32 %v541, %v2960
    %v2962 = vpop.f32.mrb[0].mxu0
    %2963 = vmatprep.mubr.bf16.mxu0 0
    %2964 = vmatmul.mubr.bf16.gmra.mrb[0].mxu0 %v1960
    %v2965 = vpop.f32.mrb[0].mxu0
    %v2966 = vadd.f32 %v541, %v2965
    %v2967 = vpop.f32.mrb[0].mxu0
    %v2968 = vpop.f32.mrb[0].mxu0
    %v2969 = vadd.f32 %v541, %v2968
    %v2970 = vpop.f32.mrb[0].mxu0
    %2971 = vmatprep.mubr.bf16.mxu0 0
    %2972 = vmatmul.mubr.bf16.gmra.mrb[0].mxu0 %v1963
    %v2973 = vpop.f32.mrb[0].mxu0
    %v2974 = vadd.f32 %v541, %v2973
    %v2975 = vpop.f32.mrb[0].mxu0
    %v2976 = vpop.f32.mrb[0].mxu0
    %v2977 = vadd.f32 %v541, %v2976
    %v2978 = vpop.f32.mrb[0].mxu0
    %2979 = vmatprep.mubr.bf16.mxu0 0
    %2980 = vmatmul.mubr.bf16.gmra.mrb[0].mxu0 %v1966
    %v2981 = vpop.f32.mrb[0].mxu0
    %v2982 = vadd.f32 %v541, %v2981
    %v2983 = vpop.f32.mrb[0].mxu0
    %v2984 = vpop.f32.mrb[0].mxu0
    %v2985 = vadd.f32 %v541, %v2984
    %v2986 = vpop.f32.mrb[0].mxu0
    %2987 = vmatprep.mubr.bf16.mxu0 0
    %2988 = vmatmul.mubr.bf16.gmra.mrb[0].mxu0 %v1969
    %v2989 = vpop.f32.mrb[0].mxu0
    %v2990 = vadd.f32 %v541, %v2989
    %v2991 = vpop.f32.mrb[0].mxu0
    %v2992 = vpop.f32.mrb[0].mxu0
    %v2993 = vadd.f32 %v541, %v2992
    %v2994 = vpop.f32.mrb[0].mxu0
    %2995 = vmatprep.mubr.bf16.mxu0 0
    %2996 = vmatmul.mubr.bf16.gmra.mrb[0].mxu0 %v1972
    %v2997 = vpop.f32.mrb[0].mxu0
    %v2998 = vadd.f32 %v541, %v2997
    %v2999 = vpop.f32.mrb[0].mxu0
    %v3000 = vpop.f32.mrb[0].mxu0
    %v3001 = vadd.f32 %v541, %v3000
    %v3002 = vpop.f32.mrb[0].mxu0
    %3003 = vmatprep.mubr.bf16.mxu0 0
    %3004 = vmatmul.mubr.bf16.gmra.mrb[0].mxu0 %v1975
    %v3005 = vpop.f32.mrb[0].mxu0
    %v3006 = vadd.f32 %v541, %v3005
    %v3007 = vpop.f32.mrb[0].mxu0
    %v3008 = vpop.f32.mrb[0].mxu0
    %v3009 = vadd.f32 %v541, %v3008
    %v3010 = vpop.f32.mrb[0].mxu0
    %3011 = vmatprep.mubr.bf16.mxu0 0
    %3012 = vmatmul.mubr.bf16.gmra.mrb[0].mxu0 %v1978
    %v3013 = vpop.f32.mrb[0].mxu0
    %v3014 = vadd.f32 %v541, %v3013
    %v3015 = vpop.f32.mrb[0].mxu0
    %v3016 = vpop.f32.mrb[0].mxu0
    %v3017 = vadd.f32 %v541, %v3016
    %v3018 = vpop.f32.mrb[0].mxu0
    %3019 = vmatprep.mubr.bf16.mxu0 0
    %3020 = vmatmul.mubr.bf16.gmra.mrb[0].mxu0 %v1981
    %v3021 = vpop.f32.mrb[0].mxu0
    %v3022 = vadd.f32 %v541, %v3021
    %v3023 = vpop.f32.mrb[0].mxu0
    %v3024 = vpop.f32.mrb[0].mxu0
    %v3025 = vadd.f32 %v541, %v3024
    %v3026 = vpop.f32.mrb[0].mxu0
    %3027 = vmatprep.mubr.bf16.mxu0 0
    %3028 = vmatmul.mubr.bf16.gmra.mrb[0].mxu0 %v1984
    %v3029 = vpop.f32.mrb[0].mxu0
    %v3030 = vadd.f32 %v541, %v3029
    %v3031 = vpop.f32.mrb[0].mxu0
    %v3032 = vpop.f32.mrb[0].mxu0
    %v3033 = vadd.f32 %v541, %v3032
    %v3034 = vpop.f32.mrb[0].mxu0
    %3035 = vmatprep.mubr.bf16.mxu0 0
    %3036 = vmatmul.mubr.bf16.gmra.mrb[0].mxu0 %v1987
    %v3037 = vpop.f32.mrb[0].mxu0
    %v3038 = vadd.f32 %v541, %v3037
    %v3039 = vpop.f32.mrb[0].mxu0
    %v3040 = vpop.f32.mrb[0].mxu0
    %v3041 = vadd.f32 %v541, %v3040
    %v3042 = vpop.f32.mrb[0].mxu0
    %3043 = vmatprep.mubr.bf16.mxu0 0
    %3044 = vmatmul.mubr.bf16.gmra.mrb[0].mxu0 %v1990
    %v3045 = vpop.f32.mrb[0].mxu0
    %v3046 = vadd.f32 %v541, %v3045
    %v3047 = vpop.f32.mrb[0].mxu0
    %v3048 = vpop.f32.mrb[0].mxu0
    %v3049 = vadd.f32 %v541, %v3048
    %v3050 = vpop.f32.mrb[0].mxu0
    %3051 = vmatprep.mubr.bf16.mxu0 0
    %3052 = vmatmul.mubr.bf16.gmra.mrb[0].mxu0 %v1993
    %v3053 = vpop.f32.mrb[0].mxu0
    %v3054 = vadd.f32 %v541, %v3053
    %v3055 = vpop.f32.mrb[0].mxu0
    %v3056 = vpop.f32.mrb[0].mxu0
    %v3057 = vadd.f32 %v541, %v3056
    %v3058 = vpop.f32.mrb[0].mxu0
    %3059 = vmatprep.mubr.bf16.mxu0 0
    %3060 = vmatmul.mubr.bf16.gmra.mrb[0].mxu0 %v1996
    %v3061 = vpop.f32.mrb[0].mxu0
    %v3062 = vadd.f32 %v541, %v3061
    %v3063 = vpop.f32.mrb[0].mxu0
    %v3064 = vpop.f32.mrb[0].mxu0
    %v3065 = vadd.f32 %v541, %v3064
    %v3066 = vpop.f32.mrb[0].mxu0
    %3067 = vmatprep.mubr.bf16.mxu0 0
    %3068 = vmatmul.mubr.bf16.gmra.mrb[0].mxu0 %v1999
    %v3069 = vpop.f32.mrb[0].mxu0
    %v3070 = vadd.f32 %v541, %v3069
    %v3071 = vpop.f32.mrb[0].mxu0
    %v3072 = vpop.f32.mrb[0].mxu0
    %v3073 = vadd.f32 %v541, %v3072
    %v3074 = vpop.f32.mrb[0].mxu0
    %3075 = vmatprep.mubr.bf16.mxu0 0
    %3076 = vmatmul.mubr.bf16.gmra.mrb[0].mxu0 %v2002
    %v3077 = vpop.f32.mrb[0].mxu0
    %v3078 = vadd.f32 %v541, %v3077
    %v3079 = vpop.f32.mrb[0].mxu0
    %v3080 = vpop.f32.mrb[0].mxu0
    %v3081 = vadd.f32 %v541, %v3080
    %v3082 = vpop.f32.mrb[0].mxu0
    %3083 = vmatprep.mubr.bf16.mxu0 0
    %3084 = vmatmul.mubr.bf16.gmra.mrb[0].mxu0 %v2005
    %v3085 = vpop.f32.mrb[0].mxu0
    %v3086 = vadd.f32 %v541, %v3085
    %v3087 = vpop.f32.mrb[0].mxu0
    %v3088 = vpop.f32.mrb[0].mxu0
    %v3089 = vadd.f32 %v541, %v3088
    %v3090 = vpop.f32.mrb[0].mxu0
    %3091 = vmatprep.mubr.bf16.mxu0 0
    %3092 = vmatmul.mubr.bf16.gmra.mrb[0].mxu0 %v2008
    %v3093 = vpop.f32.mrb[0].mxu0
    %v3094 = vadd.f32 %v541, %v3093
    %v3095 = vpop.f32.mrb[0].mxu0
    %v3096 = vpop.f32.mrb[0].mxu0
    %v3097 = vadd.f32 %v541, %v3096
    %v3098 = vpop.f32.mrb[0].mxu0
    %3099 = vmatprep.mubr.bf16.mxu0 0
    %3100 = vmatmul.mubr.bf16.gmra.mrb[0].mxu0 %v2011
    %v3101 = vpop.f32.mrb[0].mxu0
    %v3102 = vadd.f32 %v541, %v3101
    %v3103 = vpop.f32.mrb[0].mxu0
    %v3104 = vpop.f32.mrb[0].mxu0
    %v3105 = vadd.f32 %v541, %v3104
    %v3106 = vpop.f32.mrb[0].mxu0
    %3107 = vmatprep.mubr.bf16.mxu0 0
    %3108 = vmatmul.mubr.bf16.gmra.mrb[0].mxu0 %v2014
    %v3109 = vpop.f32.mrb[0].mxu0
    %v3110 = vadd.f32 %v541, %v3109
    %v3111 = vpop.f32.mrb[0].mxu0
    %v3112 = vpop.f32.mrb[0].mxu0
    %v3113 = vadd.f32 %v541, %v3112
    %v3114 = vpop.f32.mrb[0].mxu0
    %3115 = vmatprep.mubr.bf16.mxu0 0
    %3116 = vmatmul.mubr.bf16.gmra.mrb[0].mxu0 %v2017
    %v3117 = vpop.f32.mrb[0].mxu0
    %v3118 = vadd.f32 %v541, %v3117
    %v3119 = vpop.f32.mrb[0].mxu0
    %v3120 = vpop.f32.mrb[0].mxu0
    %v3121 = vadd.f32 %v541, %v3120
    %v3122 = vpop.f32.mrb[0].mxu0
    %3123 = vmatprep.mubr.bf16.mxu0 0
    %3124 = vmatmul.mubr.bf16.gmra.mrb[0].mxu0 %v2020
    %v3125 = vpop.f32.mrb[0].mxu0
    %v3126 = vadd.f32 %v541, %v3125
    %v3127 = vpop.f32.mrb[0].mxu0
    %v3128 = vpop.f32.mrb[0].mxu0
    %v3129 = vadd.f32 %v541, %v3128
    %v3130 = vpop.f32.mrb[0].mxu0
    %3131 = vmatprep.mubr.bf16.mxu0 0
    %3132 = vmatmul.mubr.bf16.gmra.mrb[0].mxu0 %v2023
    %v3133 = vpop.f32.mrb[0].mxu0
    %v3134 = vadd.f32 %v541, %v3133
    %v3135 = vpop.f32.mrb[0].mxu0
    %v3136 = vpop.f32.mrb[0].mxu0
    %v3137 = vadd.f32 %v541, %v3136
    %v3138 = vpop.f32.mrb[0].mxu0
    %3139 = vmatprep.mubr.bf16.mxu0 0
    %3140 = vmatmul.mubr.bf16.gmra.mrb[0].mxu0 %v2026
    %v3141 = vpop.f32.mrb[0].mxu0
    %v3142 = vadd.f32 %v541, %v3141
    %v3143 = vpop.f32.mrb[0].mxu0
    %v3144 = vpop.f32.mrb[0].mxu0
    %v3145 = vadd.f32 %v541, %v3144
    %v3146 = vpop.f32.mrb[0].mxu0
    %3147 = vmatprep.mubr.bf16.mxu0 0
    %3148 = vmatmul.mubr.bf16.gmra.mrb[0].mxu0 %v2029
    %v3149 = vpop.f32.mrb[0].mxu0
    %v3150 = vadd.f32 %v541, %v3149
    %v3151 = vpop.f32.mrb[0].mxu0
    %v3152 = vpop.f32.mrb[0].mxu0
    %v3153 = vadd.f32 %v541, %v3152
    %v3154 = vpop.f32.mrb[0].mxu0
    %3155 = vmatprep.mubr.bf16.mxu0 0
    %3156 = vmatmul.mubr.bf16.gmra.mrb[0].mxu0 %v2032
    %v3157 = vpop.f32.mrb[0].mxu0
    %v3158 = vadd.f32 %v541, %v3157
    %v3159 = vpop.f32.mrb[0].mxu0
    %v3160 = vpop.f32.mrb[0].mxu0
    %v3161 = vadd.f32 %v541, %v3160
    %v3162 = vpop.f32.mrb[0].mxu0
    %3163 = vmatprep.mubr.bf16.mxu0 0
    %3164 = vmatmul.mubr.bf16.gmra.mrb[0].mxu0 %v2035
    %v3165 = vpop.f32.mrb[0].mxu0
    %v3166 = vadd.f32 %v541, %v3165
    %v3167 = vpop.f32.mrb[0].mxu0
    %v3168 = vpop.f32.mrb[0].mxu0
    %v3169 = vadd.f32 %v541, %v3168
    %v3170 = vpop.f32.mrb[0].mxu0
    %3171 = vmatprep.mubr.bf16.mxu0 0
    %3172 = vmatmul.mubr.bf16.gmra.mrb[0].mxu0 %v2038
    %v3173 = vpop.f32.mrb[0].mxu0
    %v3174 = vadd.f32 %v541, %v3173
    %v3175 = vpop.f32.mrb[0].mxu0
    %v3176 = vpop.f32.mrb[0].mxu0
    %v3177 = vadd.f32 %v541, %v3176
    %v3178 = vpop.f32.mrb[0].mxu0
    %3179 = vmatprep.mubr.bf16.mxu0 0
    %3180 = vmatmul.mubr.bf16.gmra.mrb[0].mxu0 %v2041
    %v3181 = vpop.f32.mrb[0].mxu0
    %v3182 = vadd.f32 %v541, %v3181
    %v3183 = vpop.f32.mrb[0].mxu0
    %v3184 = vpop.f32.mrb[0].mxu0
    %v3185 = vadd.f32 %v541, %v3184
    %v3186 = vpop.f32.mrb[0].mxu0
    %3187 = vmatprep.mubr.bf16.mxu0 0
    %3188 = vmatmul.mubr.bf16.gmra.mrb[0].mxu0 %v2044
    %v3189 = vpop.f32.mrb[0].mxu0
    %v3190 = vadd.f32 %v541, %v3189
    %v3191 = vpop.f32.mrb[0].mxu0
    %v3192 = vpop.f32.mrb[0].mxu0
    %v3193 = vadd.f32 %v541, %v3192
    %v3194 = vpop.f32.mrb[0].mxu0
    %3195 = vmatprep.mubr.bf16.mxu0 0
    %3196 = vmatmul.mubr.bf16.gmra.mrb[0].mxu0 %v2047
    %v3197 = vpop.f32.mrb[0].mxu0
    %v3198 = vadd.f32 %v541, %v3197
    %v3199 = vpop.f32.mrb[0].mxu0
    %v3200 = vpop.f32.mrb[0].mxu0
    %v3201 = vadd.f32 %v541, %v3200
    %v3202 = vpop.f32.mrb[0].mxu0
    %3203 = vmatprep.mubr.bf16.mxu0 0
    %3204 = vmatmul.mubr.bf16.gmra.mrb[0].mxu0 %v2050
    %v3205 = vpop.f32.mrb[0].mxu0
    %v3206 = vadd.f32 %v541, %v3205
    %v3207 = vpop.f32.mrb[0].mxu0
    %v3208 = vpop.f32.mrb[0].mxu0
    %v3209 = vadd.f32 %v541, %v3208
    %v3210 = vpop.f32.mrb[0].mxu0
    %3211 = vmatprep.mubr.bf16.mxu0 0
    %3212 = vmatmul.mubr.bf16.gmra.mrb[0].mxu0 %v2053
    %v3213 = vpop.f32.mrb[0].mxu0
    %v3214 = vadd.f32 %v541, %v3213
    %v3215 = vpop.f32.mrb[0].mxu0
    %v3216 = vpop.f32.mrb[0].mxu0
    %v3217 = vadd.f32 %v541, %v3216
    %v3218 = vpop.f32.mrb[0].mxu0
    %3219 = vmatprep.mubr.bf16.mxu0 0
    %3220 = vmatmul.mubr.bf16.gmra.mrb[0].mxu0 %v2056
    %v3221 = vpop.f32.mrb[0].mxu0
    %v3222 = vadd.f32 %v541, %v3221
    %v3223 = vpop.f32.mrb[0].mxu0
    %v3224 = vpop.f32.mrb[0].mxu0
    %v3225 = vadd.f32 %v541, %v3224
    %v3226 = vpop.f32.mrb[0].mxu0
    %3227 = vmatprep.mubr.bf16.mxu0 0
    %3228 = vmatmul.mubr.bf16.gmra.mrb[0].mxu0 %v2059
    %v3229 = vpop.f32.mrb[0].mxu0
    %v3230 = vadd.f32 %v541, %v3229
    %v3231 = vpop.f32.mrb[0].mxu0
    %v3232 = vpop.f32.mrb[0].mxu0
    %v3233 = vadd.f32 %v541, %v3232
    %v3234 = vpop.f32.mrb[0].mxu0
    %3235 = vmatprep.mubr.bf16.mxu0 0
    %3236 = vmatmul.mubr.bf16.gmra.mrb[0].mxu0 %v2062
    %v3237 = vpop.f32.mrb[0].mxu0
    %v3238 = vadd.f32 %v541, %v3237
    %v3239 = vpop.f32.mrb[0].mxu0
    %v3240 = vpop.f32.mrb[0].mxu0
    %v3241 = vadd.f32 %v541, %v3240
    %v3242 = vpop.f32.mrb[0].mxu0
    %3243 = vmatprep.mubr.bf16.mxu0 0
    %3244 = vmatmul.mubr.bf16.gmra.mrb[0].mxu0 %v2065
    %v3245 = vpop.f32.mrb[0].mxu0
    %v3246 = vadd.f32 %v541, %v3245
    %v3247 = vpop.f32.mrb[0].mxu0
    %v3248 = vpop.f32.mrb[0].mxu0
    %v3249 = vadd.f32 %v541, %v3248
    %v3250 = vpop.f32.mrb[0].mxu0
    %3251 = vmatprep.mubr.bf16.mxu0 0
    %3252 = vmatmul.mubr.bf16.gmra.mrb[0].mxu0 %v2068
    %v3253 = vpop.f32.mrb[0].mxu0
    %v3254 = vadd.f32 %v541, %v3253
    %v3255 = vpop.f32.mrb[0].mxu0
    %v3256 = vpop.f32.mrb[0].mxu0
    %v3257 = vadd.f32 %v541, %v3256
    %v3258 = vpop.f32.mrb[0].mxu0
    %3259 = vmatprep.mubr.bf16.mxu0 0
    %3260 = vmatmul.mubr.bf16.gmra.mrb[0].mxu0 %v2071
    %v3261 = vpop.f32.mrb[0].mxu0
    %v3262 = vadd.f32 %v541, %v3261
    %v3263 = vpop.f32.mrb[0].mxu0
    %v3264 = vpop.f32.mrb[0].mxu0
    %v3265 = vadd.f32 %v541, %v3264
    %v3266 = vpop.f32.mrb[0].mxu0
    %3267 = vmatprep.mubr.bf16.mxu0 0
    %3268 = vmatmul.mubr.bf16.gmra.mrb[0].mxu0 %v2074
    %v3269 = vpop.f32.mrb[0].mxu0
    %v3270 = vadd.f32 %v541, %v3269
    %v3271 = vpop.f32.mrb[0].mxu0
    %v3272 = vpop.f32.mrb[0].mxu0
    %v3273 = vadd.f32 %v541, %v3272
    %v3274 = vpop.f32.mrb[0].mxu0
    %3275 = vmatprep.mubr.bf16.mxu0 0
    %3276 = vmatmul.mubr.bf16.gmra.mrb[0].mxu0 %v2077
    %v3277 = vpop.f32.mrb[0].mxu0
    %v3278 = vadd.f32 %v541, %v3277
    %v3279 = vpop.f32.mrb[0].mxu0
    %v3280 = vpop.f32.mrb[0].mxu0
    %v3281 = vadd.f32 %v541, %v3280
    %v3282 = vpop.f32.mrb[0].mxu0
    %3283 = vmatprep.mubr.bf16.mxu0 0
    %3284 = vmatmul.mubr.bf16.gmra.mrb[0].mxu0 %v2080
    %v3285 = vpop.f32.mrb[0].mxu0
    %v3286 = vadd.f32 %v541, %v3285
    %v3287 = vpop.f32.mrb[0].mxu0
    %v3288 = vpop.f32.mrb[0].mxu0
    %v3289 = vadd.f32 %v541, %v3288
    %v3290 = vpop.f32.mrb[0].mxu0
    %3291 = vmatprep.mubr.bf16.mxu0 0
    %3292 = vmatmul.mubr.bf16.gmra.mrb[0].mxu0 %v2083
    %v3293 = vpop.f32.mrb[0].mxu0
    %v3294 = vadd.f32 %v541, %v3293
    %v3295 = vpop.f32.mrb[0].mxu0
    %v3296 = vpop.f32.mrb[0].mxu0
    %v3297 = vadd.f32 %v541, %v3296
    %v3298 = vpop.f32.mrb[0].mxu0
    %3299 = vmatprep.mubr.bf16.mxu0 0
    %3300 = vmatmul.mubr.bf16.gmra.mrb[0].mxu0 %v2086
    %v3301 = vpop.f32.mrb[0].mxu0
    %v3302 = vadd.f32 %v541, %v3301
    %v3303 = vpop.f32.mrb[0].mxu0
    %v3304 = vpop.f32.mrb[0].mxu0
    %v3305 = vadd.f32 %v541, %v3304
    %v3306 = vpop.f32.mrb[0].mxu0
    %3307 = vmatprep.mubr.bf16.mxu0 0
    %3308 = vmatmul.mubr.bf16.gmra.mrb[0].mxu0 %v2089
    %v3309 = vpop.f32.mrb[0].mxu0
    %v3310 = vadd.f32 %v541, %v3309
    %v3311 = vpop.f32.mrb[0].mxu0
    %v3312 = vpop.f32.mrb[0].mxu0
    %v3313 = vadd.f32 %v541, %v3312
    %v3314 = vpop.f32.mrb[0].mxu0
    %3315 = vmatprep.mubr.bf16.mxu0 0
    %3316 = vmatmul.mubr.bf16.gmra.mrb[0].mxu0 %v2092
    %v3317 = vpop.f32.mrb[0].mxu0
    %v3318 = vadd.f32 %v541, %v3317
    %v3319 = vpop.f32.mrb[0].mxu0
    %v3320 = vpop.f32.mrb[0].mxu0
    %v3321 = vadd.f32 %v541, %v3320
    %v3322 = vpop.f32.mrb[0].mxu0
    %3323 = vmatprep.mubr.bf16.mxu0 0
    %3324 = vmatmul.mubr.bf16.gmra.mrb[0].mxu0 %v2095
    %v3325 = vpop.f32.mrb[0].mxu0
    %v3326 = vadd.f32 %v541, %v3325
    %v3327 = vpop.f32.mrb[0].mxu0
    %v3328 = vpop.f32.mrb[0].mxu0
    %v3329 = vadd.f32 %v541, %v3328
    %v3330 = vpop.f32.mrb[0].mxu0
    %3331 = vmatprep.mubr.bf16.mxu0 0
    %3332 = vmatmul.mubr.bf16.gmra.mrb[0].mxu0 %v2098
    %v3333 = vpop.f32.mrb[0].mxu0
    %v3334 = vadd.f32 %v541, %v3333
    %v3335 = vpop.f32.mrb[0].mxu0
    %v3336 = vpop.f32.mrb[0].mxu0
    %v3337 = vadd.f32 %v541, %v3336
    %v3338 = vpop.f32.mrb[0].mxu0
    %3339 = vmatprep.mubr.bf16.mxu0 0
    %3340 = vmatmul.mubr.bf16.gmra.mrb[0].mxu0 %v2101
    %v3341 = vpop.f32.mrb[0].mxu0
    %v3342 = vadd.f32 %v541, %v3341
    %v3343 = vpop.f32.mrb[0].mxu0
    %v3344 = vpop.f32.mrb[0].mxu0
    %v3345 = vadd.f32 %v541, %v3344
    %v3346 = vpop.f32.mrb[0].mxu0
    %3347 = vmatprep.mubr.bf16.mxu0 0
    %3348 = vmatmul.mubr.bf16.gmra.mrb[0].mxu0 %v2104
    %v3349 = vpop.f32.mrb[0].mxu0
    %v3350 = vadd.f32 %v541, %v3349
    %v3351 = vpop.f32.mrb[0].mxu0
    %v3352 = vpop.f32.mrb[0].mxu0
    %v3353 = vadd.f32 %v541, %v3352
    %v3354 = vpop.f32.mrb[0].mxu0
    %3355 = vmatprep.mubr.bf16.mxu0 0
    %3356 = vmatmul.mubr.bf16.gmra.mrb[0].mxu0 %v2107
    %v3357 = vpop.f32.mrb[0].mxu0
    %v3358 = vadd.f32 %v541, %v3357
    %v3359 = vpop.f32.mrb[0].mxu0
    %v3360 = vpop.f32.mrb[0].mxu0
    %v3361 = vadd.f32 %v541, %v3360
    %v3362 = vpop.f32.mrb[0].mxu0
    %3363 = vmatprep.mubr.bf16.mxu0 0
    %3364 = vmatmul.mubr.bf16.gmra.mrb[0].mxu0 %v2110
    %v3365 = vpop.f32.mrb[0].mxu0
    %v3366 = vadd.f32 %v541, %v3365
    %v3367 = vpop.f32.mrb[0].mxu0
    %v3368 = vpop.f32.mrb[0].mxu0
    %v3369 = vadd.f32 %v541, %v3368
    %v3370 = vpop.f32.mrb[0].mxu0
    %3371 = vmatprep.mubr.bf16.mxu0 0
    %3372 = vmatmul.mubr.bf16.gmra.mrb[0].mxu0 %v2113
    %v3373 = vpop.f32.mrb[0].mxu0
    %v3374 = vadd.f32 %v541, %v3373
    %v3375 = vpop.f32.mrb[0].mxu0
    %v3376 = vpop.f32.mrb[0].mxu0
    %v3377 = vadd.f32 %v541, %v3376
    %v3378 = vpop.f32.mrb[0].mxu0
    %3379 = vmatprep.mubr.bf16.mxu0 0
    %3380 = vmatmul.mubr.bf16.gmra.mrb[0].mxu0 %v2116
    %v3381 = vpop.f32.mrb[0].mxu0
    %v3382 = vadd.f32 %v541, %v3381
    %v3383 = vpop.f32.mrb[0].mxu0
    %v3384 = vpop.f32.mrb[0].mxu0
    %v3385 = vadd.f32 %v541, %v3384
    %v3386 = vpop.f32.mrb[0].mxu0
    %3387 = vmatprep.mubr.bf16.mxu0 0
    %3388 = vmatmul.mubr.bf16.gmra.mrb[0].mxu0 %v2119
    %v3389 = vpop.f32.mrb[0].mxu0
    %v3390 = vadd.f32 %v541, %v3389
    %v3391 = vpop.f32.mrb[0].mxu0
    %v3392 = vpop.f32.mrb[0].mxu0
    %v3393 = vadd.f32 %v541, %v3392
    %v3394 = vpop.f32.mrb[0].mxu0
    %3395 = vmatprep.mubr.bf16.mxu0 0
    %3396 = vmatmul.mubr.bf16.gmra.mrb[0].mxu0 %v2122
    %v3397 = vpop.f32.mrb[0].mxu0
    %v3398 = vadd.f32 %v541, %v3397
    %v3399 = vpop.f32.mrb[0].mxu0
    %v3400 = vpop.f32.mrb[0].mxu0
    %v3401 = vadd.f32 %v541, %v3400
    %v3402 = vpop.f32.mrb[0].mxu0
    %3403 = vmatprep.mubr.bf16.mxu0 0
    %3404 = vmatmul.mubr.bf16.gmra.mrb[0].mxu0 %v2125
    %v3405 = vpop.f32.mrb[0].mxu0
    %v3406 = vadd.f32 %v541, %v3405
    %v3407 = vpop.f32.mrb[0].mxu0
    %v3408 = vpop.f32.mrb[0].mxu0
    %v3409 = vadd.f32 %v541, %v3408
    %v3410 = vpop.f32.mrb[0].mxu0
    %3411 = vmatprep.mubr.bf16.mxu0 0
    %3412 = vmatmul.mubr.bf16.gmra.mrb[0].mxu0 %v2128
    %v3413 = vpop.f32.mrb[0].mxu0
    %v3414 = vadd.f32 %v541, %v3413
    %v3415 = vpop.f32.mrb[0].mxu0
    %v3416 = vpop.f32.mrb[0].mxu0
    %v3417 = vadd.f32 %v541, %v3416
    %v3418 = vpop.f32.mrb[0].mxu0
    %3419 = vmatprep.mubr.bf16.mxu0 0
    %3420 = vmatmul.mubr.bf16.gmra.mrb[0].mxu0 %v2131
    %v3421 = vpop.f32.mrb[0].mxu0
    %v3422 = vadd.f32 %v541, %v3421
    %v3423 = vpop.f32.mrb[0].mxu0
    %v3424 = vpop.f32.mrb[0].mxu0
    %v3425 = vadd.f32 %v541, %v3424
    %v3426 = vpop.f32.mrb[0].mxu0
    %3427 = vmatprep.mubr.bf16.mxu0 0
    %3428 = vmatmul.mubr.bf16.gmra.mrb[0].mxu0 %v2134
    %v3429 = vpop.f32.mrb[0].mxu0
    %v3430 = vadd.f32 %v541, %v3429
    %v3431 = vpop.f32.mrb[0].mxu0
    %v3432 = vpop.f32.mrb[0].mxu0
    %v3433 = vadd.f32 %v541, %v3432
    %v3434 = vpop.f32.mrb[0].mxu0
    %3435 = vmatprep.mubr.bf16.mxu0 0
    %3436 = vmatmul.mubr.bf16.gmra.mrb[0].mxu0 %v2137
    %v3437 = vpop.f32.mrb[0].mxu0
    %v3438 = vadd.f32 %v541, %v3437
    %v3439 = vpop.f32.mrb[0].mxu0
    %v3440 = vpop.f32.mrb[0].mxu0
    %v3441 = vadd.f32 %v541, %v3440
    %v3442 = vpop.f32.mrb[0].mxu0
    %3443 = vmatprep.mubr.bf16.mxu0 0
    %3444 = vmatmul.mubr.bf16.gmra.mrb[0].mxu0 %v2140
    %v3445 = vpop.f32.mrb[0].mxu0
    %v3446 = vadd.f32 %v541, %v3445
    %v3447 = vpop.f32.mrb[0].mxu0
    %v3448 = vpop.f32.mrb[0].mxu0
    %v3449 = vadd.f32 %v541, %v3448
    %v3450 = vpop.f32.mrb[0].mxu0
    %3451 = vmatprep.mubr.bf16.mxu0 0
    %3452 = vmatmul.mubr.bf16.gmra.mrb[0].mxu0 %v2143
    %v3453 = vpop.f32.mrb[0].mxu0
    %v3454 = vadd.f32 %v541, %v3453
    %v3455 = vpop.f32.mrb[0].mxu0
    %v3456 = vpop.f32.mrb[0].mxu0
    %v3457 = vadd.f32 %v541, %v3456
    %v3458 = vpop.f32.mrb[0].mxu0
    %3459 = vmatprep.mubr.bf16.mxu0 0
    %3460 = vmatmul.mubr.bf16.gmra.mrb[0].mxu0 %v2146
    %v3461 = vpop.f32.mrb[0].mxu0
    %v3462 = vadd.f32 %v541, %v3461
    %v3463 = vpop.f32.mrb[0].mxu0
    %v3464 = vpop.f32.mrb[0].mxu0
    %v3465 = vadd.f32 %v541, %v3464
    %v3466 = vpop.f32.mrb[0].mxu0
    %3467 = vmatprep.mubr.bf16.mxu0 0
    %3468 = vmatmul.mubr.bf16.gmra.mrb[0].mxu0 %v2149
    %v3469 = vpop.f32.mrb[0].mxu0
    %v3470 = vadd.f32 %v541, %v3469
    %v3471 = vpop.f32.mrb[0].mxu0
    %v3472 = vpop.f32.mrb[0].mxu0
    %v3473 = vadd.f32 %v541, %v3472
    %v3474 = vpop.f32.mrb[0].mxu0
    %3475 = vmatprep.mubr.bf16.mxu0 0
    %3476 = vmatmul.mubr.bf16.gmra.mrb[0].mxu0 %v2152
    %v3477 = vpop.f32.mrb[0].mxu0
    %v3478 = vadd.f32 %v541, %v3477
    %v3479 = vpop.f32.mrb[0].mxu0
    %v3480 = vpop.f32.mrb[0].mxu0
    %v3481 = vadd.f32 %v541, %v3480
    %v3482 = vpop.f32.mrb[0].mxu0
    %3483 = vmatprep.mubr.bf16.mxu0 0
    %3484 = vmatmul.mubr.bf16.gmra.mrb[0].mxu0 %v2155
    %v3485 = vpop.f32.mrb[0].mxu0
    %v3486 = vadd.f32 %v541, %v3485
    %v3487 = vpop.f32.mrb[0].mxu0
    %v3488 = vpop.f32.mrb[0].mxu0
    %v3489 = vadd.f32 %v541, %v3488
    %v3490 = vpop.f32.mrb[0].mxu0
    %3491 = vmatprep.mubr.bf16.mxu0 0
    %3492 = vmatmul.mubr.bf16.gmra.mrb[0].mxu0 %v2158
    %v3493 = vpop.f32.mrb[0].mxu0
    %v3494 = vadd.f32 %v541, %v3493
    %v3495 = vpop.f32.mrb[0].mxu0
    %v3496 = vpop.f32.mrb[0].mxu0
    %v3497 = vadd.f32 %v541, %v3496
    %v3498 = vpop.f32.mrb[0].mxu0
    %3499 = vmatprep.mubr.bf16.mxu0 0
    %3500 = vmatmul.mubr.bf16.gmra.mrb[0].mxu0 %v2161
    %v3501 = vpop.f32.mrb[0].mxu0
    %v3502 = vadd.f32 %v541, %v3501
    %v3503 = vpop.f32.mrb[0].mxu0
    %v3504 = vpop.f32.mrb[0].mxu0
    %v3505 = vadd.f32 %v541, %v3504
    %v3506 = vpop.f32.mrb[0].mxu0
    %3507 = vmatprep.mubr.bf16.mxu0 0
    %3508 = vmatmul.mubr.bf16.gmra.mrb[0].mxu0 %v2164
    %v3509 = vpop.f32.mrb[0].mxu0
    %v3510 = vadd.f32 %v541, %v3509
    %v3511 = vpop.f32.mrb[0].mxu0
    %v3512 = vpop.f32.mrb[0].mxu0
    %v3513 = vadd.f32 %v541, %v3512
    %v3514 = vpop.f32.mrb[0].mxu0
    %3515 = vmatprep.mubr.bf16.mxu0 0
    %3516 = vmatmul.mubr.bf16.gmra.mrb[0].mxu0 %v2167
    %v3517 = vpop.f32.mrb[0].mxu0
    %v3518 = vadd.f32 %v541, %v3517
    %v3519 = vpop.f32.mrb[0].mxu0
    %v3520 = vpop.f32.mrb[0].mxu0
    %v3521 = vadd.f32 %v541, %v3520
    %v3522 = vpop.f32.mrb[0].mxu0
    %3523 = vmatprep.mubr.bf16.mxu0 0
    %3524 = vmatmul.mubr.bf16.gmra.mrb[0].mxu0 %v2170
    %v3525 = vpop.f32.mrb[0].mxu0
    %v3526 = vadd.f32 %v541, %v3525
    %v3527 = vpop.f32.mrb[0].mxu0
    %v3528 = vpop.f32.mrb[0].mxu0
    %v3529 = vadd.f32 %v541, %v3528
    %v3530 = vpop.f32.mrb[0].mxu0
    %3531 = vmatprep.mubr.bf16.mxu0 0
    %3532 = vmatmul.mubr.bf16.gmra.mrb[0].mxu0 %v2173
    %v3533 = vpop.f32.mrb[0].mxu0
    %v3534 = vadd.f32 %v541, %v3533
    %v3535 = vpop.f32.mrb[0].mxu0
    %v3536 = vpop.f32.mrb[0].mxu0
    %v3537 = vadd.f32 %v541, %v3536
    %v3538 = vpop.f32.mrb[0].mxu0
    %3539 = vmatprep.mubr.bf16.mxu0 0
    %3540 = vmatmul.mubr.bf16.gmra.mrb[0].mxu0 %v2176
    %v3541 = vpop.f32.mrb[0].mxu0
    %v3542 = vadd.f32 %v541, %v3541
    %v3543 = vpop.f32.mrb[0].mxu0
    %v3544 = vpop.f32.mrb[0].mxu0
    %v3545 = vadd.f32 %v541, %v3544
    %v3546 = vpop.f32.mrb[0].mxu0
    %3547 = vmatprep.mubr.bf16.mxu0 0
    %3548 = vmatmul.mubr.bf16.gmra.mrb[0].mxu0 %v2179
    %v3549 = vpop.f32.mrb[0].mxu0
    %v3550 = vadd.f32 %v541, %v3549
    %v3551 = vpop.f32.mrb[0].mxu0
    %v3552 = vpop.f32.mrb[0].mxu0
    %v3553 = vadd.f32 %v541, %v3552
    %v3554 = vpop.f32.mrb[0].mxu0
    %3555 = vmatprep.mubr.bf16.mxu0 0
    %3556 = vmatmul.mubr.bf16.gmra.mrb[0].mxu0 %v2182
    %v3557 = vpop.f32.mrb[0].mxu0
    %v3558 = vadd.f32 %v541, %v3557
    %v3559 = vpop.f32.mrb[0].mxu0
    %v3560 = vpop.f32.mrb[0].mxu0
    %v3561 = vadd.f32 %v541, %v3560
    %v3562 = vpop.f32.mrb[0].mxu0
    %3563 = vmatprep.mubr.bf16.mxu0 0
    %3564 = vmatmul.mubr.bf16.gmra.mrb[0].mxu0 %v2185
    %v3565 = vpop.f32.mrb[0].mxu0
    %v3566 = vadd.f32 %v541, %v3565
    %v3567 = vpop.f32.mrb[0].mxu0
    %v3568 = vpop.f32.mrb[0].mxu0
    %v3569 = vadd.f32 %v541, %v3568
    %v3570 = vpop.f32.mrb[0].mxu0
    %3571 = vmatprep.mubr.bf16.mxu0 0
    %3572 = vmatmul.mubr.bf16.gmra.mrb[0].mxu0 %v2188
    %v3573 = vpop.f32.mrb[0].mxu0
    %v3574 = vadd.f32 %v541, %v3573
    %v3575 = vpop.f32.mrb[0].mxu0
    %v3576 = vpop.f32.mrb[0].mxu0
    %v3577 = vadd.f32 %v541, %v3576
    %v3578 = vpop.f32.mrb[0].mxu0
    %3579 = vmatprep.mubr.bf16.mxu0 0
    %3580 = vmatmul.mubr.bf16.gmra.mrb[0].mxu0 %v2191
    %v3581 = vpop.f32.mrb[0].mxu0
    %v3582 = vadd.f32 %v541, %v3581
    %v3583 = vpop.f32.mrb[0].mxu0
    %v3584 = vpop.f32.mrb[0].mxu0
    %v3585 = vadd.f32 %v541, %v3584
    %v3586 = vpop.f32.mrb[0].mxu0
    %3587 = vmatprep.mubr.bf16.mxu0 0
    %3588 = vmatmul.mubr.bf16.gmra.mrb[0].mxu0 %v2194
    %v3589 = vpop.f32.mrb[0].mxu0
    %v3590 = vadd.f32 %v541, %v3589
    %v3591 = vpop.f32.mrb[0].mxu0
    %v3592 = vpop.f32.mrb[0].mxu0
    %v3593 = vadd.f32 %v541, %v3592
    %v3594 = vpop.f32.mrb[0].mxu0
    %3595 = vmatprep.mubr.bf16.mxu0 0
    %3596 = vmatmul.mubr.bf16.gmra.mrb[0].mxu0 %v2197
    %v3597 = vpop.f32.mrb[0].mxu0
    %v3598 = vadd.f32 %v541, %v3597
    %v3599 = vpop.f32.mrb[0].mxu0
    %v3600 = vpop.f32.mrb[0].mxu0
    %v3601 = vadd.f32 %v541, %v3600
    %v3602 = vpop.f32.mrb[0].mxu0
    %3603 = vmatprep.mubr.bf16.mxu0 0
    %3604 = vmatmul.mubr.bf16.gmra.mrb[0].mxu0 %v2200
    %v3605 = vpop.f32.mrb[0].mxu0
    %v3606 = vadd.f32 %v541, %v3605
    %v3607 = vpop.f32.mrb[0].mxu0
    %v3608 = vpop.f32.mrb[0].mxu0
    %v3609 = vadd.f32 %v541, %v3608
    %v3610 = vpop.f32.mrb[0].mxu0
    %3611 = vmatprep.mubr.bf16.mxu0 0
    %3612 = vmatmul.mubr.bf16.gmra.mrb[0].mxu0 %v2203
    %v3613 = vpop.f32.mrb[0].mxu0
    %v3614 = vadd.f32 %v541, %v3613
    %v3615 = vpop.f32.mrb[0].mxu0
    %v3616 = vpop.f32.mrb[0].mxu0
    %v3617 = vadd.f32 %v541, %v3616
    %v3618 = vpop.f32.mrb[0].mxu0
    %3619 = vmatprep.mubr.bf16.mxu0 0
    %3620 = vmatmul.mubr.bf16.gmra.mrb[0].mxu0 %v2206
    %v3621 = vpop.f32.mrb[0].mxu0
    %v3622 = vadd.f32 %v541, %v3621
    %v3623 = vpop.f32.mrb[0].mxu0
    %v3624 = vpop.f32.mrb[0].mxu0
    %v3625 = vadd.f32 %v541, %v3624
    %v3626 = vpop.f32.mrb[0].mxu0
    %3627 = vmatprep.mubr.bf16.mxu0 0
    %3628 = vmatmul.mubr.bf16.gmra.mrb[0].mxu0 %v2209
    %v3629 = vpop.f32.mrb[0].mxu0
    %v3630 = vadd.f32 %v541, %v3629
    %v3631 = vpop.f32.mrb[0].mxu0
    %v3632 = vpop.f32.mrb[0].mxu0
    %v3633 = vadd.f32 %v541, %v3632
    %v3634 = vpop.f32.mrb[0].mxu0
    %3635 = vmatprep.mubr.bf16.mxu0 0
    %3636 = vmatmul.mubr.bf16.gmra.mrb[0].mxu0 %v2212
    %v3637 = vpop.f32.mrb[0].mxu0
    %v3638 = vadd.f32 %v541, %v3637
    %v3639 = vpop.f32.mrb[0].mxu0
    %v3640 = vpop.f32.mrb[0].mxu0
    %v3641 = vadd.f32 %v541, %v3640
    %v3642 = vpop.f32.mrb[0].mxu0
    %3643 = vmatprep.mubr.bf16.mxu0 0
    %3644 = vmatmul.mubr.bf16.gmra.mrb[0].mxu0 %v2215
    %v3645 = vpop.f32.mrb[0].mxu0
    %v3646 = vadd.f32 %v541, %v3645
    %v3647 = vpop.f32.mrb[0].mxu0
    %v3648 = vpop.f32.mrb[0].mxu0
    %v3649 = vadd.f32 %v541, %v3648
    %v3650 = vpop.f32.mrb[0].mxu0
    %3651 = vmatprep.mubr.bf16.mxu0 0
    %3652 = vmatmul.mubr.bf16.gmra.mrb[0].mxu0 %v2218
    %v3653 = vpop.f32.mrb[0].mxu0
    %v3654 = vadd.f32 %v541, %v3653
    %v3655 = vpop.f32.mrb[0].mxu0
    %v3656 = vpop.f32.mrb[0].mxu0
    %v3657 = vadd.f32 %v541, %v3656
    %v3658 = vpop.f32.mrb[0].mxu0
    %3659 = vmatprep.mubr.bf16.mxu0 0
    %3660 = vmatmul.mubr.bf16.gmra.mrb[0].mxu0 %v2221
    %v3661 = vpop.f32.mrb[0].mxu0
    %v3662 = vadd.f32 %v541, %v3661
    %v3663 = vpop.f32.mrb[0].mxu0
    %v3664 = vpop.f32.mrb[0].mxu0
    %v3665 = vadd.f32 %v541, %v3664
    %v3666 = vpop.f32.mrb[0].mxu0
    %3667 = vmatprep.mubr.bf16.mxu0 0
    %3668 = vmatmul.mubr.bf16.gmra.mrb[0].mxu0 %v2224
    %v3669 = vpop.f32.mrb[0].mxu0
    %v3670 = vadd.f32 %v541, %v3669
    %v3671 = vpop.f32.mrb[0].mxu0
    %v3672 = vpop.f32.mrb[0].mxu0
    %v3673 = vadd.f32 %v541, %v3672
    %v3674 = vpop.f32.mrb[0].mxu0
    %3675 = vmatprep.mubr.bf16.mxu0 0
    %3676 = vmatmul.mubr.bf16.gmra.mrb[0].mxu0 %v2227
    %v3677 = vpop.f32.mrb[0].mxu0
    %v3678 = vadd.f32 %v541, %v3677
    %v3679 = vpop.f32.mrb[0].mxu0
    %v3680 = vpop.f32.mrb[0].mxu0
    %v3681 = vadd.f32 %v541, %v3680
    %v3682 = vpop.f32.mrb[0].mxu0
    %3683 = vmatprep.mubr.bf16.mxu0 0
    %3684 = vmatmul.mubr.bf16.gmra.mrb[0].mxu0 %v2230
    %v3685 = vpop.f32.mrb[0].mxu0
    %v3686 = vadd.f32 %v541, %v3685
    %v3687 = vpop.f32.mrb[0].mxu0
    %v3688 = vpop.f32.mrb[0].mxu0
    %v3689 = vadd.f32 %v541, %v3688
    %v3690 = vpop.f32.mrb[0].mxu0
    %3691 = vmatprep.mubr.bf16.mxu0 0
    %3692 = vmatmul.mubr.bf16.gmra.mrb[0].mxu0 %v2233
    %v3693 = vpop.f32.mrb[0].mxu0
    %v3694 = vadd.f32 %v541, %v3693
    %v3695 = vpop.f32.mrb[0].mxu0
    %v3696 = vpop.f32.mrb[0].mxu0
    %v3697 = vadd.f32 %v541, %v3696
    %v3698 = vpop.f32.mrb[0].mxu0
    %3699 = vmatprep.mubr.bf16.mxu0 0
    %3700 = vmatmul.mubr.bf16.gmra.mrb[0].mxu0 %v2236
    %v3701 = vpop.f32.mrb[0].mxu0
    %v3702 = vadd.f32 %v541, %v3701
    %v3703 = vpop.f32.mrb[0].mxu0
    %v3704 = vpop.f32.mrb[0].mxu0
    %v3705 = vadd.f32 %v541, %v3704
    %v3706 = vpop.f32.mrb[0].mxu0
    %3707 = vmatprep.mubr.bf16.mxu0 0
    %3708 = vmatmul.mubr.bf16.gmra.mrb[0].mxu0 %v2239
    %v3709 = vpop.f32.mrb[0].mxu0
    %v3710 = vadd.f32 %v541, %v3709
    %v3711 = vpop.f32.mrb[0].mxu0
    %v3712 = vpop.f32.mrb[0].mxu0
    %v3713 = vadd.f32 %v541, %v3712
    %v3714 = vpop.f32.mrb[0].mxu0
    %3715 = vmatprep.mubr.bf16.mxu0 0
    %3716 = vmatmul.mubr.bf16.gmra.mrb[0].mxu0 %v2242
    %v3717 = vpop.f32.mrb[0].mxu0
    %v3718 = vadd.f32 %v541, %v3717
    %v3719 = vpop.f32.mrb[0].mxu0
    %v3720 = vpop.f32.mrb[0].mxu0
    %v3721 = vadd.f32 %v541, %v3720
    %v3722 = vpop.f32.mrb[0].mxu0
    %3723 = vmatprep.mubr.bf16.mxu0 0
    %3724 = vmatmul.mubr.bf16.gmra.mrb[0].mxu0 %v2245
    %v3725 = vpop.f32.mrb[0].mxu0
    %v3726 = vadd.f32 %v541, %v3725
    %v3727 = vpop.f32.mrb[0].mxu0
    %v3728 = vpop.f32.mrb[0].mxu0
    %v3729 = vadd.f32 %v541, %v3728
    %v3730 = vpop.f32.mrb[0].mxu0
    %3731 = vmatprep.mubr.bf16.mxu0 0
    %3732 = vmatmul.mubr.bf16.gmra.mrb[0].mxu0 %v2248
    %v3733 = vpop.f32.mrb[0].mxu0
    %v3734 = vadd.f32 %v541, %v3733
    %v3735 = vpop.f32.mrb[0].mxu0
    %v3736 = vpop.f32.mrb[0].mxu0
    %v3737 = vadd.f32 %v541, %v3736
    %v3738 = vpop.f32.mrb[0].mxu0
    %3739 = vmatprep.mubr.bf16.mxu0 0
    %3740 = vmatmul.mubr.bf16.gmra.mrb[0].mxu0 %v2251
    %v3741 = vpop.f32.mrb[0].mxu0
    %v3742 = vadd.f32 %v541, %v3741
    %v3743 = vpop.f32.mrb[0].mxu0
    %v3744 = vpop.f32.mrb[0].mxu0
    %v3745 = vadd.f32 %v541, %v3744
    %v3746 = vpop.f32.mrb[0].mxu0
    %3747 = vmatprep.mubr.bf16.mxu0 0
    %3748 = vmatmul.mubr.bf16.gmra.mrb[0].mxu0 %v2254
    %v3749 = vpop.f32.mrb[0].mxu0
    %v3750 = vadd.f32 %v541, %v3749
    %v3751 = vpop.f32.mrb[0].mxu0
    %v3752 = vpop.f32.mrb[0].mxu0
    %v3753 = vadd.f32 %v541, %v3752
    %v3754 = vpop.f32.mrb[0].mxu0
    %3755 = vmatprep.mubr.bf16.mxu0 0
    %3756 = vmatmul.mubr.bf16.gmra.mrb[0].mxu0 %v2257
    %v3757 = vpop.f32.mrb[0].mxu0
    %v3758 = vadd.f32 %v541, %v3757
    %v3759 = vpop.f32.mrb[0].mxu0
    %v3760 = vpop.f32.mrb[0].mxu0
    %v3761 = vadd.f32 %v541, %v3760
    %v3762 = vpop.f32.mrb[0].mxu0
    %3763 = vmatprep.mubr.bf16.mxu0 0
    %3764 = vmatmul.mubr.bf16.gmra.mrb[0].mxu0 %v2260
    %v3765 = vpop.f32.mrb[0].mxu0
    %v3766 = vadd.f32 %v541, %v3765
    %v3767 = vpop.f32.mrb[0].mxu0
    %v3768 = vpop.f32.mrb[0].mxu0
    %v3769 = vadd.f32 %v541, %v3768
    %v3770 = vpop.f32.mrb[0].mxu0
    %3771 = vmatprep.mubr.bf16.mxu0 0
    %3772 = vmatmul.mubr.bf16.gmra.mrb[0].mxu0 %v2263
    %v3773 = vpop.f32.mrb[0].mxu0
    %v3774 = vadd.f32 %v541, %v3773
    %v3775 = vpop.f32.mrb[0].mxu0
    %v3776 = vpop.f32.mrb[0].mxu0
    %v3777 = vadd.f32 %v541, %v3776
    %v3778 = vpop.f32.mrb[0].mxu0
    %3779 = vmatprep.mubr.bf16.mxu0 0
    %3780 = vmatmul.mubr.bf16.gmra.mrb[0].mxu0 %v2266
    %v3781 = vpop.f32.mrb[0].mxu0
    %v3782 = vadd.f32 %v541, %v3781
    %v3783 = vpop.f32.mrb[0].mxu0
    %v3784 = vpop.f32.mrb[0].mxu0
    %v3785 = vadd.f32 %v541, %v3784
    %v3786 = vpop.f32.mrb[0].mxu0
    %3787 = vmatprep.mubr.bf16.mxu0 0
    %3788 = vmatmul.mubr.bf16.gmra.mrb[0].mxu0 %v2269
    %v3789 = vpop.f32.mrb[0].mxu0
    %v3790 = vadd.f32 %v541, %v3789
    %v3791 = vpop.f32.mrb[0].mxu0
    %v3792 = vpop.f32.mrb[0].mxu0
    %v3793 = vadd.f32 %v541, %v3792
    %v3794 = vpop.f32.mrb[0].mxu0
    %3795 = vmatprep.mubr.bf16.mxu0 0
    %3796 = vmatmul.mubr.bf16.gmra.mrb[0].mxu0 %v2272
    %v3797 = vpop.f32.mrb[0].mxu0
    %v3798 = vadd.f32 %v541, %v3797
    %v3799 = vpop.f32.mrb[0].mxu0
    %v3800 = vpop.f32.mrb[0].mxu0
    %v3801 = vadd.f32 %v541, %v3800
    %v3802 = vpop.f32.mrb[0].mxu0
    %3803 = vmatprep.mubr.bf16.mxu0 0
    %3804 = vmatmul.mubr.bf16.gmra.mrb[0].mxu0 %v2275
    %v3805 = vpop.f32.mrb[0].mxu0
    %v3806 = vadd.f32 %v541, %v3805
    %v3807 = vpop.f32.mrb[0].mxu0
    %v3808 = vpop.f32.mrb[0].mxu0
    %v3809 = vadd.f32 %v541, %v3808
    %v3810 = vpop.f32.mrb[0].mxu0
    %3811 = vmatprep.mubr.bf16.mxu0 0
    %3812 = vmatmul.mubr.bf16.gmra.mrb[0].mxu0 %v2278
    %v3813 = vpop.f32.mrb[0].mxu0
    %v3814 = vadd.f32 %v541, %v3813
    %v3815 = vpop.f32.mrb[0].mxu0
    %v3816 = vpop.f32.mrb[0].mxu0
    %v3817 = vadd.f32 %v541, %v3816
    %v3818 = vpop.f32.mrb[0].mxu0
    %3819 = vmatprep.mubr.bf16.mxu0 0
    %3820 = vmatmul.mubr.bf16.gmra.mrb[0].mxu0 %v2281
    %v3821 = vpop.f32.mrb[0].mxu0
    %v3822 = vadd.f32 %v541, %v3821
    %v3823 = vpop.f32.mrb[0].mxu0
    %v3824 = vpop.f32.mrb[0].mxu0
    %v3825 = vadd.f32 %v541, %v3824
    %v3826 = vpop.f32.mrb[0].mxu0
    %3827 = vmatprep.mubr.bf16.mxu0 0
    %3828 = vmatmul.mubr.bf16.gmra.mrb[0].mxu0 %v2284
    %v3829 = vpop.f32.mrb[0].mxu0
    %v3830 = vadd.f32 %v541, %v3829
    %v3831 = vpop.f32.mrb[0].mxu0
    %v3832 = vpop.f32.mrb[0].mxu0
    %v3833 = vadd.f32 %v541, %v3832
    %v3834 = vpop.f32.mrb[0].mxu0
    %3835 = vmatprep.mubr.bf16.mxu0 0
    %3836 = vmatmul.mubr.bf16.gmra.mrb[0].mxu0 %v2287
    %v3837 = vpop.f32.mrb[0].mxu0
    %v3838 = vadd.f32 %v541, %v3837
    %v3839 = vpop.f32.mrb[0].mxu0
    %v3840 = vpop.f32.mrb[0].mxu0
    %v3841 = vadd.f32 %v541, %v3840
    %v3842 = vpop.f32.mrb[0].mxu0
    %3843 = vmatprep.mubr.bf16.mxu0 0
    %3844 = vmatmul.mubr.bf16.gmra.mrb[0].mxu0 %v2290
    %v3845 = vpop.f32.mrb[0].mxu0
    %v3846 = vadd.f32 %v541, %v3845
    %v3847 = vpop.f32.mrb[0].mxu0
    %v3848 = vpop.f32.mrb[0].mxu0
    %v3849 = vadd.f32 %v541, %v3848
    %v3850 = vpop.f32.mrb[0].mxu0
    %3851 = vmatprep.mubr.bf16.mxu0 0
    %3852 = vmatmul.mubr.bf16.gmra.mrb[0].mxu0 %v2293
    %v3853 = vpop.f32.mrb[0].mxu0
    %v3854 = vadd.f32 %v541, %v3853
    %v3855 = vpop.f32.mrb[0].mxu0
    %v3856 = vpop.f32.mrb[0].mxu0
    %v3857 = vadd.f32 %v541, %v3856
    %v3858 = vpop.f32.mrb[0].mxu0
    %3859 = vmatprep.mubr.bf16.mxu0 0
    %3860 = vmatmul.mubr.bf16.gmra.mrb[0].mxu0 %v2296
    %v3861 = vpop.f32.mrb[0].mxu0
    %v3862 = vadd.f32 %v541, %v3861
    %v3863 = vpop.f32.mrb[0].mxu0
    %v3864 = vpop.f32.mrb[0].mxu0
    %v3865 = vadd.f32 %v541, %v3864
    %v3866 = vpop.f32.mrb[0].mxu0
    %3867 = vmatprep.mubr.bf16.mxu0 0
    %3868 = vmatmul.mubr.bf16.gmra.mrb[0].mxu0 %v2299
    %v3869 = vpop.f32.mrb[0].mxu0
    %v3870 = vadd.f32 %v541, %v3869
    %v3871 = vpop.f32.mrb[0].mxu0
    %v3872 = vpop.f32.mrb[0].mxu0
    %v3873 = vadd.f32 %v541, %v3872
    %v3874 = vpop.f32.mrb[0].mxu0
    %3875 = vmatprep.mubr.bf16.mxu0 0
    %3876 = vmatmul.mubr.bf16.gmra.mrb[0].mxu0 %v2302
    %v3877 = vpop.f32.mrb[0].mxu0
    %v3878 = vadd.f32 %v541, %v3877
    %v3879 = vpop.f32.mrb[0].mxu0
    %v3880 = vpop.f32.mrb[0].mxu0
    %v3881 = vadd.f32 %v541, %v3880
    %v3882 = vpop.f32.mrb[0].mxu0
    %3883 = vmatprep.mubr.bf16.mxu0 0
    %3884 = vmatmul.mubr.bf16.gmra.mrb[0].mxu0 %v2305
    %v3885 = vpop.f32.mrb[0].mxu0
    %v3886 = vadd.f32 %v541, %v3885
    %v3887 = vpop.f32.mrb[0].mxu0
    %v3888 = vpop.f32.mrb[0].mxu0
    %v3889 = vadd.f32 %v541, %v3888
    %v3890 = vpop.f32.mrb[0].mxu0
    %3891 = vmatprep.mubr.bf16.mxu0 0
    %3892 = vmatmul.mubr.bf16.gmra.mrb[0].mxu0 %v2308
    %v3893 = vpop.f32.mrb[0].mxu0
    %v3894 = vadd.f32 %v541, %v3893
    %v3895 = vpop.f32.mrb[0].mxu0
    %v3896 = vpop.f32.mrb[0].mxu0
    %v3897 = vadd.f32 %v541, %v3896
    %v3898 = vpop.f32.mrb[0].mxu0
    %3899 = vmatprep.mubr.bf16.mxu0 0
    %3900 = vmatmul.mubr.bf16.gmra.mrb[0].mxu0 %v2311
    %v3901 = vpop.f32.mrb[0].mxu0
    %v3902 = vadd.f32 %v541, %v3901
    %v3903 = vpop.f32.mrb[0].mxu0
    %v3904 = vpop.f32.mrb[0].mxu0
    %v3905 = vadd.f32 %v541, %v3904
    %v3906 = vpop.f32.mrb[0].mxu0
    %3907 = vmatprep.mubr.bf16.mxu0 0
    %3908 = vmatmul.mubr.bf16.gmra.mrb[0].mxu0 %v2314
    %v3909 = vpop.f32.mrb[0].mxu0
    %v3910 = vadd.f32 %v541, %v3909
    %v3911 = vpop.f32.mrb[0].mxu0
    %v3912 = vpop.f32.mrb[0].mxu0
    %v3913 = vadd.f32 %v541, %v3912
    %v3914 = vpop.f32.mrb[0].mxu0
    %3915 = vmatprep.mubr.bf16.mxu0 0
    %3916 = vmatmul.mubr.bf16.gmra.mrb[0].mxu0 %v2317
    %v3917 = vpop.f32.mrb[0].mxu0
    %v3918 = vadd.f32 %v541, %v3917
    %v3919 = vpop.f32.mrb[0].mxu0
    %v3920 = vpop.f32.mrb[0].mxu0
    %v3921 = vadd.f32 %v541, %v3920
    %v3922 = vpop.f32.mrb[0].mxu0
    %3923 = vmatprep.mubr.bf16.mxu0 0
    %3924 = vmatmul.mubr.bf16.gmra.mrb[0].mxu0 %v2320
    %v3925 = vpop.f32.mrb[0].mxu0
    %v3926 = vadd.f32 %v541, %v3925
    %v3927 = vpop.f32.mrb[0].mxu0
    %v3928 = vpop.f32.mrb[0].mxu0
    %v3929 = vadd.f32 %v541, %v3928
    %v3930 = vpop.f32.mrb[0].mxu0
    %3931 = vmatprep.mubr.bf16.mxu0 0
    %3932 = vmatmul.mubr.bf16.gmra.mrb[0].mxu0 %v2323
    %v3933 = vpop.f32.mrb[0].mxu0
    %v3934 = vadd.f32 %v541, %v3933
    %v3935 = vpop.f32.mrb[0].mxu0
    %v3936 = vpop.f32.mrb[0].mxu0
    %v3937 = vadd.f32 %v541, %v3936
    %v3938 = vpop.f32.mrb[0].mxu0
    %3939 = vmatprep.mubr.bf16.mxu0 0
    %3940 = vmatmul.mubr.bf16.gmra.mrb[0].mxu0 %v2326
    %v3941 = vpop.f32.mrb[0].mxu0
    %v3942 = vadd.f32 %v541, %v3941
    %v3943 = vpop.f32.mrb[0].mxu0
    %v3944 = vpop.f32.mrb[0].mxu0
    %v3945 = vadd.f32 %v541, %v3944
    %v3946 = vpop.f32.mrb[0].mxu0
    %3947 = vmatprep.mubr.bf16.mxu0 0
    %3948 = vmatmul.mubr.bf16.gmra.mrb[0].mxu0 %v2329
    %v3949 = vpop.f32.mrb[0].mxu0
    %v3950 = vadd.f32 %v541, %v3949
    %v3951 = vpop.f32.mrb[0].mxu0
    %v3952 = vpop.f32.mrb[0].mxu0
    %v3953 = vadd.f32 %v541, %v3952
    %v3954 = vpop.f32.mrb[0].mxu0
    %3955 = vmatprep.mubr.bf16.mxu0 0
    %3956 = vmatmul.mubr.bf16.gmra.mrb[0].mxu0 %v2332
    %v3957 = vpop.f32.mrb[0].mxu0
    %v3958 = vadd.f32 %v541, %v3957
    %v3959 = vpop.f32.mrb[0].mxu0
    %v3960 = vpop.f32.mrb[0].mxu0
    %v3961 = vadd.f32 %v541, %v3960
    %v3962 = vpop.f32.mrb[0].mxu0
    %3963 = vmatprep.mubr.bf16.mxu0 0
    %3964 = vmatmul.mubr.bf16.gmra.mrb[0].mxu0 %v2335
    %v3965 = vpop.f32.mrb[0].mxu0
    %v3966 = vadd.f32 %v541, %v3965
    %v3967 = vpop.f32.mrb[0].mxu0
    %v3968 = vpop.f32.mrb[0].mxu0
    %v3969 = vadd.f32 %v541, %v3968
    %v3970 = vpop.f32.mrb[0].mxu0
    %3971 = vmatprep.mubr.bf16.mxu0 0
    %3972 = vmatmul.mubr.bf16.gmra.mrb[0].mxu0 %v2338
    %v3973 = vpop.f32.mrb[0].mxu0
    %v3974 = vadd.f32 %v541, %v3973
    %v3975 = vpop.f32.mrb[0].mxu0
    %v3976 = vpop.f32.mrb[0].mxu0
    %v3977 = vadd.f32 %v541, %v3976
    %v3978 = vpop.f32.mrb[0].mxu0
    %3979 = vmatprep.mubr.bf16.mxu0 0
    %3980 = vmatmul.mubr.bf16.gmra.mrb[0].mxu0 %v2341
    %v3981 = vpop.f32.mrb[0].mxu0
    %v3982 = vadd.f32 %v541, %v3981
    %v3983 = vpop.f32.mrb[0].mxu0
    %v3984 = vpop.f32.mrb[0].mxu0
    %v3985 = vadd.f32 %v541, %v3984
    %v3986 = vpop.f32.mrb[0].mxu0
    %3987 = vmatprep.mubr.bf16.mxu0 0
    %3988 = vmatmul.mubr.bf16.gmra.mrb[0].mxu0 %v2344
    %v3989 = vpop.f32.mrb[0].mxu0
    %v3990 = vadd.f32 %v541, %v3989
    %v3991 = vpop.f32.mrb[0].mxu0
    %v3992 = vpop.f32.mrb[0].mxu0
    %v3993 = vadd.f32 %v541, %v3992
    %v3994 = vpop.f32.mrb[0].mxu0
    %3995 = vmatprep.mubr.bf16.mxu0 0
    %3996 = vmatmul.mubr.bf16.gmra.mrb[0].mxu0 %v2347
    %v3997 = vpop.f32.mrb[0].mxu0
    %v3998 = vadd.f32 %v541, %v3997
    %v3999 = vpop.f32.mrb[0].mxu0
    %v4000 = vpop.f32.mrb[0].mxu0
    %v4001 = vadd.f32 %v541, %v4000
    %v4002 = vpop.f32.mrb[0].mxu0
    %4003 = vmatprep.mubr.bf16.mxu0 0
    %4004 = vmatmul.mubr.bf16.gmra.mrb[0].mxu0 %v2350
    %v4005 = vpop.f32.mrb[0].mxu0
    %v4006 = vadd.f32 %v541, %v4005
    %v4007 = vpop.f32.mrb[0].mxu0
    %v4008 = vpop.f32.mrb[0].mxu0
    %v4009 = vadd.f32 %v541, %v4008
    %v4010 = vpop.f32.mrb[0].mxu0
    %4011 = vmatprep.mubr.bf16.mxu0 0
    %4012 = vmatmul.mubr.bf16.gmra.mrb[0].mxu0 %v2353
    %v4013 = vpop.f32.mrb[0].mxu0
    %v4014 = vadd.f32 %v541, %v4013
    %v4015 = vpop.f32.mrb[0].mxu0
    %v4016 = vpop.f32.mrb[0].mxu0
    %v4017 = vadd.f32 %v541, %v4016
    %v4018 = vpop.f32.mrb[0].mxu0
    %4019 = vmatprep.mubr.bf16.mxu0 0
    %4020 = vmatmul.mubr.bf16.gmra.mrb[0].mxu0 %v2356
    %v4021 = vpop.f32.mrb[0].mxu0
    %v4022 = vadd.f32 %v541, %v4021
    %v4023 = vpop.f32.mrb[0].mxu0
    %v4024 = vpop.f32.mrb[0].mxu0
    %v4025 = vadd.f32 %v541, %v4024
    %v4026 = vpop.f32.mrb[0].mxu0
    %4027 = vmatprep.mubr.bf16.mxu0 0
    %4028 = vmatmul.mubr.bf16.gmra.mrb[0].mxu0 %v2359
    %v4029 = vpop.f32.mrb[0].mxu0
    %v4030 = vadd.f32 %v541, %v4029
    %v4031 = vpop.f32.mrb[0].mxu0
    %v4032 = vpop.f32.mrb[0].mxu0
    %v4033 = vadd.f32 %v541, %v4032
    %v4034 = vpop.f32.mrb[0].mxu0
    %4035 = vmatprep.mubr.bf16.mxu0 0
    %4036 = vmatmul.mubr.bf16.gmra.mrb[0].mxu0 %v2362
    %v4037 = vpop.f32.mrb[0].mxu0
    %v4038 = vadd.f32 %v541, %v4037
    %v4039 = vpop.f32.mrb[0].mxu0
    %v4040 = vpop.f32.mrb[0].mxu0
    %v4041 = vadd.f32 %v541, %v4040
    %v4042 = vpop.f32.mrb[0].mxu0
    %4043 = vmatprep.mubr.bf16.mxu0 0
    %4044 = vmatmul.mubr.bf16.gmra.mrb[0].mxu0 %v2365
    %v4045 = vpop.f32.mrb[0].mxu0
    %v4046 = vadd.f32 %v541, %v4045
    %v4047 = vpop.f32.mrb[0].mxu0
    %v4048 = vpop.f32.mrb[0].mxu0
    %v4049 = vadd.f32 %v541, %v4048
    %v4050 = vpop.f32.mrb[0].mxu0
    %4051 = vmatprep.mubr.bf16.mxu0 0
    %4052 = vmatmul.mubr.bf16.gmra.mrb[0].mxu0 %v2368
    %v4053 = vpop.f32.mrb[0].mxu0
    %v4054 = vadd.f32 %v541, %v4053
    %v4055 = vpop.f32.mrb[0].mxu0
    %v4056 = vpop.f32.mrb[0].mxu0
    %v4057 = vadd.f32 %v541, %v4056
    %v4058 = vpop.f32.mrb[0].mxu0
    %4059 = vmatprep.mubr.bf16.mxu0 0
    %4060 = vmatmul.mubr.bf16.gmra.mrb[0].mxu0 %v2371
    %v4061 = vpop.f32.mrb[0].mxu0
    %v4062 = vadd.f32 %v541, %v4061
    %v4063 = vpop.f32.mrb[0].mxu0
    %v4064 = vpop.f32.mrb[0].mxu0
    %v4065 = vadd.f32 %v541, %v4064
    %v4066 = vpop.f32.mrb[0].mxu0
    %4067 = vmatprep.mubr.bf16.mxu0 0
    %4068 = vmatmul.mubr.bf16.gmra.mrb[0].mxu0 %v2374
    %v4069 = vpop.f32.mrb[0].mxu0
    %v4070 = vadd.f32 %v541, %v4069
    %v4071 = vpop.f32.mrb[0].mxu0
    %v4072 = vpop.f32.mrb[0].mxu0
    %v4073 = vadd.f32 %v541, %v4072
    %v4074 = vpop.f32.mrb[0].mxu0
    %4075 = vmatprep.mubr.bf16.mxu0 0
    %4076 = vmatmul.mubr.bf16.gmra.mrb[0].mxu0 %v2377
    %v4077 = vpop.f32.mrb[0].mxu0
    %v4078 = vadd.f32 %v541, %v4077
    %v4079 = vpop.f32.mrb[0].mxu0
    %v4080 = vpop.f32.mrb[0].mxu0
    %v4081 = vadd.f32 %v541, %v4080
    %v4082 = vpop.f32.mrb[0].mxu0
    %4083 = vmatprep.mubr.bf16.mxu0 0
    %4084 = vmatmul.mubr.bf16.gmra.mrb[0].mxu0 %v2380
    %v4085 = vpop.f32.mrb[0].mxu0
    %v4086 = vadd.f32 %v541, %v4085
    %v4087 = vpop.f32.mrb[0].mxu0
    %v4088 = vpop.f32.mrb[0].mxu0
    %v4089 = vadd.f32 %v541, %v4088
    %v4090 = vpop.f32.mrb[0].mxu0
    %4091 = vmatprep.mubr.bf16.mxu0 0
    %4092 = vmatmul.mubr.bf16.gmra.mrb[0].mxu0 %v2383
    %v4093 = vpop.f32.mrb[0].mxu0
    %v4094 = vadd.f32 %v541, %v4093
    %v4095 = vpop.f32.mrb[0].mxu0
    %v4096 = vpop.f32.mrb[0].mxu0
    %v4097 = vadd.f32 %v541, %v4096
    %v4098 = vpop.f32.mrb[0].mxu0
    %4099 = vmatprep.mubr.bf16.mxu0 0
    %4100 = vmatmul.mubr.bf16.gmra.mrb[0].mxu0 %v2386
    %v4101 = vpop.f32.mrb[0].mxu0
    %v4102 = vadd.f32 %v541, %v4101
    %v4103 = vpop.f32.mrb[0].mxu0
    %v4104 = vpop.f32.mrb[0].mxu0
    %v4105 = vadd.f32 %v541, %v4104
    %v4106 = vpop.f32.mrb[0].mxu0
    %4107 = vmatprep.mubr.bf16.mxu0 0
    %4108 = vmatmul.mubr.bf16.gmra.mrb[0].mxu0 %v2389
    %v4109 = vpop.f32.mrb[0].mxu0
    %v4110 = vadd.f32 %v541, %v4109
    %v4111 = vpop.f32.mrb[0].mxu0
    %v4112 = vpop.f32.mrb[0].mxu0
    %v4113 = vadd.f32 %v541, %v4112
    %v4114 = vpop.f32.mrb[0].mxu0
    %4115 = vmatprep.mubr.bf16.mxu0 0
    %4116 = vmatmul.mubr.bf16.gmra.mrb[0].mxu0 %v2392
    %v4117 = vpop.f32.mrb[0].mxu0
    %v4118 = vadd.f32 %v541, %v4117
    %v4119 = vpop.f32.mrb[0].mxu0
    %v4120 = vpop.f32.mrb[0].mxu0
    %v4121 = vadd.f32 %v541, %v4120
    %v4122 = vpop.f32.mrb[0].mxu0
    %4123 = vmatprep.mubr.bf16.mxu0 0
    %4124 = vmatmul.mubr.bf16.gmra.mrb[0].mxu0 %v2395
    %v4125 = vpop.f32.mrb[0].mxu0
    %v4126 = vadd.f32 %v541, %v4125
    %v4127 = vpop.f32.mrb[0].mxu0
    %v4128 = vpop.f32.mrb[0].mxu0
    %v4129 = vadd.f32 %v541, %v4128
    %v4130 = vpop.f32.mrb[0].mxu0
    %4131 = vmatprep.mubr.bf16.mxu0 0
    %4132 = vmatmul.mubr.bf16.gmra.mrb[0].mxu0 %v2398
    %v4133 = vpop.f32.mrb[0].mxu0
    %v4134 = vadd.f32 %v541, %v4133
    %v4135 = vpop.f32.mrb[0].mxu0
    %v4136 = vpop.f32.mrb[0].mxu0
    %v4137 = vadd.f32 %v541, %v4136
    %v4138 = vpop.f32.mrb[0].mxu0
    %4139 = vmatprep.mubr.bf16.mxu0 0
    %4140 = vmatmul.mubr.bf16.gmra.mrb[0].mxu0 %v2401
    %v4141 = vpop.f32.mrb[0].mxu0
    %v4142 = vadd.f32 %v541, %v4141
    %v4143 = vpop.f32.mrb[0].mxu0
    %v4144 = vpop.f32.mrb[0].mxu0
    %v4145 = vadd.f32 %v541, %v4144
    %v4146 = vpop.f32.mrb[0].mxu0
    %4147 = vmatprep.mubr.bf16.mxu0 0
    %4148 = vmatmul.mubr.bf16.gmra.mrb[0].mxu0 %v2404
    %v4149 = vpop.f32.mrb[0].mxu0
    %v4150 = vadd.f32 %v541, %v4149
    %v4151 = vpop.f32.mrb[0].mxu0
    %v4152 = vpop.f32.mrb[0].mxu0
    %v4153 = vadd.f32 %v541, %v4152
    %v4154 = vpop.f32.mrb[0].mxu0
    %4155 = vmatprep.mubr.bf16.mxu0 0
    %4156 = vmatmul.mubr.bf16.gmra.mrb[0].mxu0 %v2407
    %v4157 = vpop.f32.mrb[0].mxu0
    %v4158 = vadd.f32 %v541, %v4157
    %v4159 = vpop.f32.mrb[0].mxu0
    %v4160 = vpop.f32.mrb[0].mxu0
    %v4161 = vadd.f32 %v541, %v4160
    %v4162 = vpop.f32.mrb[0].mxu0
    %4163 = vmatprep.mubr.bf16.mxu0 0
    %4164 = vmatmul.mubr.bf16.gmra.mrb[0].mxu0 %v2410
    %v4165 = vpop.f32.mrb[0].mxu0
    %v4166 = vadd.f32 %v541, %v4165
    %v4167 = vpop.f32.mrb[0].mxu0
    %v4168 = vpop.f32.mrb[0].mxu0
    %v4169 = vadd.f32 %v541, %v4168
    %v4170 = vpop.f32.mrb[0].mxu0
    %4171 = vmatprep.mubr.bf16.mxu0 0
    %4172 = vmatmul.mubr.bf16.gmra.mrb[0].mxu0 %v2413
    %v4173 = vpop.f32.mrb[0].mxu0
    %v4174 = vadd.f32 %v541, %v4173
    %v4175 = vpop.f32.mrb[0].mxu0
    %v4176 = vpop.f32.mrb[0].mxu0
    %v4177 = vadd.f32 %v541, %v4176
    %v4178 = vpop.f32.mrb[0].mxu0
    %4179 = vmatprep.mubr.bf16.mxu0 0
    %4180 = vmatmul.mubr.bf16.gmra.mrb[0].mxu0 %v2416
    %v4181 = vpop.f32.mrb[0].mxu0
    %v4182 = vadd.f32 %v541, %v4181
    %v4183 = vpop.f32.mrb[0].mxu0
    %v4184 = vpop.f32.mrb[0].mxu0
    %v4185 = vadd.f32 %v541, %v4184
    %v4186 = vpop.f32.mrb[0].mxu0
    %4187 = vmatprep.mubr.bf16.mxu0 0
    %4188 = vmatmul.mubr.bf16.gmra.mrb[0].mxu0 %v2419
    %v4189 = vpop.f32.mrb[0].mxu0
    %v4190 = vadd.f32 %v541, %v4189
    %v4191 = vpop.f32.mrb[0].mxu0
    %v4192 = vpop.f32.mrb[0].mxu0
    %v4193 = vadd.f32 %v541, %v4192
    %v4194 = vpop.f32.mrb[0].mxu0
    %4195 = vmatprep.mubr.bf16.mxu0 0
    %4196 = vmatmul.mubr.bf16.gmra.mrb[0].mxu0 %v2422
    %v4197 = vpop.f32.mrb[0].mxu0
    %v4198 = vadd.f32 %v541, %v4197
    %v4199 = vpop.f32.mrb[0].mxu0
    %v4200 = vpop.f32.mrb[0].mxu0
    %v4201 = vadd.f32 %v541, %v4200
    %v4202 = vpop.f32.mrb[0].mxu0
    %4203 = vmatprep.mubr.bf16.mxu0 0
    %4204 = vmatmul.mubr.bf16.gmra.mrb[0].mxu0 %v2425
    %v4205 = vpop.f32.mrb[0].mxu0
    %v4206 = vadd.f32 %v541, %v4205
    %v4207 = vpop.f32.mrb[0].mxu0
    %v4208 = vpop.f32.mrb[0].mxu0
    %v4209 = vadd.f32 %v541, %v4208
    %v4210 = vpop.f32.mrb[0].mxu0
    %4211 = vmatprep.mubr.bf16.mxu0 0
    %4212 = vmatmul.mubr.bf16.gmra.mrb[0].mxu0 %v2428
    %v4213 = vpop.f32.mrb[0].mxu0
    %v4214 = vadd.f32 %v541, %v4213
    %v4215 = vpop.f32.mrb[0].mxu0
    %v4216 = vpop.f32.mrb[0].mxu0
    %v4217 = vadd.f32 %v541, %v4216
    %v4218 = vpop.f32.mrb[0].mxu0
    %4219 = vmatprep.mubr.bf16.mxu0 0
    %4220 = vmatmul.mubr.bf16.gmra.mrb[0].mxu0 %v2431
    %v4221 = vpop.f32.mrb[0].mxu0
    %v4222 = vadd.f32 %v541, %v4221
    %v4223 = vpop.f32.mrb[0].mxu0
    %v4224 = vpop.f32.mrb[0].mxu0
    %v4225 = vadd.f32 %v541, %v4224
    %v4226 = vpop.f32.mrb[0].mxu0
    %4227 = vmatprep.mubr.bf16.mxu0 0
    %4228 = vmatmul.mubr.bf16.gmra.mrb[0].mxu0 %v2434
    %v4229 = vpop.f32.mrb[0].mxu0
    %v4230 = vadd.f32 %v541, %v4229
    %v4231 = vpop.f32.mrb[0].mxu0
    %v4232 = vpop.f32.mrb[0].mxu0
    %v4233 = vadd.f32 %v541, %v4232
    %v4234 = vpop.f32.mrb[0].mxu0
    %4235 = vmatprep.mubr.bf16.mxu0 0
    %4236 = vmatmul.mubr.bf16.gmra.mrb[0].mxu0 %v2437
    %v4237 = vpop.f32.mrb[0].mxu0
    %v4238 = vadd.f32 %v541, %v4237
    %v4239 = vpop.f32.mrb[0].mxu0
    %v4240 = vpop.f32.mrb[0].mxu0
    %v4241 = vadd.f32 %v541, %v4240
    %v4242 = vpop.f32.mrb[0].mxu0
    %4243 = vmatprep.mubr.bf16.mxu0 0
    %4244 = vmatmul.mubr.bf16.gmra.mrb[0].mxu0 %v2440
    %v4245 = vpop.f32.mrb[0].mxu0
    %v4246 = vadd.f32 %v541, %v4245
    %v4247 = vpop.f32.mrb[0].mxu0
    %v4248 = vpop.f32.mrb[0].mxu0
    %v4249 = vadd.f32 %v541, %v4248
    %v4250 = vpop.f32.mrb[0].mxu0
    %4251 = vmatprep.mubr.bf16.mxu0 0
    %4252 = vmatmul.mubr.bf16.gmra.mrb[0].mxu0 %v2443
    %v4253 = vpop.f32.mrb[0].mxu0
    %v4254 = vadd.f32 %v541, %v4253
    %v4255 = vpop.f32.mrb[0].mxu0
    %v4256 = vpop.f32.mrb[0].mxu0
    %v4257 = vadd.f32 %v541, %v4256
    %v4258 = vpop.f32.mrb[0].mxu0
    %4259 = vmatprep.mubr.bf16.mxu0 0
    %4260 = vmatmul.mubr.bf16.gmra.mrb[0].mxu0 %v2446
    %v4261 = vpop.f32.mrb[0].mxu0
    %v4262 = vadd.f32 %v541, %v4261
    %v4263 = vpop.f32.mrb[0].mxu0
    %v4264 = vpop.f32.mrb[0].mxu0
    %v4265 = vadd.f32 %v541, %v4264
    %v4266 = vpop.f32.mrb[0].mxu0
    %4267 = vmatprep.mubr.bf16.mxu0 0
    %4268 = vmatmul.mubr.bf16.gmra.mrb[0].mxu0 %v2449
    %v4269 = vpop.f32.mrb[0].mxu0
    %v4270 = vadd.f32 %v541, %v4269
    %v4271 = vpop.f32.mrb[0].mxu0
    %v4272 = vpop.f32.mrb[0].mxu0
    %v4273 = vadd.f32 %v541, %v4272
    %v4274 = vpop.f32.mrb[0].mxu0
    %4275 = vmatprep.mubr.bf16.mxu0 0
    %4276 = vmatmul.mubr.bf16.gmra.mrb[0].mxu0 %v2452
    %v4277 = vpop.f32.mrb[0].mxu0
    %v4278 = vadd.f32 %v541, %v4277
    %v4279 = vpop.f32.mrb[0].mxu0
    %v4280 = vpop.f32.mrb[0].mxu0
    %v4281 = vadd.f32 %v541, %v4280
    %v4282 = vpop.f32.mrb[0].mxu0
    %4283 = vmatprep.mubr.bf16.mxu0 0
    %4284 = vmatmul.mubr.bf16.gmra.mrb[0].mxu0 %v2455
    %v4285 = vpop.f32.mrb[0].mxu0
    %v4286 = vadd.f32 %v541, %v4285
    %v4287 = vpop.f32.mrb[0].mxu0
    %v4288 = vpop.f32.mrb[0].mxu0
    %v4289 = vadd.f32 %v541, %v4288
    %v4290 = vpop.f32.mrb[0].mxu0
    %4291 = vmatprep.mubr.bf16.mxu0 0
    %4292 = vmatmul.mubr.bf16.gmra.mrb[0].mxu0 %v2458
    %v4293 = vpop.f32.mrb[0].mxu0
    %v4294 = vadd.f32 %v541, %v4293
    %v4295 = vpop.f32.mrb[0].mxu0
    %v4296 = vpop.f32.mrb[0].mxu0
    %v4297 = vadd.f32 %v541, %v4296
    %v4298 = vpop.f32.mrb[0].mxu0
    %4299 = vmatprep.mubr.bf16.mxu0 0
    %4300 = vmatmul.mubr.bf16.gmra.mrb[0].mxu0 %v2461
    %v4301 = vpop.f32.mrb[0].mxu0
    %v4302 = vadd.f32 %v541, %v4301
    %v4303 = vpop.f32.mrb[0].mxu0
    %v4304 = vpop.f32.mrb[0].mxu0
    %v4305 = vadd.f32 %v541, %v4304
    %v4306 = vpop.f32.mrb[0].mxu0
    %4307 = vmatprep.mubr.bf16.mxu0 0
    %4308 = vmatmul.mubr.bf16.gmra.mrb[0].mxu0 %v2464
    %v4309 = vpop.f32.mrb[0].mxu0
    %v4310 = vadd.f32 %v541, %v4309
    %v4311 = vpop.f32.mrb[0].mxu0
    %v4312 = vpop.f32.mrb[0].mxu0
    %v4313 = vadd.f32 %v541, %v4312
    %v4314 = vpop.f32.mrb[0].mxu0
    %4315 = vmatprep.mubr.bf16.mxu0 0
    %4316 = vmatmul.mubr.bf16.gmra.mrb[0].mxu0 %v2467
    %v4317 = vpop.f32.mrb[0].mxu0
    %v4318 = vadd.f32 %v541, %v4317
    %v4319 = vpop.f32.mrb[0].mxu0
    %v4320 = vpop.f32.mrb[0].mxu0
    %v4321 = vadd.f32 %v541, %v4320
    %v4322 = vpop.f32.mrb[0].mxu0
    %4323 = vmatprep.mubr.bf16.mxu0 0
    %4324 = vmatmul.mubr.bf16.gmra.mrb[0].mxu0 %v2470
    %v4325 = vpop.f32.mrb[0].mxu0
    %v4326 = vadd.f32 %v541, %v4325
    %v4327 = vpop.f32.mrb[0].mxu0
    %v4328 = vpop.f32.mrb[0].mxu0
    %v4329 = vadd.f32 %v541, %v4328
    %v4330 = vpop.f32.mrb[0].mxu0
    %4331 = vmatprep.mubr.bf16.mxu0 0
    %4332 = vmatmul.mubr.bf16.gmra.mrb[0].mxu0 %v2473
    %v4333 = vpop.f32.mrb[0].mxu0
    %v4334 = vadd.f32 %v541, %v4333
    %v4335 = vpop.f32.mrb[0].mxu0
    %v4336 = vpop.f32.mrb[0].mxu0
    %v4337 = vadd.f32 %v541, %v4336
    %v4338 = vpop.f32.mrb[0].mxu0
    %4339 = vmatprep.mubr.bf16.mxu0 0
    %4340 = vmatmul.mubr.bf16.gmra.mrb[0].mxu0 %v2476
    %v4341 = vpop.f32.mrb[0].mxu0
    %v4342 = vadd.f32 %v541, %v4341
    %v4343 = vpop.f32.mrb[0].mxu0
    %v4344 = vpop.f32.mrb[0].mxu0
    %v4345 = vadd.f32 %v541, %v4344
    %v4346 = vpop.f32.mrb[0].mxu0
    %4347 = vmatprep.mubr.bf16.mxu0 0
    %4348 = vmatmul.mubr.bf16.gmra.mrb[0].mxu0 %v2479
    %v4349 = vpop.f32.mrb[0].mxu0
    %v4350 = vadd.f32 %v541, %v4349
    %v4351 = vpop.f32.mrb[0].mxu0
    %v4352 = vpop.f32.mrb[0].mxu0
    %v4353 = vadd.f32 %v541, %v4352
    %v4354 = vpop.f32.mrb[0].mxu0
    %4355 = vmatprep.mubr.bf16.mxu0 0
    %4356 = vmatmul.mubr.bf16.gmra.mrb[0].mxu0 %v2482
    %v4357 = vpop.f32.mrb[0].mxu0
    %v4358 = vadd.f32 %v541, %v4357
    %v4359 = vpop.f32.mrb[0].mxu0
    %v4360 = vpop.f32.mrb[0].mxu0
    %v4361 = vadd.f32 %v541, %v4360
    %v4362 = vpop.f32.mrb[0].mxu0
    %4363 = vmatprep.mubr.bf16.mxu0 0
    %4364 = vmatmul.mubr.bf16.gmra.mrb[0].mxu0 %v2485
    %v4365 = vpop.f32.mrb[0].mxu0
    %v4366 = vadd.f32 %v541, %v4365
    %v4367 = vpop.f32.mrb[0].mxu0
    %v4368 = vpop.f32.mrb[0].mxu0
    %v4369 = vadd.f32 %v541, %v4368
    %v4370 = vpop.f32.mrb[0].mxu0
    %4371 = vmatprep.mubr.bf16.mxu0 0
    %4372 = vmatmul.mubr.bf16.gmra.mrb[0].mxu0 %v2488
    %v4373 = vpop.f32.mrb[0].mxu0
    %v4374 = vadd.f32 %v541, %v4373
    %v4375 = vpop.f32.mrb[0].mxu0
    %v4376 = vpop.f32.mrb[0].mxu0
    %v4377 = vadd.f32 %v541, %v4376
    %v4378 = vpop.f32.mrb[0].mxu0
    %4379 = vmatprep.mubr.bf16.mxu0 0
    %4380 = vmatmul.mubr.bf16.gmra.mrb[0].mxu0 %v2491
    %v4381 = vpop.f32.mrb[0].mxu0
    %v4382 = vadd.f32 %v541, %v4381
    %v4383 = vpop.f32.mrb[0].mxu0
    %v4384 = vpop.f32.mrb[0].mxu0
    %v4385 = vadd.f32 %v541, %v4384
    %v4386 = vpop.f32.mrb[0].mxu0
    %4387 = vmatprep.mubr.bf16.mxu0 0
    %4388 = vmatmul.mubr.bf16.gmra.mrb[0].mxu0 %v2494
    %v4389 = vpop.f32.mrb[0].mxu0
    %v4390 = vadd.f32 %v541, %v4389
    %v4391 = vpop.f32.mrb[0].mxu0
    %v4392 = vpop.f32.mrb[0].mxu0
    %v4393 = vadd.f32 %v541, %v4392
    %v4394 = vpop.f32.mrb[0].mxu0
    %4395 = vmatprep.mubr.bf16.mxu0 0
    %4396 = vmatmul.mubr.bf16.gmra.mrb[0].mxu0 %v2497
    %v4397 = vpop.f32.mrb[0].mxu0
    %v4398 = vadd.f32 %v541, %v4397
    %v4399 = vpop.f32.mrb[0].mxu0
    %v4400 = vpop.f32.mrb[0].mxu0
    %v4401 = vadd.f32 %v541, %v4400
    %v4402 = vpop.f32.mrb[0].mxu0
    %4403 = vmatprep.mubr.bf16.mxu0 0
    %4404 = vmatmul.mubr.bf16.gmra.mrb[0].mxu0 %v2500
    %v4405 = vpop.f32.mrb[0].mxu0
    %v4406 = vadd.f32 %v541, %v4405
    %v4407 = vpop.f32.mrb[0].mxu0
    %v4408 = vpop.f32.mrb[0].mxu0
    %v4409 = vadd.f32 %v541, %v4408
    %v4410 = vpop.f32.mrb[0].mxu0
    %4411 = vmatprep.mubr.bf16.mxu0 0
    %4412 = vmatmul.mubr.bf16.gmra.mrb[0].mxu0 %v2503
    %v4413 = vpop.f32.mrb[0].mxu0
    %v4414 = vadd.f32 %v541, %v4413
    %v4415 = vpop.f32.mrb[0].mxu0
    %v4416 = vpop.f32.mrb[0].mxu0
    %v4417 = vadd.f32 %v541, %v4416
    %v4418 = vpop.f32.mrb[0].mxu0
    %4419 = vmatprep.mubr.bf16.mxu0 0
    %4420 = vmatmul.mubr.bf16.gmra.mrb[0].mxu0 %v2506
    %v4421 = vpop.f32.mrb[0].mxu0
    %v4422 = vadd.f32 %v541, %v4421
    %v4423 = vpop.f32.mrb[0].mxu0
    %v4424 = vpop.f32.mrb[0].mxu0
    %v4425 = vadd.f32 %v541, %v4424
    %v4426 = vpop.f32.mrb[0].mxu0
    %4427 = vmatprep.mubr.bf16.mxu0 0
    %4428 = vmatmul.mubr.bf16.gmra.mrb[0].mxu0 %v2509
    %v4429 = vpop.f32.mrb[0].mxu0
    %v4430 = vadd.f32 %v541, %v4429
    %v4431 = vpop.f32.mrb[0].mxu0
    %v4432 = vpop.f32.mrb[0].mxu0
    %v4433 = vadd.f32 %v541, %v4432
    %v4434 = vpop.f32.mrb[0].mxu0
    %4435 = vmatprep.mubr.bf16.mxu0 0
    %4436 = vmatmul.mubr.bf16.gmra.mrb[0].mxu0 %v2512
    %v4437 = vpop.f32.mrb[0].mxu0
    %v4438 = vadd.f32 %v541, %v4437
    %v4439 = vpop.f32.mrb[0].mxu0
    %v4440 = vpop.f32.mrb[0].mxu0
    %v4441 = vadd.f32 %v541, %v4440
    %v4442 = vpop.f32.mrb[0].mxu0
    %4443 = vmatprep.mubr.bf16.mxu0 0
    %4444 = vmatmul.mubr.bf16.gmra.mrb[0].mxu0 %v2515
    %v4445 = vpop.f32.mrb[0].mxu0
    %v4446 = vadd.f32 %v541, %v4445
    %v4447 = vpop.f32.mrb[0].mxu0
    %v4448 = vpop.f32.mrb[0].mxu0
    %v4449 = vadd.f32 %v541, %v4448
    %v4450 = vpop.f32.mrb[0].mxu0
    %4451 = vmatprep.mubr.bf16.mxu0 0
    %4452 = vmatmul.mubr.bf16.gmra.mrb[0].mxu0 %v2518
    %v4453 = vpop.f32.mrb[0].mxu0
    %v4454 = vadd.f32 %v541, %v4453
    %v4455 = vpop.f32.mrb[0].mxu0
    %v4456 = vpop.f32.mrb[0].mxu0
    %v4457 = vadd.f32 %v541, %v4456
    %v4458 = vpop.f32.mrb[0].mxu0
    %4459 = vmatprep.mubr.bf16.mxu0 0
    %4460 = vmatmul.mubr.bf16.gmra.mrb[0].mxu0 %v2521
    %v4461 = vpop.f32.mrb[0].mxu0
    %v4462 = vadd.f32 %v541, %v4461
    %v4463 = vpop.f32.mrb[0].mxu0
    %v4464 = vpop.f32.mrb[0].mxu0
    %v4465 = vadd.f32 %v541, %v4464
    %v4466 = vpop.f32.mrb[0].mxu0
    %4467 = vmatprep.mubr.bf16.mxu0 0
    %4468 = vmatmul.mubr.bf16.gmra.mrb[0].mxu0 %v2524
    %v4469 = vpop.f32.mrb[0].mxu0
    %v4470 = vadd.f32 %v541, %v4469
    %v4471 = vpop.f32.mrb[0].mxu0
    %v4472 = vpop.f32.mrb[0].mxu0
    %v4473 = vadd.f32 %v541, %v4472
    %v4474 = vpop.f32.mrb[0].mxu0
    %4475 = vmatprep.mubr.bf16.mxu0 0
    %4476 = vmatmul.mubr.bf16.gmra.mrb[0].mxu0 %v2527
    %v4477 = vpop.f32.mrb[0].mxu0
    %v4478 = vadd.f32 %v541, %v4477
    %v4479 = vpop.f32.mrb[0].mxu0
    %v4480 = vpop.f32.mrb[0].mxu0
    %v4481 = vadd.f32 %v541, %v4480
    %v4482 = vpop.f32.mrb[0].mxu0
    %4483 = vmatprep.mubr.bf16.mxu0 0
    %4484 = vmatmul.mubr.bf16.gmra.mrb[0].mxu0 %v2530
    %v4485 = vpop.f32.mrb[0].mxu0
    %v4486 = vadd.f32 %v541, %v4485
    %v4487 = vpop.f32.mrb[0].mxu0
    %v4488 = vpop.f32.mrb[0].mxu0
    %v4489 = vadd.f32 %v541, %v4488
    %v4490 = vpop.f32.mrb[0].mxu0
    %4491 = vmatprep.mubr.bf16.mxu0 0
    %4492 = vmatmul.mubr.bf16.gmra.mrb[0].mxu0 %v2533
    %v4493 = vpop.f32.mrb[0].mxu0
    %v4494 = vadd.f32 %v541, %v4493
    %v4495 = vpop.f32.mrb[0].mxu0
    %v4496 = vpop.f32.mrb[0].mxu0
    %v4497 = vadd.f32 %v541, %v4496
    %v4498 = vpop.f32.mrb[0].mxu0
    %4499 = vmatprep.mubr.bf16.mxu0 0
    %4500 = vmatmul.mubr.bf16.gmra.mrb[0].mxu0 %v2536
    %v4501 = vpop.f32.mrb[0].mxu0
    %v4502 = vadd.f32 %v541, %v4501
    %v4503 = vpop.f32.mrb[0].mxu0
    %v4504 = vpop.f32.mrb[0].mxu0
    %v4505 = vadd.f32 %v541, %v4504
    %v4506 = vpop.f32.mrb[0].mxu0
    %4507 = vmatprep.mubr.bf16.mxu0 0
    %4508 = vmatmul.mubr.bf16.gmra.mrb[0].mxu0 %v2539
    %v4509 = vpop.f32.mrb[0].mxu0
    %v4510 = vadd.f32 %v541, %v4509
    %v4511 = vpop.f32.mrb[0].mxu0
    %v4512 = vpop.f32.mrb[0].mxu0
    %v4513 = vadd.f32 %v541, %v4512
    %v4514 = vpop.f32.mrb[0].mxu0
    %4515 = vmatprep.mubr.bf16.mxu0 0
    %4516 = vmatmul.mubr.bf16.gmra.mrb[0].mxu0 %v2542
    %v4517 = vpop.f32.mrb[0].mxu0
    %v4518 = vadd.f32 %v541, %v4517
    %v4519 = vpop.f32.mrb[0].mxu0
    %v4520 = vpop.f32.mrb[0].mxu0
    %v4521 = vadd.f32 %v541, %v4520
    %v4522 = vpop.f32.mrb[0].mxu0
    %4523 = vmatprep.mubr.bf16.mxu0 0
    %4524 = vmatmul.mubr.bf16.gmra.mrb[0].mxu0 %v2545
    %v4525 = vpop.f32.mrb[0].mxu0
    %v4526 = vadd.f32 %v541, %v4525
    %v4527 = vpop.f32.mrb[0].mxu0
    %v4528 = vpop.f32.mrb[0].mxu0
    %v4529 = vadd.f32 %v541, %v4528
    %v4530 = vpop.f32.mrb[0].mxu0
    %4531 = vmatprep.mubr.bf16.mxu0 0
    %4532 = vmatmul.mubr.bf16.gmra.mrb[0].mxu0 %v2548
    %v4533 = vpop.f32.mrb[0].mxu0
    %v4534 = vadd.f32 %v541, %v4533
    %v4535 = vpop.f32.mrb[0].mxu0
    %v4536 = vpop.f32.mrb[0].mxu0
    %v4537 = vadd.f32 %v541, %v4536
    %v4538 = vpop.f32.mrb[0].mxu0
    %4539 = vmatprep.mubr.bf16.mxu0 0
    %4540 = vmatmul.mubr.bf16.gmra.mrb[0].mxu0 %v2551
    %v4541 = vpop.f32.mrb[0].mxu0
    %v4542 = vadd.f32 %v541, %v4541
    %v4543 = vpop.f32.mrb[0].mxu0
    %v4544 = vpop.f32.mrb[0].mxu0
    %v4545 = vadd.f32 %v541, %v4544
    %v4546 = vpop.f32.mrb[0].mxu0
    %4547 = vmatprep.mubr.bf16.mxu0 0
    %4548 = vmatmul.mubr.bf16.gmra.mrb[0].mxu0 %v2554
    %v4549 = vpop.f32.mrb[0].mxu0
    %v4550 = vadd.f32 %v541, %v4549
    %v4551 = vpop.f32.mrb[0].mxu0
    %v4552 = vpop.f32.mrb[0].mxu0
    %v4553 = vadd.f32 %v541, %v4552
    %v4554 = vpop.f32.mrb[0].mxu0
    %4555 = vmatprep.mubr.bf16.mxu0 0
    %4556 = vmatmul.mubr.bf16.gmra.mrb[0].mxu0 %v2557
    %v4557 = vpop.f32.mrb[0].mxu0
    %v4558 = vadd.f32 %v541, %v4557
    %v4559 = vpop.f32.mrb[0].mxu0
    %v4560 = vpop.f32.mrb[0].mxu0
    %v4561 = vadd.f32 %v541, %v4560
    %v4562 = vpop.f32.mrb[0].mxu0
    %4563 = vmatprep.mubr.bf16.mxu0 0
    %4564 = vmatmul.mubr.bf16.gmra.mrb[0].mxu0 %v2560
    %v4565 = vpop.f32.mrb[0].mxu0
    %v4566 = vadd.f32 %v541, %v4565
    %v4567 = vpop.f32.mrb[0].mxu0
    %v4568 = vpop.f32.mrb[0].mxu0
    %v4569 = vadd.f32 %v541, %v4568
    %v4570 = vpop.f32.mrb[0].mxu0
    %4571 = vmatprep.mubr.bf16.mxu0 0
    %4572 = vmatmul.mubr.bf16.gmra.mrb[0].mxu0 %v2563
    %v4573 = vpop.f32.mrb[0].mxu0
    %v4574 = vadd.f32 %v541, %v4573
    %v4575 = vpop.f32.mrb[0].mxu0
    %v4576 = vpop.f32.mrb[0].mxu0
    %v4577 = vadd.f32 %v541, %v4576
    %v4578 = vpop.f32.mrb[0].mxu0
    %4579 = vmatprep.mubr.bf16.mxu0 0
    %4580 = vmatmul.mubr.bf16.gmra.mrb[0].mxu0 %v2566
    %v4581 = vpop.f32.mrb[0].mxu0
    %v4582 = vadd.f32 %v541, %v4581
    %v4583 = vpop.f32.mrb[0].mxu0
    %v4584 = vpop.f32.mrb[0].mxu0
    %v4585 = vadd.f32 %v541, %v4584
    %v4586 = vpop.f32.mrb[0].mxu0
    %4587 = vmatprep.mubr.bf16.mxu0 0
    %4588 = vmatmul.mubr.bf16.gmra.mrb[0].mxu0 %v2569
    %v4589 = vpop.f32.mrb[0].mxu0
    %v4590 = vadd.f32 %v541, %v4589
    %v4591 = vpop.f32.mrb[0].mxu0
    %v4592 = vpop.f32.mrb[0].mxu0
    %v4593 = vadd.f32 %v541, %v4592
    %v4594 = vpop.f32.mrb[0].mxu0
    %4595 = vmatprep.mubr.bf16.mxu0 0
    %4596 = vmatmul.mubr.bf16.gmra.mrb[0].mxu0 %v2572
    %v4597 = vpop.f32.mrb[0].mxu0
    %v4598 = vadd.f32 %v541, %v4597
    %v4599 = vpop.f32.mrb[0].mxu0
    %v4600 = vpop.f32.mrb[0].mxu0
    %v4601 = vadd.f32 %v541, %v4600
    %v4602 = vpop.f32.mrb[0].mxu0
    %4603 = vmatprep.mubr.bf16.mxu0 0
    %4604 = vmatmul.mubr.bf16.gmra.mrb[0].mxu0 %v2575
    %v4605 = vpop.f32.mrb[0].mxu0
    %v4606 = vadd.f32 %v541, %v4605
    %v4607 = vpop.f32.mrb[0].mxu0
    %v4608 = vpop.f32.mrb[0].mxu0
    %v4609 = vadd.f32 %v541, %v4608
    %v4610 = vpop.f32.mrb[0].mxu0
    %4611 = vmatprep.mubr.bf16.mxu0 0
    %4612 = vmatmul.mubr.bf16.gmra.mrb[0].mxu0 %v2578
    %v4613 = vpop.f32.mrb[0].mxu0
    %v4614 = vadd.f32 %v541, %v4613
    %v4615 = vpop.f32.mrb[0].mxu0
    %v4616 = vpop.f32.mrb[0].mxu0
    %v4617 = vadd.f32 %v541, %v4616
    %v4618 = vpop.f32.mrb[0].mxu0
    %4619 = vmatprep.mubr.bf16.mxu0 0
    %4620 = vmatmul.mubr.bf16.gmra.mrb[0].mxu0 %v2581
    %v4621 = vpop.f32.mrb[0].mxu0
    %v4622 = vadd.f32 %v541, %v4621
    %v4623 = vpop.f32.mrb[0].mxu0
    %v4624 = vpop.f32.mrb[0].mxu0
    %v4625 = vadd.f32 %v541, %v4624
    %v4626 = vpop.f32.mrb[0].mxu0
    %4627 = vmatprep.mubr.bf16.mxu0 0
    %4628 = vmatmul.mubr.bf16.gmra.mrb[0].mxu0 %v2584
    %v4629 = vpop.f32.mrb[0].mxu0
    %v4630 = vadd.f32 %v541, %v4629
    %v4631 = vpop.f32.mrb[0].mxu0
    %v4632 = vpop.f32.mrb[0].mxu0
    %v4633 = vadd.f32 %v541, %v4632
    %v4634 = vpop.f32.mrb[0].mxu0
    %4635 = vmatprep.mubr.bf16.mxu0 0
    %4636 = vmatmul.mubr.bf16.gmra.mrb[0].mxu0 %v2587
    %v4637 = vpop.f32.mrb[0].mxu0
    %v4638 = vadd.f32 %v541, %v4637
    %v4639 = vpop.f32.mrb[0].mxu0
    %v4640 = vpop.f32.mrb[0].mxu0
    %v4641 = vadd.f32 %v541, %v4640
    %v4642 = vpop.f32.mrb[0].mxu0
    %4643 = vmatprep.mubr.bf16.mxu0 0
    %4644 = vmatmul.mubr.bf16.gmra.mrb[0].mxu0 %v2590
    %v4645 = vpop.f32.mrb[0].mxu0
    %v4646 = vadd.f32 %v541, %v4645
    %v4647 = vpop.f32.mrb[0].mxu0
    %v4648 = vpop.f32.mrb[0].mxu0
    %v4649 = vadd.f32 %v541, %v4648
    %v4650 = vpop.f32.mrb[0].mxu0
    %4651 = vmatprep.mubr.bf16.mxu0 0
    %4652 = vmatmul.mubr.bf16.gmra.mrb[0].mxu0 %v2593
    %v4653 = vpop.f32.mrb[0].mxu0
    %v4654 = vadd.f32 %v541, %v4653
    %v4655 = vpop.f32.mrb[0].mxu0
    %v4656 = vpop.f32.mrb[0].mxu0
    %v4657 = vadd.f32 %v541, %v4656
    %v4658 = vpop.f32.mrb[0].mxu0
    %4659 = vmatprep.mubr.bf16.mxu0 0
    %4660 = vmatmul.mubr.bf16.gmra.mrb[0].mxu0 %v2596
    %v4661 = vpop.f32.mrb[0].mxu0
    %v4662 = vadd.f32 %v541, %v4661
    %v4663 = vpop.f32.mrb[0].mxu0
    %v4664 = vpop.f32.mrb[0].mxu0
    %v4665 = vadd.f32 %v541, %v4664
    %v4666 = vpop.f32.mrb[0].mxu0
    %4667 = vmatprep.mubr.bf16.mxu0 0
    %4668 = vmatmul.mubr.bf16.gmra.mrb[0].mxu0 %v2599
    %v4669 = vpop.f32.mrb[0].mxu0
    %v4670 = vadd.f32 %v541, %v4669
    %v4671 = vpop.f32.mrb[0].mxu0
    %v4672 = vpop.f32.mrb[0].mxu0
    %v4673 = vadd.f32 %v541, %v4672
    %v4674 = vpop.f32.mrb[0].mxu0
    %4675 = vmatprep.mubr.bf16.mxu0 0
    %4676 = vmatmul.mubr.bf16.gmra.mrb[0].mxu0 %v2602
    %v4677 = vpop.f32.mrb[0].mxu0
    %v4678 = vadd.f32 %v541, %v4677
    %v4679 = vpop.f32.mrb[0].mxu0
    %v4680 = vpop.f32.mrb[0].mxu0
    %v4681 = vadd.f32 %v541, %v4680
    %v4682 = vpop.f32.mrb[0].mxu0
    %4683 = vmatprep.mubr.bf16.mxu0 0
    %4684 = vmatmul.mubr.bf16.gmra.mrb[0].mxu0 %v2605
    %v4685 = vpop.f32.mrb[0].mxu0
    %v4686 = vadd.f32 %v541, %v4685
    %v4687 = vpop.f32.mrb[0].mxu0
    %v4688 = vpop.f32.mrb[0].mxu0
    %v4689 = vadd.f32 %v541, %v4688
    %v4690 = vpop.f32.mrb[0].mxu0
    %4691 = vdwg.mxu0
    %v4692 = vmax.f32 %v2646, 0.0
    %v4693 = vmax.f32 %v2649, 0.0
    %v4694 = vmax.f32 %v2654, 0.0
    %v4695 = vmax.f32 %v2657, 0.0
    %v4696 = vmax.f32 %v2662, 0.0
    %v4697 = vmax.f32 %v2665, 0.0
    %v4698 = vmax.f32 %v2670, 0.0
    %v4699 = vmax.f32 %v2673, 0.0
    %v4700 = vmax.f32 %v2678, 0.0
    %v4701 = vmax.f32 %v2681, 0.0
    %v4702 = vmax.f32 %v2686, 0.0
    %v4703 = vmax.f32 %v2689, 0.0
    %v4704 = vmax.f32 %v2694, 0.0
    %v4705 = vmax.f32 %v2697, 0.0
    %v4706 = vmax.f32 %v2702, 0.0
    %v4707 = vmax.f32 %v2705, 0.0
    %v4708 = vmax.f32 %v2710, 0.0
    %v4709 = vmax.f32 %v2713, 0.0
    %v4710 = vmax.f32 %v2718, 0.0
    %v4711 = vmax.f32 %v2721, 0.0
    %v4712 = vmax.f32 %v2726, 0.0
    %v4713 = vmax.f32 %v2729, 0.0
    %v4714 = vmax.f32 %v2734, 0.0
    %v4715 = vmax.f32 %v2737, 0.0
    %v4716 = vmax.f32 %v2742, 0.0
    %v4717 = vmax.f32 %v2745, 0.0
    %v4718 = vmax.f32 %v2750, 0.0
    %v4719 = vmax.f32 %v2753, 0.0
    %v4720 = vmax.f32 %v2758, 0.0
    %v4721 = vmax.f32 %v2761, 0.0
    %v4722 = vmax.f32 %v2766, 0.0
    %v4723 = vmax.f32 %v2769, 0.0
    %v4724 = vmax.f32 %v2774, 0.0
    %v4725 = vmax.f32 %v2777, 0.0
    %v4726 = vmax.f32 %v2782, 0.0
    %v4727 = vmax.f32 %v2785, 0.0
    %v4728 = vmax.f32 %v2790, 0.0
    %v4729 = vmax.f32 %v2793, 0.0
    %v4730 = vmax.f32 %v2798, 0.0
    %v4731 = vmax.f32 %v2801, 0.0
    %v4732 = vmax.f32 %v2806, 0.0
    %v4733 = vmax.f32 %v2809, 0.0
    %v4734 = vmax.f32 %v2814, 0.0
    %v4735 = vmax.f32 %v2817, 0.0
    %v4736 = vmax.f32 %v2822, 0.0
    %v4737 = vmax.f32 %v2825, 0.0
    %v4738 = vmax.f32 %v2830, 0.0
    %v4739 = vmax.f32 %v2833, 0.0
    %v4740 = vmax.f32 %v2838, 0.0
    %v4741 = vmax.f32 %v2841, 0.0
    %v4742 = vmax.f32 %v2846, 0.0
    %v4743 = vmax.f32 %v2849, 0.0
    %v4744 = vmax.f32 %v2854, 0.0
    %v4745 = vmax.f32 %v2857, 0.0
    %v4746 = vmax.f32 %v2862, 0.0
    %v4747 = vmax.f32 %v2865, 0.0
    %v4748 = vmax.f32 %v2870, 0.0
    %v4749 = vmax.f32 %v2873, 0.0
    %v4750 = vmax.f32 %v2878, 0.0
    %v4751 = vmax.f32 %v2881, 0.0
    %v4752 = vmax.f32 %v2886, 0.0
    %v4753 = vmax.f32 %v2889, 0.0
    %v4754 = vmax.f32 %v2894, 0.0
    %v4755 = vmax.f32 %v2897, 0.0
    %v4756 = vmax.f32 %v2902, 0.0
    %v4757 = vmax.f32 %v2905, 0.0
    %v4758 = vmax.f32 %v2910, 0.0
    %v4759 = vmax.f32 %v2913, 0.0
    %v4760 = vmax.f32 %v2918, 0.0
    %v4761 = vmax.f32 %v2921, 0.0
    %v4762 = vmax.f32 %v2926, 0.0
    %v4763 = vmax.f32 %v2929, 0.0
    %v4764 = vmax.f32 %v2934, 0.0
    %v4765 = vmax.f32 %v2937, 0.0
    %v4766 = vmax.f32 %v2942, 0.0
    %v4767 = vmax.f32 %v2945, 0.0
    %v4768 = vmax.f32 %v2950, 0.0
    %v4769 = vmax.f32 %v2953, 0.0
    %v4770 = vmax.f32 %v2958, 0.0
    %v4771 = vmax.f32 %v2961, 0.0
    %v4772 = vmax.f32 %v2966, 0.0
    %v4773 = vmax.f32 %v2969, 0.0
    %v4774 = vmax.f32 %v2974, 0.0
    %v4775 = vmax.f32 %v2977, 0.0
    %v4776 = vmax.f32 %v2982, 0.0
    %v4777 = vmax.f32 %v2985, 0.0
    %v4778 = vmax.f32 %v2990, 0.0
    %v4779 = vmax.f32 %v2993, 0.0
    %v4780 = vmax.f32 %v2998, 0.0
    %v4781 = vmax.f32 %v3001, 0.0
    %v4782 = vmax.f32 %v3006, 0.0
    %v4783 = vmax.f32 %v3009, 0.0
    %v4784 = vmax.f32 %v3014, 0.0
    %v4785 = vmax.f32 %v3017, 0.0
    %v4786 = vmax.f32 %v3022, 0.0
    %v4787 = vmax.f32 %v3025, 0.0
    %v4788 = vmax.f32 %v3030, 0.0
    %v4789 = vmax.f32 %v3033, 0.0
    %v4790 = vmax.f32 %v3038, 0.0
    %v4791 = vmax.f32 %v3041, 0.0
    %v4792 = vmax.f32 %v3046, 0.0
    %v4793 = vmax.f32 %v3049, 0.0
    %v4794 = vmax.f32 %v3054, 0.0
    %v4795 = vmax.f32 %v3057, 0.0
    %v4796 = vmax.f32 %v3062, 0.0
    %v4797 = vmax.f32 %v3065, 0.0
    %v4798 = vmax.f32 %v3070, 0.0
    %v4799 = vmax.f32 %v3073, 0.0
    %v4800 = vmax.f32 %v3078, 0.0
    %v4801 = vmax.f32 %v3081, 0.0
    %v4802 = vmax.f32 %v3086, 0.0
    %v4803 = vmax.f32 %v3089, 0.0
    %v4804 = vmax.f32 %v3094, 0.0
    %v4805 = vmax.f32 %v3097, 0.0
    %v4806 = vmax.f32 %v3102, 0.0
    %v4807 = vmax.f32 %v3105, 0.0
    %v4808 = vmax.f32 %v3110, 0.0
    %v4809 = vmax.f32 %v3113, 0.0
    %v4810 = vmax.f32 %v3118, 0.0
    %v4811 = vmax.f32 %v3121, 0.0
    %v4812 = vmax.f32 %v3126, 0.0
    %v4813 = vmax.f32 %v3129, 0.0
    %v4814 = vmax.f32 %v3134, 0.0
    %v4815 = vmax.f32 %v3137, 0.0
    %v4816 = vmax.f32 %v3142, 0.0
    %v4817 = vmax.f32 %v3145, 0.0
    %v4818 = vmax.f32 %v3150, 0.0
    %v4819 = vmax.f32 %v3153, 0.0
    %v4820 = vmax.f32 %v3158, 0.0
    %v4821 = vmax.f32 %v3161, 0.0
    %v4822 = vmax.f32 %v3166, 0.0
    %v4823 = vmax.f32 %v3169, 0.0
    %v4824 = vmax.f32 %v3174, 0.0
    %v4825 = vmax.f32 %v3177, 0.0
    %v4826 = vmax.f32 %v3182, 0.0
    %v4827 = vmax.f32 %v3185, 0.0
    %v4828 = vmax.f32 %v3190, 0.0
    %v4829 = vmax.f32 %v3193, 0.0
    %v4830 = vmax.f32 %v3198, 0.0
    %v4831 = vmax.f32 %v3201, 0.0
    %v4832 = vmax.f32 %v3206, 0.0
    %v4833 = vmax.f32 %v3209, 0.0
    %v4834 = vmax.f32 %v3214, 0.0
    %v4835 = vmax.f32 %v3217, 0.0
    %v4836 = vmax.f32 %v3222, 0.0
    %v4837 = vmax.f32 %v3225, 0.0
    %v4838 = vmax.f32 %v3230, 0.0
    %v4839 = vmax.f32 %v3233, 0.0
    %v4840 = vmax.f32 %v3238, 0.0
    %v4841 = vmax.f32 %v3241, 0.0
    %v4842 = vmax.f32 %v3246, 0.0
    %v4843 = vmax.f32 %v3249, 0.0
    %v4844 = vmax.f32 %v3254, 0.0
    %v4845 = vmax.f32 %v3257, 0.0
    %v4846 = vmax.f32 %v3262, 0.0
    %v4847 = vmax.f32 %v3265, 0.0
    %v4848 = vmax.f32 %v3270, 0.0
    %v4849 = vmax.f32 %v3273, 0.0
    %v4850 = vmax.f32 %v3278, 0.0
    %v4851 = vmax.f32 %v3281, 0.0
    %v4852 = vmax.f32 %v3286, 0.0
    %v4853 = vmax.f32 %v3289, 0.0
    %v4854 = vmax.f32 %v3294, 0.0
    %v4855 = vmax.f32 %v3297, 0.0
    %v4856 = vmax.f32 %v3302, 0.0
    %v4857 = vmax.f32 %v3305, 0.0
    %v4858 = vmax.f32 %v3310, 0.0
    %v4859 = vmax.f32 %v3313, 0.0
    %v4860 = vmax.f32 %v3318, 0.0
    %v4861 = vmax.f32 %v3321, 0.0
    %v4862 = vmax.f32 %v3326, 0.0
    %v4863 = vmax.f32 %v3329, 0.0
    %v4864 = vmax.f32 %v3334, 0.0
    %v4865 = vmax.f32 %v3337, 0.0
    %v4866 = vmax.f32 %v3342, 0.0
    %v4867 = vmax.f32 %v3345, 0.0
    %v4868 = vmax.f32 %v3350, 0.0
    %v4869 = vmax.f32 %v3353, 0.0
    %v4870 = vmax.f32 %v3358, 0.0
    %v4871 = vmax.f32 %v3361, 0.0
    %v4872 = vmax.f32 %v3366, 0.0
    %v4873 = vmax.f32 %v3369, 0.0
    %v4874 = vmax.f32 %v3374, 0.0
    %v4875 = vmax.f32 %v3377, 0.0
    %v4876 = vmax.f32 %v3382, 0.0
    %v4877 = vmax.f32 %v3385, 0.0
    %v4878 = vmax.f32 %v3390, 0.0
    %v4879 = vmax.f32 %v3393, 0.0
    %v4880 = vmax.f32 %v3398, 0.0
    %v4881 = vmax.f32 %v3401, 0.0
    %v4882 = vmax.f32 %v3406, 0.0
    %v4883 = vmax.f32 %v3409, 0.0
    %v4884 = vmax.f32 %v3414, 0.0
    %v4885 = vmax.f32 %v3417, 0.0
    %v4886 = vmax.f32 %v3422, 0.0
    %v4887 = vmax.f32 %v3425, 0.0
    %v4888 = vmax.f32 %v3430, 0.0
    %v4889 = vmax.f32 %v3433, 0.0
    %v4890 = vmax.f32 %v3438, 0.0
    %v4891 = vmax.f32 %v3441, 0.0
    %v4892 = vmax.f32 %v3446, 0.0
    %v4893 = vmax.f32 %v3449, 0.0
    %v4894 = vmax.f32 %v3454, 0.0
    %v4895 = vmax.f32 %v3457, 0.0
    %v4896 = vmax.f32 %v3462, 0.0
    %v4897 = vmax.f32 %v3465, 0.0
    %v4898 = vmax.f32 %v3470, 0.0
    %v4899 = vmax.f32 %v3473, 0.0
    %v4900 = vmax.f32 %v3478, 0.0
    %v4901 = vmax.f32 %v3481, 0.0
    %v4902 = vmax.f32 %v3486, 0.0
    %v4903 = vmax.f32 %v3489, 0.0
    %v4904 = vmax.f32 %v3494, 0.0
    %v4905 = vmax.f32 %v3497, 0.0
    %v4906 = vmax.f32 %v3502, 0.0
    %v4907 = vmax.f32 %v3505, 0.0
    %v4908 = vmax.f32 %v3510, 0.0
    %v4909 = vmax.f32 %v3513, 0.0
    %v4910 = vmax.f32 %v3518, 0.0
    %v4911 = vmax.f32 %v3521, 0.0
    %v4912 = vmax.f32 %v3526, 0.0
    %v4913 = vmax.f32 %v3529, 0.0
    %v4914 = vmax.f32 %v3534, 0.0
    %v4915 = vmax.f32 %v3537, 0.0
    %v4916 = vmax.f32 %v3542, 0.0
    %v4917 = vmax.f32 %v3545, 0.0
    %v4918 = vmax.f32 %v3550, 0.0
    %v4919 = vmax.f32 %v3553, 0.0
    %v4920 = vmax.f32 %v3558, 0.0
    %v4921 = vmax.f32 %v3561, 0.0
    %v4922 = vmax.f32 %v3566, 0.0
    %v4923 = vmax.f32 %v3569, 0.0
    %v4924 = vmax.f32 %v3574, 0.0
    %v4925 = vmax.f32 %v3577, 0.0
    %v4926 = vmax.f32 %v3582, 0.0
    %v4927 = vmax.f32 %v3585, 0.0
    %v4928 = vmax.f32 %v3590, 0.0
    %v4929 = vmax.f32 %v3593, 0.0
    %v4930 = vmax.f32 %v3598, 0.0
    %v4931 = vmax.f32 %v3601, 0.0
    %v4932 = vmax.f32 %v3606, 0.0
    %v4933 = vmax.f32 %v3609, 0.0
    %v4934 = vmax.f32 %v3614, 0.0
    %v4935 = vmax.f32 %v3617, 0.0
    %v4936 = vmax.f32 %v3622, 0.0
    %v4937 = vmax.f32 %v3625, 0.0
    %v4938 = vmax.f32 %v3630, 0.0
    %v4939 = vmax.f32 %v3633, 0.0
    %v4940 = vmax.f32 %v3638, 0.0
    %v4941 = vmax.f32 %v3641, 0.0
    %v4942 = vmax.f32 %v3646, 0.0
    %v4943 = vmax.f32 %v3649, 0.0
    %v4944 = vmax.f32 %v3654, 0.0
    %v4945 = vmax.f32 %v3657, 0.0
    %v4946 = vmax.f32 %v3662, 0.0
    %v4947 = vmax.f32 %v3665, 0.0
    %v4948 = vmax.f32 %v3670, 0.0
    %v4949 = vmax.f32 %v3673, 0.0
    %v4950 = vmax.f32 %v3678, 0.0
    %v4951 = vmax.f32 %v3681, 0.0
    %v4952 = vmax.f32 %v3686, 0.0
    %v4953 = vmax.f32 %v3689, 0.0
    %v4954 = vmax.f32 %v3694, 0.0
    %v4955 = vmax.f32 %v3697, 0.0
    %v4956 = vmax.f32 %v3702, 0.0
    %v4957 = vmax.f32 %v3705, 0.0
    %v4958 = vmax.f32 %v3710, 0.0
    %v4959 = vmax.f32 %v3713, 0.0
    %v4960 = vmax.f32 %v3718, 0.0
    %v4961 = vmax.f32 %v3721, 0.0
    %v4962 = vmax.f32 %v3726, 0.0
    %v4963 = vmax.f32 %v3729, 0.0
    %v4964 = vmax.f32 %v3734, 0.0
    %v4965 = vmax.f32 %v3737, 0.0
    %v4966 = vmax.f32 %v3742, 0.0
    %v4967 = vmax.f32 %v3745, 0.0
    %v4968 = vmax.f32 %v3750, 0.0
    %v4969 = vmax.f32 %v3753, 0.0
    %v4970 = vmax.f32 %v3758, 0.0
    %v4971 = vmax.f32 %v3761, 0.0
    %v4972 = vmax.f32 %v3766, 0.0
    %v4973 = vmax.f32 %v3769, 0.0
    %v4974 = vmax.f32 %v3774, 0.0
    %v4975 = vmax.f32 %v3777, 0.0
    %v4976 = vmax.f32 %v3782, 0.0
    %v4977 = vmax.f32 %v3785, 0.0
    %v4978 = vmax.f32 %v3790, 0.0
    %v4979 = vmax.f32 %v3793, 0.0
    %v4980 = vmax.f32 %v3798, 0.0
    %v4981 = vmax.f32 %v3801, 0.0
    %v4982 = vmax.f32 %v3806, 0.0
    %v4983 = vmax.f32 %v3809, 0.0
    %v4984 = vmax.f32 %v3814, 0.0
    %v4985 = vmax.f32 %v3817, 0.0
    %v4986 = vmax.f32 %v3822, 0.0
    %v4987 = vmax.f32 %v3825, 0.0
    %v4988 = vmax.f32 %v3830, 0.0
    %v4989 = vmax.f32 %v3833, 0.0
    %v4990 = vmax.f32 %v3838, 0.0
    %v4991 = vmax.f32 %v3841, 0.0
    %v4992 = vmax.f32 %v3846, 0.0
    %v4993 = vmax.f32 %v3849, 0.0
    %v4994 = vmax.f32 %v3854, 0.0
    %v4995 = vmax.f32 %v3857, 0.0
    %v4996 = vmax.f32 %v3862, 0.0
    %v4997 = vmax.f32 %v3865, 0.0
    %v4998 = vmax.f32 %v3870, 0.0
    %v4999 = vmax.f32 %v3873, 0.0
    %v5000 = vmax.f32 %v3878, 0.0
    %v5001 = vmax.f32 %v3881, 0.0
    %v5002 = vmax.f32 %v3886, 0.0
    %v5003 = vmax.f32 %v3889, 0.0
    %v5004 = vmax.f32 %v3894, 0.0
    %v5005 = vmax.f32 %v3897, 0.0
    %v5006 = vmax.f32 %v3902, 0.0
    %v5007 = vmax.f32 %v3905, 0.0
    %v5008 = vmax.f32 %v3910, 0.0
    %v5009 = vmax.f32 %v3913, 0.0
    %v5010 = vmax.f32 %v3918, 0.0
    %v5011 = vmax.f32 %v3921, 0.0
    %v5012 = vmax.f32 %v3926, 0.0
    %v5013 = vmax.f32 %v3929, 0.0
    %v5014 = vmax.f32 %v3934, 0.0
    %v5015 = vmax.f32 %v3937, 0.0
    %v5016 = vmax.f32 %v3942, 0.0
    %v5017 = vmax.f32 %v3945, 0.0
    %v5018 = vmax.f32 %v3950, 0.0
    %v5019 = vmax.f32 %v3953, 0.0
    %v5020 = vmax.f32 %v3958, 0.0
    %v5021 = vmax.f32 %v3961, 0.0
    %v5022 = vmax.f32 %v3966, 0.0
    %v5023 = vmax.f32 %v3969, 0.0
    %v5024 = vmax.f32 %v3974, 0.0
    %v5025 = vmax.f32 %v3977, 0.0
    %v5026 = vmax.f32 %v3982, 0.0
    %v5027 = vmax.f32 %v3985, 0.0
    %v5028 = vmax.f32 %v3990, 0.0
    %v5029 = vmax.f32 %v3993, 0.0
    %v5030 = vmax.f32 %v3998, 0.0
    %v5031 = vmax.f32 %v4001, 0.0
    %v5032 = vmax.f32 %v4006, 0.0
    %v5033 = vmax.f32 %v4009, 0.0
    %v5034 = vmax.f32 %v4014, 0.0
    %v5035 = vmax.f32 %v4017, 0.0
    %v5036 = vmax.f32 %v4022, 0.0
    %v5037 = vmax.f32 %v4025, 0.0
    %v5038 = vmax.f32 %v4030, 0.0
    %v5039 = vmax.f32 %v4033, 0.0
    %v5040 = vmax.f32 %v4038, 0.0
    %v5041 = vmax.f32 %v4041, 0.0
    %v5042 = vmax.f32 %v4046, 0.0
    %v5043 = vmax.f32 %v4049, 0.0
    %v5044 = vmax.f32 %v4054, 0.0
    %v5045 = vmax.f32 %v4057, 0.0
    %v5046 = vmax.f32 %v4062, 0.0
    %v5047 = vmax.f32 %v4065, 0.0
    %v5048 = vmax.f32 %v4070, 0.0
    %v5049 = vmax.f32 %v4073, 0.0
    %v5050 = vmax.f32 %v4078, 0.0
    %v5051 = vmax.f32 %v4081, 0.0
    %v5052 = vmax.f32 %v4086, 0.0
    %v5053 = vmax.f32 %v4089, 0.0
    %v5054 = vmax.f32 %v4094, 0.0
    %v5055 = vmax.f32 %v4097, 0.0
    %v5056 = vmax.f32 %v4102, 0.0
    %v5057 = vmax.f32 %v4105, 0.0
    %v5058 = vmax.f32 %v4110, 0.0
    %v5059 = vmax.f32 %v4113, 0.0
    %v5060 = vmax.f32 %v4118, 0.0
    %v5061 = vmax.f32 %v4121, 0.0
    %v5062 = vmax.f32 %v4126, 0.0
    %v5063 = vmax.f32 %v4129, 0.0
    %v5064 = vmax.f32 %v4134, 0.0
    %v5065 = vmax.f32 %v4137, 0.0
    %v5066 = vmax.f32 %v4142, 0.0
    %v5067 = vmax.f32 %v4145, 0.0
    %v5068 = vmax.f32 %v4150, 0.0
    %v5069 = vmax.f32 %v4153, 0.0
    %v5070 = vmax.f32 %v4158, 0.0
    %v5071 = vmax.f32 %v4161, 0.0
    %v5072 = vmax.f32 %v4166, 0.0
    %v5073 = vmax.f32 %v4169, 0.0
    %v5074 = vmax.f32 %v4174, 0.0
    %v5075 = vmax.f32 %v4177, 0.0
    %v5076 = vmax.f32 %v4182, 0.0
    %v5077 = vmax.f32 %v4185, 0.0
    %v5078 = vmax.f32 %v4190, 0.0
    %v5079 = vmax.f32 %v4193, 0.0
    %v5080 = vmax.f32 %v4198, 0.0
    %v5081 = vmax.f32 %v4201, 0.0
    %v5082 = vmax.f32 %v4206, 0.0
    %v5083 = vmax.f32 %v4209, 0.0
    %v5084 = vmax.f32 %v4214, 0.0
    %v5085 = vmax.f32 %v4217, 0.0
    %v5086 = vmax.f32 %v4222, 0.0
    %v5087 = vmax.f32 %v4225, 0.0
    %v5088 = vmax.f32 %v4230, 0.0
    %v5089 = vmax.f32 %v4233, 0.0
    %v5090 = vmax.f32 %v4238, 0.0
    %v5091 = vmax.f32 %v4241, 0.0
    %v5092 = vmax.f32 %v4246, 0.0
    %v5093 = vmax.f32 %v4249, 0.0
    %v5094 = vmax.f32 %v4254, 0.0
    %v5095 = vmax.f32 %v4257, 0.0
    %v5096 = vmax.f32 %v4262, 0.0
    %v5097 = vmax.f32 %v4265, 0.0
    %v5098 = vmax.f32 %v4270, 0.0
    %v5099 = vmax.f32 %v4273, 0.0
    %v5100 = vmax.f32 %v4278, 0.0
    %v5101 = vmax.f32 %v4281, 0.0
    %v5102 = vmax.f32 %v4286, 0.0
    %v5103 = vmax.f32 %v4289, 0.0
    %v5104 = vmax.f32 %v4294, 0.0
    %v5105 = vmax.f32 %v4297, 0.0
    %v5106 = vmax.f32 %v4302, 0.0
    %v5107 = vmax.f32 %v4305, 0.0
    %v5108 = vmax.f32 %v4310, 0.0
    %v5109 = vmax.f32 %v4313, 0.0
    %v5110 = vmax.f32 %v4318, 0.0
    %v5111 = vmax.f32 %v4321, 0.0
    %v5112 = vmax.f32 %v4326, 0.0
    %v5113 = vmax.f32 %v4329, 0.0
    %v5114 = vmax.f32 %v4334, 0.0
    %v5115 = vmax.f32 %v4337, 0.0
    %v5116 = vmax.f32 %v4342, 0.0
    %v5117 = vmax.f32 %v4345, 0.0
    %v5118 = vmax.f32 %v4350, 0.0
    %v5119 = vmax.f32 %v4353, 0.0
    %v5120 = vmax.f32 %v4358, 0.0
    %v5121 = vmax.f32 %v4361, 0.0
    %v5122 = vmax.f32 %v4366, 0.0
    %v5123 = vmax.f32 %v4369, 0.0
    %v5124 = vmax.f32 %v4374, 0.0
    %v5125 = vmax.f32 %v4377, 0.0
    %v5126 = vmax.f32 %v4382, 0.0
    %v5127 = vmax.f32 %v4385, 0.0
    %v5128 = vmax.f32 %v4390, 0.0
    %v5129 = vmax.f32 %v4393, 0.0
    %v5130 = vmax.f32 %v4398, 0.0
    %v5131 = vmax.f32 %v4401, 0.0
    %v5132 = vmax.f32 %v4406, 0.0
    %v5133 = vmax.f32 %v4409, 0.0
    %v5134 = vmax.f32 %v4414, 0.0
    %v5135 = vmax.f32 %v4417, 0.0
    %v5136 = vmax.f32 %v4422, 0.0
    %v5137 = vmax.f32 %v4425, 0.0
    %v5138 = vmax.f32 %v4430, 0.0
    %v5139 = vmax.f32 %v4433, 0.0
    %v5140 = vmax.f32 %v4438, 0.0
    %v5141 = vmax.f32 %v4441, 0.0
    %v5142 = vmax.f32 %v4446, 0.0
    %v5143 = vmax.f32 %v4449, 0.0
    %v5144 = vmax.f32 %v4454, 0.0
    %v5145 = vmax.f32 %v4457, 0.0
    %v5146 = vmax.f32 %v4462, 0.0
    %v5147 = vmax.f32 %v4465, 0.0
    %v5148 = vmax.f32 %v4470, 0.0
    %v5149 = vmax.f32 %v4473, 0.0
    %v5150 = vmax.f32 %v4478, 0.0
    %v5151 = vmax.f32 %v4481, 0.0
    %v5152 = vmax.f32 %v4486, 0.0
    %v5153 = vmax.f32 %v4489, 0.0
    %v5154 = vmax.f32 %v4494, 0.0
    %v5155 = vmax.f32 %v4497, 0.0
    %v5156 = vmax.f32 %v4502, 0.0
    %v5157 = vmax.f32 %v4505, 0.0
    %v5158 = vmax.f32 %v4510, 0.0
    %v5159 = vmax.f32 %v4513, 0.0
    %v5160 = vmax.f32 %v4518, 0.0
    %v5161 = vmax.f32 %v4521, 0.0
    %v5162 = vmax.f32 %v4526, 0.0
    %v5163 = vmax.f32 %v4529, 0.0
    %v5164 = vmax.f32 %v4534, 0.0
    %v5165 = vmax.f32 %v4537, 0.0
    %v5166 = vmax.f32 %v4542, 0.0
    %v5167 = vmax.f32 %v4545, 0.0
    %v5168 = vmax.f32 %v4550, 0.0
    %v5169 = vmax.f32 %v4553, 0.0
    %v5170 = vmax.f32 %v4558, 0.0
    %v5171 = vmax.f32 %v4561, 0.0
    %v5172 = vmax.f32 %v4566, 0.0
    %v5173 = vmax.f32 %v4569, 0.0
    %v5174 = vmax.f32 %v4574, 0.0
    %v5175 = vmax.f32 %v4577, 0.0
    %v5176 = vmax.f32 %v4582, 0.0
    %v5177 = vmax.f32 %v4585, 0.0
    %v5178 = vmax.f32 %v4590, 0.0
    %v5179 = vmax.f32 %v4593, 0.0
    %v5180 = vmax.f32 %v4598, 0.0
    %v5181 = vmax.f32 %v4601, 0.0
    %v5182 = vmax.f32 %v4606, 0.0
    %v5183 = vmax.f32 %v4609, 0.0
    %v5184 = vmax.f32 %v4614, 0.0
    %v5185 = vmax.f32 %v4617, 0.0
    %v5186 = vmax.f32 %v4622, 0.0
    %v5187 = vmax.f32 %v4625, 0.0
    %v5188 = vmax.f32 %v4630, 0.0
    %v5189 = vmax.f32 %v4633, 0.0
    %v5190 = vmax.f32 %v4638, 0.0
    %v5191 = vmax.f32 %v4641, 0.0
    %v5192 = vmax.f32 %v4646, 0.0
    %v5193 = vmax.f32 %v4649, 0.0
    %v5194 = vmax.f32 %v4654, 0.0
    %v5195 = vmax.f32 %v4657, 0.0
    %v5196 = vmax.f32 %v4662, 0.0
    %v5197 = vmax.f32 %v4665, 0.0
    %v5198 = vmax.f32 %v4670, 0.0
    %v5199 = vmax.f32 %v4673, 0.0
    %v5200 = vmax.f32 %v4678, 0.0
    %v5201 = vmax.f32 %v4681, 0.0
    %v5202 = vmax.f32 %v4686, 0.0
    %v5203 = vmax.f32 %v4689, 0.0
    %v5204 = vld [vmem:[%s3] sm:$0xff]
    %v5205 = vld [vmem:[%s3 + $0x8] sm:$0xff]
    %v5206 = vld [vmem:[%s3 + $0x10] sm:$0xff]
    %v5207 = vld [vmem:[%s3 + $0x18] sm:$0xff]
    %v5208 = vld [vmem:[%s3 + $0x20] sm:$0xff]
    %v5209 = vld [vmem:[%s3 + $0x28] sm:$0xff]
    %v5210 = vld [vmem:[%s3 + $0x30] sm:$0xff]
    %v5211 = vld [vmem:[%s3 + $0x38] sm:$0xff]
    %v5212 = vld [vmem:[%s3 + $0x40] sm:$0xff]
    %v5213 = vld [vmem:[%s3 + $0x48] sm:$0xff]
    %v5214 = vld [vmem:[%s3 + $0x50] sm:$0xff]
    %v5215 = vld [vmem:[%s3 + $0x58] sm:$0xff]
    %v5216 = vld [vmem:[%s3 + $0x60] sm:$0xff]
    %v5217 = vld [vmem:[%s3 + $0x68] sm:$0xff]
    %v5218 = vld [vmem:[%s3 + $0x70] sm:$0xff]
    %v5219 = vld [vmem:[%s3 + $0x78] sm:$0xff]
    %v5220 = vld [vmem:[%s3 + $0x80] sm:$0xff]
    %v5221 = vld [vmem:[%s3 + $0x88] sm:$0xff]
    %v5222 = vld [vmem:[%s3 + $0x90] sm:$0xff]
    %v5223 = vld [vmem:[%s3 + $0x98] sm:$0xff]
    %v5224 = vld [vmem:[%s3 + $0xa0] sm:$0xff]
    %v5225 = vld [vmem:[%s3 + $0xa8] sm:$0xff]
    %v5226 = vld [vmem:[%s3 + $0xb0] sm:$0xff]
    %v5227 = vld [vmem:[%s3 + $0xb8] sm:$0xff]
    %v5228 = vld [vmem:[%s3 + $0xc0] sm:$0xff]
    %v5229 = vld [vmem:[%s3 + $0xc8] sm:$0xff]
    %v5230 = vld [vmem:[%s3 + $0xd0] sm:$0xff]
    %v5231 = vld [vmem:[%s3 + $0xd8] sm:$0xff]
    %v5232 = vld [vmem:[%s3 + $0xe0] sm:$0xff]
    %v5233 = vld [vmem:[%s3 + $0xe8] sm:$0xff]
    %v5234 = vld [vmem:[%s3 + $0xf0] sm:$0xff]
    %v5235 = vld [vmem:[%s3 + $0xf8] sm:$0xff]
    %v5236 = vpack.c.bf16 %v4693, %v4692
    %v5237 = vpack.c.bf16 %v4695, %v4694
    %v5238 = vpack.c.bf16 %v4697, %v4696
    %v5239 = vpack.c.bf16 %v4699, %v4698
    %v5240 = vpack.c.bf16 %v4701, %v4700
    %v5241 = vpack.c.bf16 %v4703, %v4702
    %v5242 = vpack.c.bf16 %v4705, %v4704
    %v5243 = vpack.c.bf16 %v4707, %v4706
    %v5244 = vpack.c.bf16 %v4709, %v4708
    %v5245 = vpack.c.bf16 %v4711, %v4710
    %v5246 = vpack.c.bf16 %v4713, %v4712
    %v5247 = vpack.c.bf16 %v4715, %v4714
    %v5248 = vpack.c.bf16 %v4717, %v4716
    %v5249 = vpack.c.bf16 %v4719, %v4718
    %v5250 = vpack.c.bf16 %v4721, %v4720
    %v5251 = vpack.c.bf16 %v4723, %v4722
    %v5252 = vpack.c.bf16 %v4725, %v4724
    %v5253 = vpack.c.bf16 %v4727, %v4726
    %v5254 = vpack.c.bf16 %v4729, %v4728
    %v5255 = vpack.c.bf16 %v4731, %v4730
    %v5256 = vpack.c.bf16 %v4733, %v4732
    %v5257 = vpack.c.bf16 %v4735, %v4734
    %v5258 = vpack.c.bf16 %v4737, %v4736
    %v5259 = vpack.c.bf16 %v4739, %v4738
    %v5260 = vpack.c.bf16 %v4741, %v4740
    %v5261 = vpack.c.bf16 %v4743, %v4742
    %v5262 = vpack.c.bf16 %v4745, %v4744
    %v5263 = vpack.c.bf16 %v4747, %v4746
    %v5264 = vpack.c.bf16 %v4749, %v4748
    %v5265 = vpack.c.bf16 %v4751, %v4750
    %v5266 = vpack.c.bf16 %v4753, %v4752
    %v5267 = vpack.c.bf16 %v4755, %v4754
    %v5268 = vpack.c.bf16 %v4757, %v4756
    %v5269 = vpack.c.bf16 %v4759, %v4758
    %v5270 = vpack.c.bf16 %v4761, %v4760
    %v5271 = vpack.c.bf16 %v4763, %v4762
    %v5272 = vpack.c.bf16 %v4765, %v4764
    %v5273 = vpack.c.bf16 %v4767, %v4766
    %v5274 = vpack.c.bf16 %v4769, %v4768
    %v5275 = vpack.c.bf16 %v4771, %v4770
    %v5276 = vpack.c.bf16 %v4773, %v4772
    %v5277 = vpack.c.bf16 %v4775, %v4774
    %v5278 = vpack.c.bf16 %v4777, %v4776
    %v5279 = vpack.c.bf16 %v4779, %v4778
    %v5280 = vpack.c.bf16 %v4781, %v4780
    %v5281 = vpack.c.bf16 %v4783, %v4782
    %v5282 = vpack.c.bf16 %v4785, %v4784
    %v5283 = vpack.c.bf16 %v4787, %v4786
    %v5284 = vpack.c.bf16 %v4789, %v4788
    %v5285 = vpack.c.bf16 %v4791, %v4790
    %v5286 = vpack.c.bf16 %v4793, %v4792
    %v5287 = vpack.c.bf16 %v4795, %v4794
    %v5288 = vpack.c.bf16 %v4797, %v4796
    %v5289 = vpack.c.bf16 %v4799, %v4798
    %v5290 = vpack.c.bf16 %v4801, %v4800
    %v5291 = vpack.c.bf16 %v4803, %v4802
    %v5292 = vpack.c.bf16 %v4805, %v4804
    %v5293 = vpack.c.bf16 %v4807, %v4806
    %v5294 = vpack.c.bf16 %v4809, %v4808
    %v5295 = vpack.c.bf16 %v4811, %v4810
    %v5296 = vpack.c.bf16 %v4813, %v4812
    %v5297 = vpack.c.bf16 %v4815, %v4814
    %v5298 = vpack.c.bf16 %v4817, %v4816
    %v5299 = vpack.c.bf16 %v4819, %v4818
    %v5300 = vpack.c.bf16 %v4821, %v4820
    %v5301 = vpack.c.bf16 %v4823, %v4822
    %v5302 = vpack.c.bf16 %v4825, %v4824
    %v5303 = vpack.c.bf16 %v4827, %v4826
    %v5304 = vpack.c.bf16 %v4829, %v4828
    %v5305 = vpack.c.bf16 %v4831, %v4830
    %v5306 = vpack.c.bf16 %v4833, %v4832
    %v5307 = vpack.c.bf16 %v4835, %v4834
    %v5308 = vpack.c.bf16 %v4837, %v4836
    %v5309 = vpack.c.bf16 %v4839, %v4838
    %v5310 = vpack.c.bf16 %v4841, %v4840
    %v5311 = vpack.c.bf16 %v4843, %v4842
    %v5312 = vpack.c.bf16 %v4845, %v4844
    %v5313 = vpack.c.bf16 %v4847, %v4846
    %v5314 = vpack.c.bf16 %v4849, %v4848
    %v5315 = vpack.c.bf16 %v4851, %v4850
    %v5316 = vpack.c.bf16 %v4853, %v4852
    %v5317 = vpack.c.bf16 %v4855, %v4854
    %v5318 = vpack.c.bf16 %v4857, %v4856
    %v5319 = vpack.c.bf16 %v4859, %v4858
    %v5320 = vpack.c.bf16 %v4861, %v4860
    %v5321 = vpack.c.bf16 %v4863, %v4862
    %v5322 = vpack.c.bf16 %v4865, %v4864
    %v5323 = vpack.c.bf16 %v4867, %v4866
    %v5324 = vpack.c.bf16 %v4869, %v4868
    %v5325 = vpack.c.bf16 %v4871, %v4870
    %v5326 = vpack.c.bf16 %v4873, %v4872
    %v5327 = vpack.c.bf16 %v4875, %v4874
    %v5328 = vpack.c.bf16 %v4877, %v4876
    %v5329 = vpack.c.bf16 %v4879, %v4878
    %v5330 = vpack.c.bf16 %v4881, %v4880
    %v5331 = vpack.c.bf16 %v4883, %v4882
    %v5332 = vpack.c.bf16 %v4885, %v4884
    %v5333 = vpack.c.bf16 %v4887, %v4886
    %v5334 = vpack.c.bf16 %v4889, %v4888
    %v5335 = vpack.c.bf16 %v4891, %v4890
    %v5336 = vpack.c.bf16 %v4893, %v4892
    %v5337 = vpack.c.bf16 %v4895, %v4894
    %v5338 = vpack.c.bf16 %v4897, %v4896
    %v5339 = vpack.c.bf16 %v4899, %v4898
    %v5340 = vpack.c.bf16 %v4901, %v4900
    %v5341 = vpack.c.bf16 %v4903, %v4902
    %v5342 = vpack.c.bf16 %v4905, %v4904
    %v5343 = vpack.c.bf16 %v4907, %v4906
    %v5344 = vpack.c.bf16 %v4909, %v4908
    %v5345 = vpack.c.bf16 %v4911, %v4910
    %v5346 = vpack.c.bf16 %v4913, %v4912
    %v5347 = vpack.c.bf16 %v4915, %v4914
    %v5348 = vpack.c.bf16 %v4917, %v4916
    %v5349 = vpack.c.bf16 %v4919, %v4918
    %v5350 = vpack.c.bf16 %v4921, %v4920
    %v5351 = vpack.c.bf16 %v4923, %v4922
    %v5352 = vpack.c.bf16 %v4925, %v4924
    %v5353 = vpack.c.bf16 %v4927, %v4926
    %v5354 = vpack.c.bf16 %v4929, %v4928
    %v5355 = vpack.c.bf16 %v4931, %v4930
    %v5356 = vpack.c.bf16 %v4933, %v4932
    %v5357 = vpack.c.bf16 %v4935, %v4934
    %v5358 = vpack.c.bf16 %v4937, %v4936
    %v5359 = vpack.c.bf16 %v4939, %v4938
    %v5360 = vpack.c.bf16 %v4941, %v4940
    %v5361 = vpack.c.bf16 %v4943, %v4942
    %v5362 = vpack.c.bf16 %v4945, %v4944
    %v5363 = vpack.c.bf16 %v4947, %v4946
    %v5364 = vpack.c.bf16 %v4949, %v4948
    %v5365 = vpack.c.bf16 %v4951, %v4950
    %v5366 = vpack.c.bf16 %v4953, %v4952
    %v5367 = vpack.c.bf16 %v4955, %v4954
    %v5368 = vpack.c.bf16 %v4957, %v4956
    %v5369 = vpack.c.bf16 %v4959, %v4958
    %v5370 = vpack.c.bf16 %v4961, %v4960
    %v5371 = vpack.c.bf16 %v4963, %v4962
    %v5372 = vpack.c.bf16 %v4965, %v4964
    %v5373 = vpack.c.bf16 %v4967, %v4966
    %v5374 = vpack.c.bf16 %v4969, %v4968
    %v5375 = vpack.c.bf16 %v4971, %v4970
    %v5376 = vpack.c.bf16 %v4973, %v4972
    %v5377 = vpack.c.bf16 %v4975, %v4974
    %v5378 = vpack.c.bf16 %v4977, %v4976
    %v5379 = vpack.c.bf16 %v4979, %v4978
    %v5380 = vpack.c.bf16 %v4981, %v4980
    %v5381 = vpack.c.bf16 %v4983, %v4982
    %v5382 = vpack.c.bf16 %v4985, %v4984
    %v5383 = vpack.c.bf16 %v4987, %v4986
    %v5384 = vpack.c.bf16 %v4989, %v4988
    %v5385 = vpack.c.bf16 %v4991, %v4990
    %v5386 = vpack.c.bf16 %v4993, %v4992
    %v5387 = vpack.c.bf16 %v4995, %v4994
    %v5388 = vpack.c.bf16 %v4997, %v4996
    %v5389 = vpack.c.bf16 %v4999, %v4998
    %v5390 = vpack.c.bf16 %v5001, %v5000
    %v5391 = vpack.c.bf16 %v5003, %v5002
    %v5392 = vpack.c.bf16 %v5005, %v5004
    %v5393 = vpack.c.bf16 %v5007, %v5006
    %v5394 = vpack.c.bf16 %v5009, %v5008
    %v5395 = vpack.c.bf16 %v5011, %v5010
    %v5396 = vpack.c.bf16 %v5013, %v5012
    %v5397 = vpack.c.bf16 %v5015, %v5014
    %v5398 = vpack.c.bf16 %v5017, %v5016
    %v5399 = vpack.c.bf16 %v5019, %v5018
    %v5400 = vpack.c.bf16 %v5021, %v5020
    %v5401 = vpack.c.bf16 %v5023, %v5022
    %v5402 = vpack.c.bf16 %v5025, %v5024
    %v5403 = vpack.c.bf16 %v5027, %v5026
    %v5404 = vpack.c.bf16 %v5029, %v5028
    %v5405 = vpack.c.bf16 %v5031, %v5030
    %v5406 = vpack.c.bf16 %v5033, %v5032
    %v5407 = vpack.c.bf16 %v5035, %v5034
    %v5408 = vpack.c.bf16 %v5037, %v5036
    %v5409 = vpack.c.bf16 %v5039, %v5038
    %v5410 = vpack.c.bf16 %v5041, %v5040
    %v5411 = vpack.c.bf16 %v5043, %v5042
    %v5412 = vpack.c.bf16 %v5045, %v5044
    %v5413 = vpack.c.bf16 %v5047, %v5046
    %v5414 = vpack.c.bf16 %v5049, %v5048
    %v5415 = vpack.c.bf16 %v5051, %v5050
    %v5416 = vpack.c.bf16 %v5053, %v5052
    %v5417 = vpack.c.bf16 %v5055, %v5054
    %v5418 = vpack.c.bf16 %v5057, %v5056
    %v5419 = vpack.c.bf16 %v5059, %v5058
    %v5420 = vpack.c.bf16 %v5061, %v5060
    %v5421 = vpack.c.bf16 %v5063, %v5062
    %v5422 = vpack.c.bf16 %v5065, %v5064
    %v5423 = vpack.c.bf16 %v5067, %v5066
    %v5424 = vpack.c.bf16 %v5069, %v5068
    %v5425 = vpack.c.bf16 %v5071, %v5070
    %v5426 = vpack.c.bf16 %v5073, %v5072
    %v5427 = vpack.c.bf16 %v5075, %v5074
    %v5428 = vpack.c.bf16 %v5077, %v5076
    %v5429 = vpack.c.bf16 %v5079, %v5078
    %v5430 = vpack.c.bf16 %v5081, %v5080
    %v5431 = vpack.c.bf16 %v5083, %v5082
    %v5432 = vpack.c.bf16 %v5085, %v5084
    %v5433 = vpack.c.bf16 %v5087, %v5086
    %v5434 = vpack.c.bf16 %v5089, %v5088
    %v5435 = vpack.c.bf16 %v5091, %v5090
    %v5436 = vpack.c.bf16 %v5093, %v5092
    %v5437 = vpack.c.bf16 %v5095, %v5094
    %v5438 = vpack.c.bf16 %v5097, %v5096
    %v5439 = vpack.c.bf16 %v5099, %v5098
    %v5440 = vpack.c.bf16 %v5101, %v5100
    %v5441 = vpack.c.bf16 %v5103, %v5102
    %v5442 = vpack.c.bf16 %v5105, %v5104
    %v5443 = vpack.c.bf16 %v5107, %v5106
    %v5444 = vpack.c.bf16 %v5109, %v5108
    %v5445 = vpack.c.bf16 %v5111, %v5110
    %v5446 = vpack.c.bf16 %v5113, %v5112
    %v5447 = vpack.c.bf16 %v5115, %v5114
    %v5448 = vpack.c.bf16 %v5117, %v5116
    %v5449 = vpack.c.bf16 %v5119, %v5118
    %v5450 = vpack.c.bf16 %v5121, %v5120
    %v5451 = vpack.c.bf16 %v5123, %v5122
    %v5452 = vpack.c.bf16 %v5125, %v5124
    %v5453 = vpack.c.bf16 %v5127, %v5126
    %v5454 = vpack.c.bf16 %v5129, %v5128
    %v5455 = vpack.c.bf16 %v5131, %v5130
    %v5456 = vpack.c.bf16 %v5133, %v5132
    %v5457 = vpack.c.bf16 %v5135, %v5134
    %v5458 = vpack.c.bf16 %v5137, %v5136
    %v5459 = vpack.c.bf16 %v5139, %v5138
    %v5460 = vpack.c.bf16 %v5141, %v5140
    %v5461 = vpack.c.bf16 %v5143, %v5142
    %v5462 = vpack.c.bf16 %v5145, %v5144
    %v5463 = vpack.c.bf16 %v5147, %v5146
    %v5464 = vpack.c.bf16 %v5149, %v5148
    %v5465 = vpack.c.bf16 %v5151, %v5150
    %v5466 = vpack.c.bf16 %v5153, %v5152
    %v5467 = vpack.c.bf16 %v5155, %v5154
    %v5468 = vpack.c.bf16 %v5157, %v5156
    %v5469 = vpack.c.bf16 %v5159, %v5158
    %v5470 = vpack.c.bf16 %v5161, %v5160
    %v5471 = vpack.c.bf16 %v5163, %v5162
    %v5472 = vpack.c.bf16 %v5165, %v5164
    %v5473 = vpack.c.bf16 %v5167, %v5166
    %v5474 = vpack.c.bf16 %v5169, %v5168
    %v5475 = vpack.c.bf16 %v5171, %v5170
    %v5476 = vpack.c.bf16 %v5173, %v5172
    %v5477 = vpack.c.bf16 %v5175, %v5174
    %v5478 = vpack.c.bf16 %v5177, %v5176
    %v5479 = vpack.c.bf16 %v5179, %v5178
    %v5480 = vpack.c.bf16 %v5181, %v5180
    %v5481 = vpack.c.bf16 %v5183, %v5182
    %v5482 = vpack.c.bf16 %v5185, %v5184
    %v5483 = vpack.c.bf16 %v5187, %v5186
    %v5484 = vpack.c.bf16 %v5189, %v5188
    %v5485 = vpack.c.bf16 %v5191, %v5190
    %v5486 = vpack.c.bf16 %v5193, %v5192
    %v5487 = vpack.c.bf16 %v5195, %v5194
    %v5488 = vpack.c.bf16 %v5197, %v5196
    %v5489 = vpack.c.bf16 %v5199, %v5198
    %v5490 = vpack.c.bf16 %v5201, %v5200
    %v5491 = vpack.c.bf16 %v5203, %v5202
    %v5524 = vunpack.c.l.b16 %v5204
    %v5525 = vunpack.c.h.b16 %v5204
    %v5526 = vunpack.c.l.b16 %v5205
    %v5527 = vunpack.c.h.b16 %v5205
    %v5528 = vunpack.c.l.b16 %v5206
    %v5529 = vunpack.c.h.b16 %v5206
    %v5530 = vunpack.c.l.b16 %v5207
    %v5531 = vunpack.c.h.b16 %v5207
    %v5532 = vunpack.c.l.b16 %v5208
    %v5533 = vunpack.c.h.b16 %v5208
    %v5534 = vunpack.c.l.b16 %v5209
    %v5535 = vunpack.c.h.b16 %v5209
    %v5536 = vunpack.c.l.b16 %v5210
    %v5537 = vunpack.c.h.b16 %v5210
    %v5538 = vunpack.c.l.b16 %v5211
    %v5539 = vunpack.c.h.b16 %v5211
    %v5540 = vunpack.c.l.b16 %v5212
    %v5541 = vunpack.c.h.b16 %v5212
    %v5542 = vunpack.c.l.b16 %v5213
    %v5543 = vunpack.c.h.b16 %v5213
    %v5544 = vunpack.c.l.b16 %v5214
    %v5545 = vunpack.c.h.b16 %v5214
    %v5546 = vunpack.c.l.b16 %v5215
    %v5547 = vunpack.c.h.b16 %v5215
    %v5548 = vunpack.c.l.b16 %v5216
    %v5549 = vunpack.c.h.b16 %v5216
    %v5550 = vunpack.c.l.b16 %v5217
    %v5551 = vunpack.c.h.b16 %v5217
    %v5552 = vunpack.c.l.b16 %v5218
    %v5553 = vunpack.c.h.b16 %v5218
    %v5554 = vunpack.c.l.b16 %v5219
    %v5555 = vunpack.c.h.b16 %v5219
    %v5556 = vunpack.c.l.b16 %v5220
    %v5557 = vunpack.c.h.b16 %v5220
    %v5558 = vunpack.c.l.b16 %v5221
    %v5559 = vunpack.c.h.b16 %v5221
    %v5560 = vunpack.c.l.b16 %v5222
    %v5561 = vunpack.c.h.b16 %v5222
    %v5562 = vunpack.c.l.b16 %v5223
    %v5563 = vunpack.c.h.b16 %v5223
    %v5564 = vunpack.c.l.b16 %v5224
    %v5565 = vunpack.c.h.b16 %v5224
    %v5566 = vunpack.c.l.b16 %v5225
    %v5567 = vunpack.c.h.b16 %v5225
    %v5568 = vunpack.c.l.b16 %v5226
    %v5569 = vunpack.c.h.b16 %v5226
    %v5570 = vunpack.c.l.b16 %v5227
    %v5571 = vunpack.c.h.b16 %v5227
    %v5572 = vunpack.c.l.b16 %v5228
    %v5573 = vunpack.c.h.b16 %v5228
    %v5574 = vunpack.c.l.b16 %v5229
    %v5575 = vunpack.c.h.b16 %v5229
    %v5576 = vunpack.c.l.b16 %v5230
    %v5577 = vunpack.c.h.b16 %v5230
    %v5578 = vunpack.c.l.b16 %v5231
    %v5579 = vunpack.c.h.b16 %v5231
    %v5580 = vunpack.c.l.b16 %v5232
    %v5581 = vunpack.c.h.b16 %v5232
    %v5582 = vunpack.c.l.b16 %v5233
    %v5583 = vunpack.c.h.b16 %v5233
    %v5584 = vunpack.c.l.b16 %v5234
    %v5585 = vunpack.c.h.b16 %v5234
    %v5586 = vunpack.c.l.b16 %v5235
    %v5587 = vunpack.c.h.b16 %v5235
    %v5588 = vpack.c.b16 %v5556, %v5524
    %v5589 = vpack.c.b16 %v5557, %v5525
    %v5590 = vpack.c.b16 %v5558, %v5526
    %v5591 = vpack.c.b16 %v5559, %v5527
    %v5592 = vpack.c.b16 %v5560, %v5528
    %v5593 = vpack.c.b16 %v5561, %v5529
    %v5594 = vpack.c.b16 %v5562, %v5530
    %v5595 = vpack.c.b16 %v5563, %v5531
    %v5596 = vpack.c.b16 %v5564, %v5532
    %v5597 = vpack.c.b16 %v5565, %v5533
    %v5598 = vpack.c.b16 %v5566, %v5534
    %v5599 = vpack.c.b16 %v5567, %v5535
    %v5600 = vpack.c.b16 %v5568, %v5536
    %v5601 = vpack.c.b16 %v5569, %v5537
    %v5602 = vpack.c.b16 %v5570, %v5538
    %v5603 = vpack.c.b16 %v5571, %v5539
    %v5604 = vpack.c.b16 %v5572, %v5540
    %v5605 = vpack.c.b16 %v5573, %v5541
    %v5606 = vpack.c.b16 %v5574, %v5542
    %v5607 = vpack.c.b16 %v5575, %v5543
    %v5608 = vpack.c.b16 %v5576, %v5544
    %v5609 = vpack.c.b16 %v5577, %v5545
    %v5610 = vpack.c.b16 %v5578, %v5546
    %v5611 = vpack.c.b16 %v5579, %v5547
    %v5612 = vpack.c.b16 %v5580, %v5548
    %v5613 = vpack.c.b16 %v5581, %v5549
    %v5614 = vpack.c.b16 %v5582, %v5550
    %v5615 = vpack.c.b16 %v5583, %v5551
    %v5616 = vpack.c.b16 %v5584, %v5552
    %v5617 = vpack.c.b16 %v5585, %v5553
    %v5618 = vpack.c.b16 %v5586, %v5554
    %v5619 = vpack.c.b16 %v5587, %v5555
    %5652 = vmatprep.subr.bf16.mxu0 0
    %5653 = vmatpush1.bf16.msra.mxu0 %v5236
    %5654 = vmatprep.subr.bf16.mxu0 0
    %5655 = vmatpush1.bf16.msra.mxu0 %v5237
    %5656 = vmatprep.subr.bf16.mxu0 0
    %5657 = vmatpush1.bf16.msra.mxu0 %v5238
    %5658 = vmatprep.subr.bf16.mxu0 0
    %5659 = vmatpush1.bf16.msra.mxu0 %v5239
    %5660 = vmatprep.subr.bf16.mxu0 0
    %5661 = vmatpush1.bf16.msra.mxu0 %v5240
    %5662 = vmatprep.subr.bf16.mxu0 0
    %5663 = vmatpush1.bf16.msra.mxu0 %v5241
    %5664 = vmatprep.subr.bf16.mxu0 0
    %5665 = vmatpush1.bf16.msra.mxu0 %v5242
    %5666 = vmatprep.subr.bf16.mxu0 0
    %5667 = vmatpush1.bf16.msra.mxu0 %v5243
    %5668 = vmatprep.subr.bf16.mxu0 0
    %5669 = vmatpush1.bf16.msra.mxu0 %v5244
    %5670 = vmatprep.subr.bf16.mxu0 0
    %5671 = vmatpush1.bf16.msra.mxu0 %v5245
    %5672 = vmatprep.subr.bf16.mxu0 0
    %5673 = vmatpush1.bf16.msra.mxu0 %v5246
    %5674 = vmatprep.subr.bf16.mxu0 0
    %5675 = vmatpush1.bf16.msra.mxu0 %v5247
    %5676 = vmatprep.subr.bf16.mxu0 0
    %5677 = vmatpush1.bf16.msra.mxu0 %v5248
    %5678 = vmatprep.subr.bf16.mxu0 0
    %5679 = vmatpush1.bf16.msra.mxu0 %v5249
    %5680 = vmatprep.subr.bf16.mxu0 0
    %5681 = vmatpush1.bf16.msra.mxu0 %v5250
    %5682 = vmatprep.subr.bf16.mxu0 0
    %5683 = vmatpush1.bf16.msra.mxu0 %v5251
    %5684 = vmatprep.mubr.bf16.mxu0 %v5589
    %5685 = vmatmul.mubr.bf16.gmra.mrb[0].mxu0 %v5588
    %v5686 = vpop.f32.mrb[0].mxu0
    %v5687 = vadd.f32 0.0, %v5686
    %v5688 = vpop.f32.mrb[0].mxu0
    %v5689 = vpop.f32.mrb[0].mxu0
    %v5690 = vadd.f32 0.0, %v5689
    %v5691 = vpop.f32.mrb[0].mxu0
    %5692 = vdwg.mxu0
    %5693 = vmatprep.subr.bf16.mxu0 0
    %5694 = vmatpush1.bf16.msra.mxu0 %v5252
    %5695 = vmatprep.subr.bf16.mxu0 0
    %5696 = vmatpush1.bf16.msra.mxu0 %v5253
    %5697 = vmatprep.subr.bf16.mxu0 0
    %5698 = vmatpush1.bf16.msra.mxu0 %v5254
    %5699 = vmatprep.subr.bf16.mxu0 0
    %5700 = vmatpush1.bf16.msra.mxu0 %v5255
    %5701 = vmatprep.subr.bf16.mxu0 0
    %5702 = vmatpush1.bf16.msra.mxu0 %v5256
    %5703 = vmatprep.subr.bf16.mxu0 0
    %5704 = vmatpush1.bf16.msra.mxu0 %v5257
    %5705 = vmatprep.subr.bf16.mxu0 0
    %5706 = vmatpush1.bf16.msra.mxu0 %v5258
    %5707 = vmatprep.subr.bf16.mxu0 0
    %5708 = vmatpush1.bf16.msra.mxu0 %v5259
    %5709 = vmatprep.subr.bf16.mxu0 0
    %5710 = vmatpush1.bf16.msra.mxu0 %v5260
    %5711 = vmatprep.subr.bf16.mxu0 0
    %5712 = vmatpush1.bf16.msra.mxu0 %v5261
    %5713 = vmatprep.subr.bf16.mxu0 0
    %5714 = vmatpush1.bf16.msra.mxu0 %v5262
    %5715 = vmatprep.subr.bf16.mxu0 0
    %5716 = vmatpush1.bf16.msra.mxu0 %v5263
    %5717 = vmatprep.subr.bf16.mxu0 0
    %5718 = vmatpush1.bf16.msra.mxu0 %v5264
    %5719 = vmatprep.subr.bf16.mxu0 0
    %5720 = vmatpush1.bf16.msra.mxu0 %v5265
    %5721 = vmatprep.subr.bf16.mxu0 0
    %5722 = vmatpush1.bf16.msra.mxu0 %v5266
    %5723 = vmatprep.subr.bf16.mxu0 0
    %5724 = vmatpush1.bf16.msra.mxu0 %v5267
    %5725 = vmatprep.mubr.bf16.mxu0 %v5591
    %5726 = vmatmul.mubr.bf16.gmra.mrb[0].mxu0 %v5590
    %v5727 = vpop.f32.mrb[0].mxu0
    %v5728 = vadd.f32 %v5687, %v5727
    %v5729 = vpop.f32.mrb[0].mxu0
    %v5730 = vpop.f32.mrb[0].mxu0
    %v5731 = vadd.f32 %v5690, %v5730
    %v5732 = vpop.f32.mrb[0].mxu0
    %5733 = vdwg.mxu0
    %5734 = vmatprep.subr.bf16.mxu0 0
    %5735 = vmatpush1.bf16.msra.mxu0 %v5268
    %5736 = vmatprep.subr.bf16.mxu0 0
    %5737 = vmatpush1.bf16.msra.mxu0 %v5269
    %5738 = vmatprep.subr.bf16.mxu0 0
    %5739 = vmatpush1.bf16.msra.mxu0 %v5270
    %5740 = vmatprep.subr.bf16.mxu0 0
    %5741 = vmatpush1.bf16.msra.mxu0 %v5271
    %5742 = vmatprep.subr.bf16.mxu0 0
    %5743 = vmatpush1.bf16.msra.mxu0 %v5272
    %5744 = vmatprep.subr.bf16.mxu0 0
    %5745 = vmatpush1.bf16.msra.mxu0 %v5273
    %5746 = vmatprep.subr.bf16.mxu0 0
    %5747 = vmatpush1.bf16.msra.mxu0 %v5274
    %5748 = vmatprep.subr.bf16.mxu0 0
    %5749 = vmatpush1.bf16.msra.mxu0 %v5275
    %5750 = vmatprep.subr.bf16.mxu0 0
    %5751 = vmatpush1.bf16.msra.mxu0 %v5276
    %5752 = vmatprep.subr.bf16.mxu0 0
    %5753 = vmatpush1.bf16.msra.mxu0 %v5277
    %5754 = vmatprep.subr.bf16.mxu0 0
    %5755 = vmatpush1.bf16.msra.mxu0 %v5278
    %5756 = vmatprep.subr.bf16.mxu0 0
    %5757 = vmatpush1.bf16.msra.mxu0 %v5279
    %5758 = vmatprep.subr.bf16.mxu0 0
    %5759 = vmatpush1.bf16.msra.mxu0 %v5280
    %5760 = vmatprep.subr.bf16.mxu0 0
    %5761 = vmatpush1.bf16.msra.mxu0 %v5281
    %5762 = vmatprep.subr.bf16.mxu0 0
    %5763 = vmatpush1.bf16.msra.mxu0 %v5282
    %5764 = vmatprep.subr.bf16.mxu0 0
    %5765 = vmatpush1.bf16.msra.mxu0 %v5283
    %5766 = vmatprep.mubr.bf16.mxu0 %v5593
    %5767 = vmatmul.mubr.bf16.gmra.mrb[0].mxu0 %v5592
    %v5768 = vpop.f32.mrb[0].mxu0
    %v5769 = vadd.f32 %v5728, %v5768
    %v5770 = vpop.f32.mrb[0].mxu0
    %v5771 = vpop.f32.mrb[0].mxu0
    %v5772 = vadd.f32 %v5731, %v5771
    %v5773 = vpop.f32.mrb[0].mxu0
    %5774 = vdwg.mxu0
    %5775 = vmatprep.subr.bf16.mxu0 0
    %5776 = vmatpush1.bf16.msra.mxu0 %v5284
    %5777 = vmatprep.subr.bf16.mxu0 0
    %5778 = vmatpush1.bf16.msra.mxu0 %v5285
    %5779 = vmatprep.subr.bf16.mxu0 0
    %5780 = vmatpush1.bf16.msra.mxu0 %v5286
    %5781 = vmatprep.subr.bf16.mxu0 0
    %5782 = vmatpush1.bf16.msra.mxu0 %v5287
    %5783 = vmatprep.subr.bf16.mxu0 0
    %5784 = vmatpush1.bf16.msra.mxu0 %v5288
    %5785 = vmatprep.subr.bf16.mxu0 0
    %5786 = vmatpush1.bf16.msra.mxu0 %v5289
    %5787 = vmatprep.subr.bf16.mxu0 0
    %5788 = vmatpush1.bf16.msra.mxu0 %v5290
    %5789 = vmatprep.subr.bf16.mxu0 0
    %5790 = vmatpush1.bf16.msra.mxu0 %v5291
    %5791 = vmatprep.subr.bf16.mxu0 0
    %5792 = vmatpush1.bf16.msra.mxu0 %v5292
    %5793 = vmatprep.subr.bf16.mxu0 0
    %5794 = vmatpush1.bf16.msra.mxu0 %v5293
    %5795 = vmatprep.subr.bf16.mxu0 0
    %5796 = vmatpush1.bf16.msra.mxu0 %v5294
    %5797 = vmatprep.subr.bf16.mxu0 0
    %5798 = vmatpush1.bf16.msra.mxu0 %v5295
    %5799 = vmatprep.subr.bf16.mxu0 0
    %5800 = vmatpush1.bf16.msra.mxu0 %v5296
    %5801 = vmatprep.subr.bf16.mxu0 0
    %5802 = vmatpush1.bf16.msra.mxu0 %v5297
    %5803 = vmatprep.subr.bf16.mxu0 0
    %5804 = vmatpush1.bf16.msra.mxu0 %v5298
    %5805 = vmatprep.subr.bf16.mxu0 0
    %5806 = vmatpush1.bf16.msra.mxu0 %v5299
    %5807 = vmatprep.mubr.bf16.mxu0 %v5595
    %5808 = vmatmul.mubr.bf16.gmra.mrb[0].mxu0 %v5594
    %v5809 = vpop.f32.mrb[0].mxu0
    %v5810 = vadd.f32 %v5769, %v5809
    %v5811 = vpop.f32.mrb[0].mxu0
    %v5812 = vpop.f32.mrb[0].mxu0
    %v5813 = vadd.f32 %v5772, %v5812
    %v5814 = vpop.f32.mrb[0].mxu0
    %5815 = vdwg.mxu0
    %5816 = vmatprep.subr.bf16.mxu0 0
    %5817 = vmatpush1.bf16.msra.mxu0 %v5300
    %5818 = vmatprep.subr.bf16.mxu0 0
    %5819 = vmatpush1.bf16.msra.mxu0 %v5301
    %5820 = vmatprep.subr.bf16.mxu0 0
    %5821 = vmatpush1.bf16.msra.mxu0 %v5302
    %5822 = vmatprep.subr.bf16.mxu0 0
    %5823 = vmatpush1.bf16.msra.mxu0 %v5303
    %5824 = vmatprep.subr.bf16.mxu0 0
    %5825 = vmatpush1.bf16.msra.mxu0 %v5304
    %5826 = vmatprep.subr.bf16.mxu0 0
    %5827 = vmatpush1.bf16.msra.mxu0 %v5305
    %5828 = vmatprep.subr.bf16.mxu0 0
    %5829 = vmatpush1.bf16.msra.mxu0 %v5306
    %5830 = vmatprep.subr.bf16.mxu0 0
    %5831 = vmatpush1.bf16.msra.mxu0 %v5307
    %5832 = vmatprep.subr.bf16.mxu0 0
    %5833 = vmatpush1.bf16.msra.mxu0 %v5308
    %5834 = vmatprep.subr.bf16.mxu0 0
    %5835 = vmatpush1.bf16.msra.mxu0 %v5309
    %5836 = vmatprep.subr.bf16.mxu0 0
    %5837 = vmatpush1.bf16.msra.mxu0 %v5310
    %5838 = vmatprep.subr.bf16.mxu0 0
    %5839 = vmatpush1.bf16.msra.mxu0 %v5311
    %5840 = vmatprep.subr.bf16.mxu0 0
    %5841 = vmatpush1.bf16.msra.mxu0 %v5312
    %5842 = vmatprep.subr.bf16.mxu0 0
    %5843 = vmatpush1.bf16.msra.mxu0 %v5313
    %5844 = vmatprep.subr.bf16.mxu0 0
    %5845 = vmatpush1.bf16.msra.mxu0 %v5314
    %5846 = vmatprep.subr.bf16.mxu0 0
    %5847 = vmatpush1.bf16.msra.mxu0 %v5315
    %5848 = vmatprep.mubr.bf16.mxu0 %v5597
    %5849 = vmatmul.mubr.bf16.gmra.mrb[0].mxu0 %v5596
    %v5850 = vpop.f32.mrb[0].mxu0
    %v5851 = vadd.f32 %v5810, %v5850
    %v5852 = vpop.f32.mrb[0].mxu0
    %v5853 = vpop.f32.mrb[0].mxu0
    %v5854 = vadd.f32 %v5813, %v5853
    %v5855 = vpop.f32.mrb[0].mxu0
    %5856 = vdwg.mxu0
    %5857 = vmatprep.subr.bf16.mxu0 0
    %5858 = vmatpush1.bf16.msra.mxu0 %v5316
    %5859 = vmatprep.subr.bf16.mxu0 0
    %5860 = vmatpush1.bf16.msra.mxu0 %v5317
    %5861 = vmatprep.subr.bf16.mxu0 0
    %5862 = vmatpush1.bf16.msra.mxu0 %v5318
    %5863 = vmatprep.subr.bf16.mxu0 0
    %5864 = vmatpush1.bf16.msra.mxu0 %v5319
    %5865 = vmatprep.subr.bf16.mxu0 0
    %5866 = vmatpush1.bf16.msra.mxu0 %v5320
    %5867 = vmatprep.subr.bf16.mxu0 0
    %5868 = vmatpush1.bf16.msra.mxu0 %v5321
    %5869 = vmatprep.subr.bf16.mxu0 0
    %5870 = vmatpush1.bf16.msra.mxu0 %v5322
    %5871 = vmatprep.subr.bf16.mxu0 0
    %5872 = vmatpush1.bf16.msra.mxu0 %v5323
    %5873 = vmatprep.subr.bf16.mxu0 0
    %5874 = vmatpush1.bf16.msra.mxu0 %v5324
    %5875 = vmatprep.subr.bf16.mxu0 0
    %5876 = vmatpush1.bf16.msra.mxu0 %v5325
    %5877 = vmatprep.subr.bf16.mxu0 0
    %5878 = vmatpush1.bf16.msra.mxu0 %v5326
    %5879 = vmatprep.subr.bf16.mxu0 0
    %5880 = vmatpush1.bf16.msra.mxu0 %v5327
    %5881 = vmatprep.subr.bf16.mxu0 0
    %5882 = vmatpush1.bf16.msra.mxu0 %v5328
    %5883 = vmatprep.subr.bf16.mxu0 0
    %5884 = vmatpush1.bf16.msra.mxu0 %v5329
    %5885 = vmatprep.subr.bf16.mxu0 0
    %5886 = vmatpush1.bf16.msra.mxu0 %v5330
    %5887 = vmatprep.subr.bf16.mxu0 0
    %5888 = vmatpush1.bf16.msra.mxu0 %v5331
    %5889 = vmatprep.mubr.bf16.mxu0 %v5599
    %5890 = vmatmul.mubr.bf16.gmra.mrb[0].mxu0 %v5598
    %v5891 = vpop.f32.mrb[0].mxu0
    %v5892 = vadd.f32 %v5851, %v5891
    %v5893 = vpop.f32.mrb[0].mxu0
    %v5894 = vpop.f32.mrb[0].mxu0
    %v5895 = vadd.f32 %v5854, %v5894
    %v5896 = vpop.f32.mrb[0].mxu0
    %5897 = vdwg.mxu0
    %5898 = vmatprep.subr.bf16.mxu0 0
    %5899 = vmatpush1.bf16.msra.mxu0 %v5332
    %5900 = vmatprep.subr.bf16.mxu0 0
    %5901 = vmatpush1.bf16.msra.mxu0 %v5333
    %5902 = vmatprep.subr.bf16.mxu0 0
    %5903 = vmatpush1.bf16.msra.mxu0 %v5334
    %5904 = vmatprep.subr.bf16.mxu0 0
    %5905 = vmatpush1.bf16.msra.mxu0 %v5335
    %5906 = vmatprep.subr.bf16.mxu0 0
    %5907 = vmatpush1.bf16.msra.mxu0 %v5336
    %5908 = vmatprep.subr.bf16.mxu0 0
    %5909 = vmatpush1.bf16.msra.mxu0 %v5337
    %5910 = vmatprep.subr.bf16.mxu0 0
    %5911 = vmatpush1.bf16.msra.mxu0 %v5338
    %5912 = vmatprep.subr.bf16.mxu0 0
    %5913 = vmatpush1.bf16.msra.mxu0 %v5339
    %5914 = vmatprep.subr.bf16.mxu0 0
    %5915 = vmatpush1.bf16.msra.mxu0 %v5340
    %5916 = vmatprep.subr.bf16.mxu0 0
    %5917 = vmatpush1.bf16.msra.mxu0 %v5341
    %5918 = vmatprep.subr.bf16.mxu0 0
    %5919 = vmatpush1.bf16.msra.mxu0 %v5342
    %5920 = vmatprep.subr.bf16.mxu0 0
    %5921 = vmatpush1.bf16.msra.mxu0 %v5343
    %5922 = vmatprep.subr.bf16.mxu0 0
    %5923 = vmatpush1.bf16.msra.mxu0 %v5344
    %5924 = vmatprep.subr.bf16.mxu0 0
    %5925 = vmatpush1.bf16.msra.mxu0 %v5345
    %5926 = vmatprep.subr.bf16.mxu0 0
    %5927 = vmatpush1.bf16.msra.mxu0 %v5346
    %5928 = vmatprep.subr.bf16.mxu0 0
    %5929 = vmatpush1.bf16.msra.mxu0 %v5347
    %5930 = vmatprep.mubr.bf16.mxu0 %v5601
    %5931 = vmatmul.mubr.bf16.gmra.mrb[0].mxu0 %v5600
    %v5932 = vpop.f32.mrb[0].mxu0
    %v5933 = vadd.f32 %v5892, %v5932
    %v5934 = vpop.f32.mrb[0].mxu0
    %v5935 = vpop.f32.mrb[0].mxu0
    %v5936 = vadd.f32 %v5895, %v5935
    %v5937 = vpop.f32.mrb[0].mxu0
    %5938 = vdwg.mxu0
    %5939 = vmatprep.subr.bf16.mxu0 0
    %5940 = vmatpush1.bf16.msra.mxu0 %v5348
    %5941 = vmatprep.subr.bf16.mxu0 0
    %5942 = vmatpush1.bf16.msra.mxu0 %v5349
    %5943 = vmatprep.subr.bf16.mxu0 0
    %5944 = vmatpush1.bf16.msra.mxu0 %v5350
    %5945 = vmatprep.subr.bf16.mxu0 0
    %5946 = vmatpush1.bf16.msra.mxu0 %v5351
    %5947 = vmatprep.subr.bf16.mxu0 0
    %5948 = vmatpush1.bf16.msra.mxu0 %v5352
    %5949 = vmatprep.subr.bf16.mxu0 0
    %5950 = vmatpush1.bf16.msra.mxu0 %v5353
    %5951 = vmatprep.subr.bf16.mxu0 0
    %5952 = vmatpush1.bf16.msra.mxu0 %v5354
    %5953 = vmatprep.subr.bf16.mxu0 0
    %5954 = vmatpush1.bf16.msra.mxu0 %v5355
    %5955 = vmatprep.subr.bf16.mxu0 0
    %5956 = vmatpush1.bf16.msra.mxu0 %v5356
    %5957 = vmatprep.subr.bf16.mxu0 0
    %5958 = vmatpush1.bf16.msra.mxu0 %v5357
    %5959 = vmatprep.subr.bf16.mxu0 0
    %5960 = vmatpush1.bf16.msra.mxu0 %v5358
    %5961 = vmatprep.subr.bf16.mxu0 0
    %5962 = vmatpush1.bf16.msra.mxu0 %v5359
    %5963 = vmatprep.subr.bf16.mxu0 0
    %5964 = vmatpush1.bf16.msra.mxu0 %v5360
    %5965 = vmatprep.subr.bf16.mxu0 0
    %5966 = vmatpush1.bf16.msra.mxu0 %v5361
    %5967 = vmatprep.subr.bf16.mxu0 0
    %5968 = vmatpush1.bf16.msra.mxu0 %v5362
    %5969 = vmatprep.subr.bf16.mxu0 0
    %5970 = vmatpush1.bf16.msra.mxu0 %v5363
    %5971 = vmatprep.mubr.bf16.mxu0 %v5603
    %5972 = vmatmul.mubr.bf16.gmra.mrb[0].mxu0 %v5602
    %v5973 = vpop.f32.mrb[0].mxu0
    %v5974 = vadd.f32 %v5933, %v5973
    %v5975 = vpop.f32.mrb[0].mxu0
    %v5976 = vpop.f32.mrb[0].mxu0
    %v5977 = vadd.f32 %v5936, %v5976
    %v5978 = vpop.f32.mrb[0].mxu0
    %5979 = vdwg.mxu0
    %5980 = vmatprep.subr.bf16.mxu0 0
    %5981 = vmatpush1.bf16.msra.mxu0 %v5364
    %5982 = vmatprep.subr.bf16.mxu0 0
    %5983 = vmatpush1.bf16.msra.mxu0 %v5365
    %5984 = vmatprep.subr.bf16.mxu0 0
    %5985 = vmatpush1.bf16.msra.mxu0 %v5366
    %5986 = vmatprep.subr.bf16.mxu0 0
    %5987 = vmatpush1.bf16.msra.mxu0 %v5367
    %5988 = vmatprep.subr.bf16.mxu0 0
    %5989 = vmatpush1.bf16.msra.mxu0 %v5368
    %5990 = vmatprep.subr.bf16.mxu0 0
    %5991 = vmatpush1.bf16.msra.mxu0 %v5369
    %5992 = vmatprep.subr.bf16.mxu0 0
    %5993 = vmatpush1.bf16.msra.mxu0 %v5370
    %5994 = vmatprep.subr.bf16.mxu0 0
    %5995 = vmatpush1.bf16.msra.mxu0 %v5371
    %5996 = vmatprep.subr.bf16.mxu0 0
    %5997 = vmatpush1.bf16.msra.mxu0 %v5372
    %5998 = vmatprep.subr.bf16.mxu0 0
    %5999 = vmatpush1.bf16.msra.mxu0 %v5373
    %6000 = vmatprep.subr.bf16.mxu0 0
    %6001 = vmatpush1.bf16.msra.mxu0 %v5374
    %6002 = vmatprep.subr.bf16.mxu0 0
    %6003 = vmatpush1.bf16.msra.mxu0 %v5375
    %6004 = vmatprep.subr.bf16.mxu0 0
    %6005 = vmatpush1.bf16.msra.mxu0 %v5376
    %6006 = vmatprep.subr.bf16.mxu0 0
    %6007 = vmatpush1.bf16.msra.mxu0 %v5377
    %6008 = vmatprep.subr.bf16.mxu0 0
    %6009 = vmatpush1.bf16.msra.mxu0 %v5378
    %6010 = vmatprep.subr.bf16.mxu0 0
    %6011 = vmatpush1.bf16.msra.mxu0 %v5379
    %6012 = vmatprep.mubr.bf16.mxu0 %v5605
    %6013 = vmatmul.mubr.bf16.gmra.mrb[0].mxu0 %v5604
    %v6014 = vpop.f32.mrb[0].mxu0
    %v6015 = vadd.f32 %v5974, %v6014
    %v6016 = vpop.f32.mrb[0].mxu0
    %v6017 = vpop.f32.mrb[0].mxu0
    %v6018 = vadd.f32 %v5977, %v6017
    %v6019 = vpop.f32.mrb[0].mxu0
    %6020 = vdwg.mxu0
    %6021 = vmatprep.subr.bf16.mxu0 0
    %6022 = vmatpush1.bf16.msra.mxu0 %v5380
    %6023 = vmatprep.subr.bf16.mxu0 0
    %6024 = vmatpush1.bf16.msra.mxu0 %v5381
    %6025 = vmatprep.subr.bf16.mxu0 0
    %6026 = vmatpush1.bf16.msra.mxu0 %v5382
    %6027 = vmatprep.subr.bf16.mxu0 0
    %6028 = vmatpush1.bf16.msra.mxu0 %v5383
    %6029 = vmatprep.subr.bf16.mxu0 0
    %6030 = vmatpush1.bf16.msra.mxu0 %v5384
    %6031 = vmatprep.subr.bf16.mxu0 0
    %6032 = vmatpush1.bf16.msra.mxu0 %v5385
    %6033 = vmatprep.subr.bf16.mxu0 0
    %6034 = vmatpush1.bf16.msra.mxu0 %v5386
    %6035 = vmatprep.subr.bf16.mxu0 0
    %6036 = vmatpush1.bf16.msra.mxu0 %v5387
    %6037 = vmatprep.subr.bf16.mxu0 0
    %6038 = vmatpush1.bf16.msra.mxu0 %v5388
    %6039 = vmatprep.subr.bf16.mxu0 0
    %6040 = vmatpush1.bf16.msra.mxu0 %v5389
    %6041 = vmatprep.subr.bf16.mxu0 0
    %6042 = vmatpush1.bf16.msra.mxu0 %v5390
    %6043 = vmatprep.subr.bf16.mxu0 0
    %6044 = vmatpush1.bf16.msra.mxu0 %v5391
    %6045 = vmatprep.subr.bf16.mxu0 0
    %6046 = vmatpush1.bf16.msra.mxu0 %v5392
    %6047 = vmatprep.subr.bf16.mxu0 0
    %6048 = vmatpush1.bf16.msra.mxu0 %v5393
    %6049 = vmatprep.subr.bf16.mxu0 0
    %6050 = vmatpush1.bf16.msra.mxu0 %v5394
    %6051 = vmatprep.subr.bf16.mxu0 0
    %6052 = vmatpush1.bf16.msra.mxu0 %v5395
    %6053 = vmatprep.mubr.bf16.mxu0 %v5607
    %6054 = vmatmul.mubr.bf16.gmra.mrb[0].mxu0 %v5606
    %v6055 = vpop.f32.mrb[0].mxu0
    %v6056 = vadd.f32 %v6015, %v6055
    %v6057 = vpop.f32.mrb[0].mxu0
    %v6058 = vpop.f32.mrb[0].mxu0
    %v6059 = vadd.f32 %v6018, %v6058
    %v6060 = vpop.f32.mrb[0].mxu0
    %6061 = vdwg.mxu0
    %6062 = vmatprep.subr.bf16.mxu0 0
    %6063 = vmatpush1.bf16.msra.mxu0 %v5396
    %6064 = vmatprep.subr.bf16.mxu0 0
    %6065 = vmatpush1.bf16.msra.mxu0 %v5397
    %6066 = vmatprep.subr.bf16.mxu0 0
    %6067 = vmatpush1.bf16.msra.mxu0 %v5398
    %6068 = vmatprep.subr.bf16.mxu0 0
    %6069 = vmatpush1.bf16.msra.mxu0 %v5399
    %6070 = vmatprep.subr.bf16.mxu0 0
    %6071 = vmatpush1.bf16.msra.mxu0 %v5400
    %6072 = vmatprep.subr.bf16.mxu0 0
    %6073 = vmatpush1.bf16.msra.mxu0 %v5401
    %6074 = vmatprep.subr.bf16.mxu0 0
    %6075 = vmatpush1.bf16.msra.mxu0 %v5402
    %6076 = vmatprep.subr.bf16.mxu0 0
    %6077 = vmatpush1.bf16.msra.mxu0 %v5403
    %6078 = vmatprep.subr.bf16.mxu0 0
    %6079 = vmatpush1.bf16.msra.mxu0 %v5404
    %6080 = vmatprep.subr.bf16.mxu0 0
    %6081 = vmatpush1.bf16.msra.mxu0 %v5405
    %6082 = vmatprep.subr.bf16.mxu0 0
    %6083 = vmatpush1.bf16.msra.mxu0 %v5406
    %6084 = vmatprep.subr.bf16.mxu0 0
    %6085 = vmatpush1.bf16.msra.mxu0 %v5407
    %6086 = vmatprep.subr.bf16.mxu0 0
    %6087 = vmatpush1.bf16.msra.mxu0 %v5408
    %6088 = vmatprep.subr.bf16.mxu0 0
    %6089 = vmatpush1.bf16.msra.mxu0 %v5409
    %6090 = vmatprep.subr.bf16.mxu0 0
    %6091 = vmatpush1.bf16.msra.mxu0 %v5410
    %6092 = vmatprep.subr.bf16.mxu0 0
    %6093 = vmatpush1.bf16.msra.mxu0 %v5411
    %6094 = vmatprep.mubr.bf16.mxu0 %v5609
    %6095 = vmatmul.mubr.bf16.gmra.mrb[0].mxu0 %v5608
    %v6096 = vpop.f32.mrb[0].mxu0
    %v6097 = vadd.f32 %v6056, %v6096
    %v6098 = vpop.f32.mrb[0].mxu0
    %v6099 = vpop.f32.mrb[0].mxu0
    %v6100 = vadd.f32 %v6059, %v6099
    %v6101 = vpop.f32.mrb[0].mxu0
    %6102 = vdwg.mxu0
    %6103 = vmatprep.subr.bf16.mxu0 0
    %6104 = vmatpush1.bf16.msra.mxu0 %v5412
    %6105 = vmatprep.subr.bf16.mxu0 0
    %6106 = vmatpush1.bf16.msra.mxu0 %v5413
    %6107 = vmatprep.subr.bf16.mxu0 0
    %6108 = vmatpush1.bf16.msra.mxu0 %v5414
    %6109 = vmatprep.subr.bf16.mxu0 0
    %6110 = vmatpush1.bf16.msra.mxu0 %v5415
    %6111 = vmatprep.subr.bf16.mxu0 0
    %6112 = vmatpush1.bf16.msra.mxu0 %v5416
    %6113 = vmatprep.subr.bf16.mxu0 0
    %6114 = vmatpush1.bf16.msra.mxu0 %v5417
    %6115 = vmatprep.subr.bf16.mxu0 0
    %6116 = vmatpush1.bf16.msra.mxu0 %v5418
    %6117 = vmatprep.subr.bf16.mxu0 0
    %6118 = vmatpush1.bf16.msra.mxu0 %v5419
    %6119 = vmatprep.subr.bf16.mxu0 0
    %6120 = vmatpush1.bf16.msra.mxu0 %v5420
    %6121 = vmatprep.subr.bf16.mxu0 0
    %6122 = vmatpush1.bf16.msra.mxu0 %v5421
    %6123 = vmatprep.subr.bf16.mxu0 0
    %6124 = vmatpush1.bf16.msra.mxu0 %v5422
    %6125 = vmatprep.subr.bf16.mxu0 0
    %6126 = vmatpush1.bf16.msra.mxu0 %v5423
    %6127 = vmatprep.subr.bf16.mxu0 0
    %6128 = vmatpush1.bf16.msra.mxu0 %v5424
    %6129 = vmatprep.subr.bf16.mxu0 0
    %6130 = vmatpush1.bf16.msra.mxu0 %v5425
    %6131 = vmatprep.subr.bf16.mxu0 0
    %6132 = vmatpush1.bf16.msra.mxu0 %v5426
    %6133 = vmatprep.subr.bf16.mxu0 0
    %6134 = vmatpush1.bf16.msra.mxu0 %v5427
    %6135 = vmatprep.mubr.bf16.mxu0 %v5611
    %6136 = vmatmul.mubr.bf16.gmra.mrb[0].mxu0 %v5610
    %v6137 = vpop.f32.mrb[0].mxu0
    %v6138 = vadd.f32 %v6097, %v6137
    %v6139 = vpop.f32.mrb[0].mxu0
    %v6140 = vpop.f32.mrb[0].mxu0
    %v6141 = vadd.f32 %v6100, %v6140
    %v6142 = vpop.f32.mrb[0].mxu0
    %6143 = vdwg.mxu0
    %6144 = vmatprep.subr.bf16.mxu0 0
    %6145 = vmatpush1.bf16.msra.mxu0 %v5428
    %6146 = vmatprep.subr.bf16.mxu0 0
    %6147 = vmatpush1.bf16.msra.mxu0 %v5429
    %6148 = vmatprep.subr.bf16.mxu0 0
    %6149 = vmatpush1.bf16.msra.mxu0 %v5430
    %6150 = vmatprep.subr.bf16.mxu0 0
    %6151 = vmatpush1.bf16.msra.mxu0 %v5431
    %6152 = vmatprep.subr.bf16.mxu0 0
    %6153 = vmatpush1.bf16.msra.mxu0 %v5432
    %6154 = vmatprep.subr.bf16.mxu0 0
    %6155 = vmatpush1.bf16.msra.mxu0 %v5433
    %6156 = vmatprep.subr.bf16.mxu0 0
    %6157 = vmatpush1.bf16.msra.mxu0 %v5434
    %6158 = vmatprep.subr.bf16.mxu0 0
    %6159 = vmatpush1.bf16.msra.mxu0 %v5435
    %6160 = vmatprep.subr.bf16.mxu0 0
    %6161 = vmatpush1.bf16.msra.mxu0 %v5436
    %6162 = vmatprep.subr.bf16.mxu0 0
    %6163 = vmatpush1.bf16.msra.mxu0 %v5437
    %6164 = vmatprep.subr.bf16.mxu0 0
    %6165 = vmatpush1.bf16.msra.mxu0 %v5438
    %6166 = vmatprep.subr.bf16.mxu0 0
    %6167 = vmatpush1.bf16.msra.mxu0 %v5439
    %6168 = vmatprep.subr.bf16.mxu0 0
    %6169 = vmatpush1.bf16.msra.mxu0 %v5440
    %6170 = vmatprep.subr.bf16.mxu0 0
    %6171 = vmatpush1.bf16.msra.mxu0 %v5441
    %6172 = vmatprep.subr.bf16.mxu0 0
    %6173 = vmatpush1.bf16.msra.mxu0 %v5442
    %6174 = vmatprep.subr.bf16.mxu0 0
    %6175 = vmatpush1.bf16.msra.mxu0 %v5443
    %6176 = vmatprep.mubr.bf16.mxu0 %v5613
    %6177 = vmatmul.mubr.bf16.gmra.mrb[0].mxu0 %v5612
    %v6178 = vpop.f32.mrb[0].mxu0
    %v6179 = vadd.f32 %v6138, %v6178
    %v6180 = vpop.f32.mrb[0].mxu0
    %v6181 = vpop.f32.mrb[0].mxu0
    %v6182 = vadd.f32 %v6141, %v6181
    %v6183 = vpop.f32.mrb[0].mxu0
    %6184 = vdwg.mxu0
    %6185 = vmatprep.subr.bf16.mxu0 0
    %6186 = vmatpush1.bf16.msra.mxu0 %v5444
    %6187 = vmatprep.subr.bf16.mxu0 0
    %6188 = vmatpush1.bf16.msra.mxu0 %v5445
    %6189 = vmatprep.subr.bf16.mxu0 0
    %6190 = vmatpush1.bf16.msra.mxu0 %v5446
    %6191 = vmatprep.subr.bf16.mxu0 0
    %6192 = vmatpush1.bf16.msra.mxu0 %v5447
    %6193 = vmatprep.subr.bf16.mxu0 0
    %6194 = vmatpush1.bf16.msra.mxu0 %v5448
    %6195 = vmatprep.subr.bf16.mxu0 0
    %6196 = vmatpush1.bf16.msra.mxu0 %v5449
    %6197 = vmatprep.subr.bf16.mxu0 0
    %6198 = vmatpush1.bf16.msra.mxu0 %v5450
    %6199 = vmatprep.subr.bf16.mxu0 0
    %6200 = vmatpush1.bf16.msra.mxu0 %v5451
    %6201 = vmatprep.subr.bf16.mxu0 0
    %6202 = vmatpush1.bf16.msra.mxu0 %v5452
    %6203 = vmatprep.subr.bf16.mxu0 0
    %6204 = vmatpush1.bf16.msra.mxu0 %v5453
    %6205 = vmatprep.subr.bf16.mxu0 0
    %6206 = vmatpush1.bf16.msra.mxu0 %v5454
    %6207 = vmatprep.subr.bf16.mxu0 0
    %6208 = vmatpush1.bf16.msra.mxu0 %v5455
    %6209 = vmatprep.subr.bf16.mxu0 0
    %6210 = vmatpush1.bf16.msra.mxu0 %v5456
    %6211 = vmatprep.subr.bf16.mxu0 0
    %6212 = vmatpush1.bf16.msra.mxu0 %v5457
    %6213 = vmatprep.subr.bf16.mxu0 0
    %6214 = vmatpush1.bf16.msra.mxu0 %v5458
    %6215 = vmatprep.subr.bf16.mxu0 0
    %6216 = vmatpush1.bf16.msra.mxu0 %v5459
    %6217 = vmatprep.mubr.bf16.mxu0 %v5615
    %6218 = vmatmul.mubr.bf16.gmra.mrb[0].mxu0 %v5614
    %v6219 = vpop.f32.mrb[0].mxu0
    %v6220 = vadd.f32 %v6179, %v6219
    %v6221 = vpop.f32.mrb[0].mxu0
    %v6222 = vpop.f32.mrb[0].mxu0
    %v6223 = vadd.f32 %v6182, %v6222
    %v6224 = vpop.f32.mrb[0].mxu0
    %6225 = vdwg.mxu0
    %6226 = vmatprep.subr.bf16.mxu0 0
    %6227 = vmatpush1.bf16.msra.mxu0 %v5460
    %6228 = vmatprep.subr.bf16.mxu0 0
    %6229 = vmatpush1.bf16.msra.mxu0 %v5461
    %6230 = vmatprep.subr.bf16.mxu0 0
    %6231 = vmatpush1.bf16.msra.mxu0 %v5462
    %6232 = vmatprep.subr.bf16.mxu0 0
    %6233 = vmatpush1.bf16.msra.mxu0 %v5463
    %6234 = vmatprep.subr.bf16.mxu0 0
    %6235 = vmatpush1.bf16.msra.mxu0 %v5464
    %6236 = vmatprep.subr.bf16.mxu0 0
    %6237 = vmatpush1.bf16.msra.mxu0 %v5465
    %6238 = vmatprep.subr.bf16.mxu0 0
    %6239 = vmatpush1.bf16.msra.mxu0 %v5466
    %6240 = vmatprep.subr.bf16.mxu0 0
    %6241 = vmatpush1.bf16.msra.mxu0 %v5467
    %6242 = vmatprep.subr.bf16.mxu0 0
    %6243 = vmatpush1.bf16.msra.mxu0 %v5468
    %6244 = vmatprep.subr.bf16.mxu0 0
    %6245 = vmatpush1.bf16.msra.mxu0 %v5469
    %6246 = vmatprep.subr.bf16.mxu0 0
    %6247 = vmatpush1.bf16.msra.mxu0 %v5470
    %6248 = vmatprep.subr.bf16.mxu0 0
    %6249 = vmatpush1.bf16.msra.mxu0 %v5471
    %6250 = vmatprep.subr.bf16.mxu0 0
    %6251 = vmatpush1.bf16.msra.mxu0 %v5472
    %6252 = vmatprep.subr.bf16.mxu0 0
    %6253 = vmatpush1.bf16.msra.mxu0 %v5473
    %6254 = vmatprep.subr.bf16.mxu0 0
    %6255 = vmatpush1.bf16.msra.mxu0 %v5474
    %6256 = vmatprep.subr.bf16.mxu0 0
    %6257 = vmatpush1.bf16.msra.mxu0 %v5475
    %6258 = vmatprep.mubr.bf16.mxu0 %v5617
    %6259 = vmatmul.mubr.bf16.gmra.mrb[0].mxu0 %v5616
    %v6260 = vpop.f32.mrb[0].mxu0
    %v6261 = vadd.f32 %v6220, %v6260
    %v6262 = vpop.f32.mrb[0].mxu0
    %v6263 = vpop.f32.mrb[0].mxu0
    %v6264 = vadd.f32 %v6223, %v6263
    %v6265 = vpop.f32.mrb[0].mxu0
    %6266 = vdwg.mxu0
    %6267 = vmatprep.subr.bf16.mxu0 0
    %6268 = vmatpush1.bf16.msra.mxu0 %v5476
    %6269 = vmatprep.subr.bf16.mxu0 0
    %6270 = vmatpush1.bf16.msra.mxu0 %v5477
    %6271 = vmatprep.subr.bf16.mxu0 0
    %6272 = vmatpush1.bf16.msra.mxu0 %v5478
    %6273 = vmatprep.subr.bf16.mxu0 0
    %6274 = vmatpush1.bf16.msra.mxu0 %v5479
    %6275 = vmatprep.subr.bf16.mxu0 0
    %6276 = vmatpush1.bf16.msra.mxu0 %v5480
    %6277 = vmatprep.subr.bf16.mxu0 0
    %6278 = vmatpush1.bf16.msra.mxu0 %v5481
    %6279 = vmatprep.subr.bf16.mxu0 0
    %6280 = vmatpush1.bf16.msra.mxu0 %v5482
    %6281 = vmatprep.subr.bf16.mxu0 0
    %6282 = vmatpush1.bf16.msra.mxu0 %v5483
    %6283 = vmatprep.subr.bf16.mxu0 0
    %6284 = vmatpush1.bf16.msra.mxu0 %v5484
    %6285 = vmatprep.subr.bf16.mxu0 0
    %6286 = vmatpush1.bf16.msra.mxu0 %v5485
    %6287 = vmatprep.subr.bf16.mxu0 0
    %6288 = vmatpush1.bf16.msra.mxu0 %v5486
    %6289 = vmatprep.subr.bf16.mxu0 0
    %6290 = vmatpush1.bf16.msra.mxu0 %v5487
    %6291 = vmatprep.subr.bf16.mxu0 0
    %6292 = vmatpush1.bf16.msra.mxu0 %v5488
    %6293 = vmatprep.subr.bf16.mxu0 0
    %6294 = vmatpush1.bf16.msra.mxu0 %v5489
    %6295 = vmatprep.subr.bf16.mxu0 0
    %6296 = vmatpush1.bf16.msra.mxu0 %v5490
    %6297 = vmatprep.subr.bf16.mxu0 0
    %6298 = vmatpush1.bf16.msra.mxu0 %v5491
    %6299 = vmatprep.mubr.bf16.mxu0 %v5619
    %6300 = vmatmul.mubr.bf16.gmra.mrb[0].mxu0 %v5618
    %v6301 = vpop.f32.mrb[0].mxu0
    %v6302 = vadd.f32 %v6261, %v6301
    %v6303 = vpop.f32.mrb[0].mxu0
    %v6304 = vpop.f32.mrb[0].mxu0
    %v6305 = vadd.f32 %v6264, %v6304
    %v6306 = vpop.f32.mrb[0].mxu0
    %6307 = vdwg.mxu0
    %v6308 = vmul.f32 %v6302, 0.00390625
    %v6309 = vmul.f32 %v6305, 0.00390625
    %vm6310 = vcmask 261120
    %6311 = vst.msk [vmem:[#allocation2] sm:$0xff] %vm6310, %v6308
    %6312 = vst.msk [vmem:[#allocation2 + $0x8] sm:$0xff] %vm6310, %v6309
    // Predicated region
    $region18: #{forward.1} parent=1 // pred_check
      _
    $region19: #{forward.1} parent=1 // pred_check_branch
      %6314 = sbr.rel (0) target = $region21
    $region20: #{forward.1} parent=1 // pred_region
      %s6316 = ssub.s32 256, 256
      %6317 = vsyncadd [#allocation3], %s6316
      %s6318 = sshll.u32 [#allocation2], 4
      %s6319 = int_to_ptr.vmem [resolvable:$true] %s6318
      %6324 = dma.vmem_to_hbm [thread:$0]  %s6319, 256, %s4, [#allocation3], 128, 128, 8
    $region21: #{forward.1} parent=1 // pred_fallthru
      _
    // Predicated region
    $region22: #{forward.1} parent=1 // pred_check
      _
    $region23: #{forward.1} parent=1 // pred_check_branch
      %6326 = sbr.rel (0) target = $region25
    $region24: #{forward.1} parent=1 // pred_region
      %6327 = dma.done [#allocation3], 256
    $region25: #{forward.1} parent=1 // pred_fallthru
      _
    %6328 = vsyncpa [#allocation3], 1

</llo_original>
